<compile_context>
chip_gen: v7x
topology: tpu7x:2x2x1
jax: 0.10.0
libtpu: 0.0.40
codegen_flags: <defaults>
</compile_context>

<pallas_src>
import functools

import jax
import jax.numpy as jnp
from jax import lax
from jax.experimental import pallas as pl
from jax.experimental.pallas import tpu as pltpu


def _dnc_read_head_kernel(packed_ref, link_ref, mem_ref, w_ref, rd_ref, *, N, M):
    f32 = jnp.float32
    packed = packed_ref[...].astype(f32)        # (TB, M+N+4)  [k | w_old | beta | pi]
    L      = link_ref[...].astype(f32)          # (TB, N, N)
    mem    = mem_ref[...].astype(f32)           # (TB, N, M)

    k     = packed[:, :M]                       # (TB, M)
    w_old = packed[:, M:M + N]                  # (TB, N)
    beta  = packed[:, M + N:M + N + 1]          # (TB, 1)
    pi_b  = packed[:, M + N + 1:M + N + 2]      # (TB, 1)   backward mode
    pi_c  = packed[:, M + N + 2:M + N + 3]      # (TB, 1)   content mode
    pi_f  = packed[:, M + N + 3:M + N + 4]      # (TB, 1)   forward mode

    k3 = k[:, None, :]                          # (TB, 1, M)
    w3 = w_old[:, None, :]                      # (TB, 1, N)

    # Temporal-link forward / backward weightings (batched on the MXU).
    #   f[b,i] = sum_j L[b,i,j] * w_old[b,j] ;  b[b,i] = sum_j L[b,j,i] * w_old[b,j]
    f = jnp.einsum('bqj,bij->bqi', w3, L, preferred_element_type=f32)[:, 0, :]   # (TB, N)
    b = jnp.einsum('bqj,bji->bqi', w3, L, preferred_element_type=f32)[:, 0, :]   # (TB, N)

    # Content addressing: softmax_N(beta * cosine) without materializing mem_hat.
    eps = 1e-16
    inv_mem = lax.rsqrt(jnp.sum(mem * mem, axis=-1) + eps)                        # (TB, N)
    inv_k   = lax.rsqrt(jnp.sum(k * k, axis=-1, keepdims=True) + eps)             # (TB, 1)
    cos_raw = jnp.einsum('bqm,bnm->bqn', k3, mem,
                         preferred_element_type=f32)[:, 0, :]                     # (TB, N)
    z = beta * cos_raw * inv_mem * inv_k
    z = z - jnp.max(z, axis=-1, keepdims=True)
    e = jnp.exp(z)
    c = e * pl.reciprocal(jnp.sum(e, axis=-1, keepdims=True), approx=True)        # (TB, N)

    # Read-mode mixture and memory read.
    W  = pi_b * b + pi_c * c + pi_f * f                                            # (TB, N)
    rd = jnp.einsum('bqn,bnm->bqm', W[:, None, :], mem,
                    preferred_element_type=f32)[:, 0, :]                           # (TB, M)

    w_ref[...]  = W.astype(w_ref.dtype)
    rd_ref[...] = rd.astype(rd_ref.dtype)


def _pick_batch_tile(B, N, M, budget_bytes=32 * 1024 * 1024):
    """Largest batch tile whose double-buffered blocks fit a conservative VMEM
    budget (safe on v7x's 64 MiB VMEM as well as v5e/v6e's 128 MiB)."""
    P = M + N + 4
    per_batch = 4 * (N * N + N * M + P + N + M)        # f32 bytes, one batch element, one buffer
    cap = max(1, budget_bytes // (2 * per_batch))      # x2 for double buffering
    tb = min(B, cap)
    if B >= 16:
        # keep >= 2 grid steps so v7x's two TensorCores both get work
        tb = min(tb, pl.cdiv(B, 2))
    if tb >= 8:
        tb = (tb // 8) * 8                             # sublane-aligned batch tile
    return max(1, tb)


def dnc_read_head_forward(head_parameters, W_old, tempo_links, head_no, memory):
    """Mirrors DNC_read_head.forward(head_parameters, W_old, tempo_links, head_no, memory)."""
    k      = head_parameters['read_keys'][:, head_no, :]                # (B, M)
    beta   = head_parameters['read_strengths'][:, head_no][:, None]     # (B, 1)
    r_mode = head_parameters['read_mode'][:, head_no, :]                # (B, 3)

    # TODO(synk): the reference module loops over a list of link matrices; the
    # canonical DNC (one write head) has exactly one, which is what we implement.
    assert len(tempo_links) == 1
    L = tempo_links[0]                                                  # (B, N, N)

    B, N, M = memory.shape
    out_dtype = memory.dtype
    f32 = jnp.float32

    # One lane-dense slab per batch element for all small per-head operands
    # (kept in f32 so beta / pi / softmax math never loses precision).
    packed = jnp.concatenate(
        [k.astype(f32), W_old.astype(f32), beta.astype(f32), r_mode.astype(f32)],
        axis=-1)                                                        # (B, M+N+4)
    P = M + N + 4

    TB = _pick_batch_tile(B, N, M)
    Bp = pl.cdiv(B, TB) * TB
    if Bp != B:
        # Zero-pad the batch so the grid tiles evenly; padded rows produce
        # finite garbage that is sliced off below.
        pad = Bp - B
        packed = jnp.pad(packed, ((0, pad), (0, 0)))
        L      = jnp.pad(L, ((0, pad), (0, 0), (0, 0)))
        memory = jnp.pad(memory, ((0, pad), (0, 0), (0, 0)))

    kernel = functools.partial(_dnc_read_head_kernel, N=N, M=M)

    W, rd = pl.pallas_call(
        kernel,
        out_shape=(jax.ShapeDtypeStruct((Bp, N), out_dtype),
                   jax.ShapeDtypeStruct((Bp, M), out_dtype)),
        grid=(Bp // TB,),
        in_specs=[
            pl.BlockSpec((TB, P), lambda i: (i, 0)),          # packed k|w_old|beta|pi
            pl.BlockSpec((TB, N, N), lambda i: (i, 0, 0)),    # temporal link matrix
            pl.BlockSpec((TB, N, M), lambda i: (i, 0, 0)),    # memory slab
        ],
        out_specs=(pl.BlockSpec((TB, N), lambda i: (i, 0)),   # read weighting
                   pl.BlockSpec((TB, M), lambda i: (i, 0))),  # read vector
        compiler_params=pltpu.CompilerParams(
            dimension_semantics=("parallel",),
            vmem_limit_bytes=48 * 1024 * 1024,
        ),
    )(packed, L, memory)

    return W[:B], rd[:B]


def _reference(head_parameters, W_old, tempo_links, head_no, memory):
    """Pure-JAX reference with identical semantics, for verification."""
    k    = head_parameters['read_keys'][:, head_no, :]
    beta = head_parameters['read_strengths'][:, head_no][:, None]
    pi   = head_parameters['read_mode'][:, head_no, :]
    L    = tempo_links[0]
    f = jnp.einsum('bij,bj->bi', L, W_old)
    b = jnp.einsum('bji,bj->bi', L, W_old)
    eps = 1e-16
    mem_hat = memory * lax.rsqrt(jnp.sum(memory * memory, -1, keepdims=True) + eps)
    k_hat   = k * lax.rsqrt(jnp.sum(k * k, -1, keepdims=True) + eps)
    cos = jnp.einsum('bnm,bm->bn', mem_hat, k_hat)
    c = jax.nn.softmax(beta * cos, axis=-1)
    W = pi[:, 0:1] * b + pi[:, 1:2] * c + pi[:, 2:3] * f
    rd = jnp.einsum('bn,bnm->bm', W, memory)
    return W, rd


if __name__ == "__main__":
    B, N, M, H = 16, 32, 32, 2       # batch, memory slots, word size, read heads
    head_no = 1

    key = jax.random.PRNGKey(0)
    ks = jax.random.split(key, 6)

    head_parameters = {
        'read_keys':      jax.random.normal(ks[0], (B, H, M), jnp.float32),
        'read_strengths': 1.0 + jax.nn.softplus(
            jax.random.normal(ks[1], (B, H), jnp.float32)),
        'read_mode':      jax.nn.softmax(
            jax.random.normal(ks[2], (B, H, 3), jnp.float32), axis=-1),
    }
    W_old  = jax.nn.softmax(jax.random.normal(ks[3], (B, N), jnp.float32), axis=-1)
    link   = jax.nn.sigmoid(jax.random.normal(ks[4], (B, N, N), jnp.float32)) / N
    memory = jax.random.normal(ks[5], (B, N, M), jnp.float32)
    tempo_links = [link]

    W, mem_content = dnc_read_head_forward(head_parameters, W_old, tempo_links,
                                           head_no, memory)
    jax.block_until_ready((W, mem_content))

    W_ref, rd_ref = _reference(head_parameters, W_old, tempo_links, head_no, memory)
    assert W.shape == (B, N) and mem_content.shape == (B, M)
    # Slightly relaxed tolerance because the softmax normalization uses the EUP
    # approximate reciprocal (pl.reciprocal(approx=True)).
    assert jnp.allclose(W, W_ref, atol=5e-3, rtol=5e-3)
    assert jnp.allclose(mem_content, rd_ref, atol=5e-3, rtol=5e-3)

    print("KERNEL_OK")
</pallas_src>

<mosaic_0001>
module attributes {stable_mosaic.version = 11 : i64} {
  func.func @_dnc_read_head_kernel(%arg0: i32, %arg1: memref<8x68xf32, #tpu.memory_space<vmem>>, %arg2: memref<8x32x32xf32, #tpu.memory_space<vmem>>, %arg3: memref<8x32x32xf32, #tpu.memory_space<vmem>>, %arg4: memref<8x32xf32, #tpu.memory_space<vmem>>, %arg5: memref<8x32xf32, #tpu.memory_space<vmem>>) attributes {dimension_semantics = [#tpu.dimension_semantics<parallel>], iteration_bounds = array<i64: 2>, scalar_prefetch = 0 : i64, scratch_operands = 0 : i64, tpu.core_type = #tpu.core_type<tc>, window_params = [{transform_indices = @transform_0, window_bounds = array<i64: 8, 68>}, {transform_indices = @transform_1, window_bounds = array<i64: 8, 32, 32>}, {transform_indices = @transform_2, window_bounds = array<i64: 8, 32, 32>}, {transform_indices = @transform_3, window_bounds = array<i64: 8, 32>}, {transform_indices = @transform_4, window_bounds = array<i64: 8, 32>}]} {
    %c0 = arith.constant 0 : index
    %c0_0 = arith.constant 0 : index
    %0 = vector.load %arg1[%c0, %c0_0] : memref<8x68xf32, #tpu.memory_space<vmem>>, vector<8x68xf32>
    %c0_1 = arith.constant 0 : index
    %c0_2 = arith.constant 0 : index
    %c0_3 = arith.constant 0 : index
    %1 = vector.load %arg2[%c0_1, %c0_2, %c0_3] : memref<8x32x32xf32, #tpu.memory_space<vmem>>, vector<8x32x32xf32>
    %c0_4 = arith.constant 0 : index
    %c0_5 = arith.constant 0 : index
    %c0_6 = arith.constant 0 : index
    %2 = vector.load %arg3[%c0_4, %c0_5, %c0_6] : memref<8x32x32xf32, #tpu.memory_space<vmem>>, vector<8x32x32xf32>
    %3 = vector.extract_strided_slice %0 {offsets = [0, 0], sizes = [8, 32], strides = [1, 1]} : vector<8x68xf32> to vector<8x32xf32>
    %4 = vector.extract_strided_slice %0 {offsets = [0, 32], sizes = [8, 32], strides = [1, 1]} : vector<8x68xf32> to vector<8x32xf32>
    %5 = vector.extract_strided_slice %0 {offsets = [0, 64], sizes = [8, 1], strides = [1, 1]} : vector<8x68xf32> to vector<8x1xf32>
    %6 = vector.extract_strided_slice %0 {offsets = [0, 65], sizes = [8, 1], strides = [1, 1]} : vector<8x68xf32> to vector<8x1xf32>
    %7 = vector.extract_strided_slice %0 {offsets = [0, 66], sizes = [8, 1], strides = [1, 1]} : vector<8x68xf32> to vector<8x1xf32>
    %8 = vector.extract_strided_slice %0 {offsets = [0, 67], sizes = [8, 1], strides = [1, 1]} : vector<8x68xf32> to vector<8x1xf32>
    %9 = vector.shape_cast %3 : vector<8x32xf32> to vector<8x1x32xf32>
    %10 = vector.shape_cast %4 : vector<8x32xf32> to vector<8x1x32xf32>
    "tpu.trace_start"() <{level = 10 : i32, message = "bqj,bij->bqi"}> : () -> ()
    %cst = arith.constant dense<0.000000e+00> : vector<8x1x32xf32>
    %11 = tpu.matmul %10, %1, %cst {dimension_numbers = #tpu.dot_dimension_numbers<[2], [2], [1], [1], [0, 0, 0, 1, 1, 1], [0], [0]>} : vector<8x1x32xf32>, vector<8x32x32xf32>, vector<8x1x32xf32> -> vector<8x1x32xf32>
    "tpu.trace_stop"() : () -> ()
    %12 = vector.shape_cast %11 : vector<8x1x32xf32> to vector<8x32xf32>
    "tpu.trace_start"() <{level = 10 : i32, message = "bqj,bji->bqi"}> : () -> ()
    %cst_7 = arith.constant dense<0.000000e+00> : vector<8x1x32xf32>
    %13 = tpu.matmul %10, %1, %cst_7 {dimension_numbers = #tpu.dot_dimension_numbers<[2], [1], [1], [2], [0, 0, 0, 1, 1, 2], [0], [0]>} : vector<8x1x32xf32>, vector<8x32x32xf32>, vector<8x1x32xf32> -> vector<8x1x32xf32>
    "tpu.trace_stop"() : () -> ()
    %14 = vector.shape_cast %13 : vector<8x1x32xf32> to vector<8x32xf32>
    %15 = arith.mulf %2, %2 : vector<8x32x32xf32>
    %cst_8 = arith.constant dense<0.000000e+00> : vector<8x32xf32>
    %16 = vector.multi_reduction <add>, %15, %cst_8 [2] : vector<8x32x32xf32> to vector<8x32xf32>
    %cst_9 = arith.constant 1.000000e-16 : f32
    %17 = vector.broadcast %cst_9 : f32 to vector<8x32xf32>
    %18 = arith.addf %16, %17 : vector<8x32xf32>
    %19 = math.rsqrt %18 : vector<8x32xf32>
    %20 = arith.mulf %3, %3 : vector<8x32xf32>
    %cst_10 = arith.constant dense<0.000000e+00> : vector<8xf32>
    %21 = vector.multi_reduction <add>, %20, %cst_10 [1] : vector<8x32xf32> to vector<8xf32>
    %22 = vector.shape_cast %21 : vector<8xf32> to vector<8x1xf32>
    %cst_11 = arith.constant 1.000000e-16 : f32
    %23 = vector.broadcast %cst_11 : f32 to vector<8x1xf32>
    %24 = arith.addf %22, %23 : vector<8x1xf32>
    %25 = math.rsqrt %24 : vector<8x1xf32>
    "tpu.trace_start"() <{level = 10 : i32, message = "bqm,bnm->bqn"}> : () -> ()
    %cst_12 = arith.constant dense<0.000000e+00> : vector<8x1x32xf32>
    %26 = tpu.matmul %9, %2, %cst_12 {dimension_numbers = #tpu.dot_dimension_numbers<[2], [2], [1], [1], [0, 0, 0, 1, 1, 1], [0], [0]>} : vector<8x1x32xf32>, vector<8x32x32xf32>, vector<8x1x32xf32> -> vector<8x1x32xf32>
    "tpu.trace_stop"() : () -> ()
    %27 = vector.shape_cast %26 : vector<8x1x32xf32> to vector<8x32xf32>
    %28 = vector.broadcast %5 : vector<8x1xf32> to vector<8x32xf32>
    %29 = arith.mulf %28, %27 : vector<8x32xf32>
    %30 = arith.mulf %29, %19 : vector<8x32xf32>
    %31 = vector.broadcast %25 : vector<8x1xf32> to vector<8x32xf32>
    %32 = arith.mulf %30, %31 : vector<8x32xf32>
    %cst_13 = arith.constant dense<0xFF800000> : vector<8xf32>
    %33 = vector.multi_reduction <maximumf>, %32, %cst_13 [1] : vector<8x32xf32> to vector<8xf32>
    %34 = vector.shape_cast %33 : vector<8xf32> to vector<8x1xf32>
    %35 = vector.broadcast %34 : vector<8x1xf32> to vector<8x32xf32>
    %36 = arith.subf %32, %35 : vector<8x32xf32>
    %37 = math.exp %36 : vector<8x32xf32>
    %cst_14 = arith.constant dense<0.000000e+00> : vector<8xf32>
    %38 = vector.multi_reduction <add>, %37, %cst_14 [1] : vector<8x32xf32> to vector<8xf32>
    %39 = vector.shape_cast %38 : vector<8xf32> to vector<8x1xf32>
    %40 = tpu.reciprocal %39 {approx = true} : vector<8x1xf32> -> vector<8x1xf32>
    %41 = vector.broadcast %40 : vector<8x1xf32> to vector<8x32xf32>
    %42 = arith.mulf %37, %41 : vector<8x32xf32>
    %43 = vector.broadcast %6 : vector<8x1xf32> to vector<8x32xf32>
    %44 = arith.mulf %43, %14 : vector<8x32xf32>
    %45 = vector.broadcast %7 : vector<8x1xf32> to vector<8x32xf32>
    %46 = arith.mulf %45, %42 : vector<8x32xf32>
    %47 = arith.addf %44, %46 : vector<8x32xf32>
    %48 = vector.broadcast %8 : vector<8x1xf32> to vector<8x32xf32>
    %49 = arith.mulf %48, %12 : vector<8x32xf32>
    %50 = arith.addf %47, %49 : vector<8x32xf32>
    %51 = vector.shape_cast %50 : vector<8x32xf32> to vector<8x1x32xf32>
    "tpu.trace_start"() <{level = 10 : i32, message = "bqn,bnm->bqm"}> : () -> ()
    %cst_15 = arith.constant dense<0.000000e+00> : vector<8x1x32xf32>
    %52 = tpu.matmul %51, %2, %cst_15 {dimension_numbers = #tpu.dot_dimension_numbers<[2], [1], [1], [2], [0, 0, 0, 1, 1, 2], [0], [0]>} : vector<8x1x32xf32>, vector<8x32x32xf32>, vector<8x1x32xf32> -> vector<8x1x32xf32>
    "tpu.trace_stop"() : () -> ()
    %53 = vector.shape_cast %52 : vector<8x1x32xf32> to vector<8x32xf32>
    %c0_16 = arith.constant 0 : index
    %c0_17 = arith.constant 0 : index
    %54 = vector.load %arg4[%c0_16, %c0_17] : memref<8x32xf32, #tpu.memory_space<vmem>>, vector<8x32xf32>
    tpu.vector_store %arg4[%c0_16, %c0_17], %50 {strides = array<i32>} : memref<8x32xf32, #tpu.memory_space<vmem>>, vector<8x32xf32>,
    %c0_18 = arith.constant 0 : index
    %c0_19 = arith.constant 0 : index
    %55 = vector.load %arg5[%c0_18, %c0_19] : memref<8x32xf32, #tpu.memory_space<vmem>>, vector<8x32xf32>
    tpu.vector_store %arg5[%c0_18, %c0_19], %53 {strides = array<i32>} : memref<8x32xf32, #tpu.memory_space<vmem>>, vector<8x32xf32>,
    return
  }
  func.func @transform_0(%arg0: i32) -> (i32, i32) {
    %c0_i32 = arith.constant 0 : i32
    %c0_i32_0 = arith.constant 0 : i32
    return %arg0, %c0_i32 : i32, i32
  }
  func.func @transform_1(%arg0: i32) -> (i32, i32, i32) {
    %c0_i32 = arith.constant 0 : i32
    %c0_i32_0 = arith.constant 0 : i32
    %c0_i32_1 = arith.constant 0 : i32
    return %arg0, %c0_i32, %c0_i32_0 : i32, i32, i32
  }
  func.func @transform_2(%arg0: i32) -> (i32, i32, i32) {
    %c0_i32 = arith.constant 0 : i32
    %c0_i32_0 = arith.constant 0 : i32
    %c0_i32_1 = arith.constant 0 : i32
    return %arg0, %c0_i32, %c0_i32_0 : i32, i32, i32
  }
  func.func @transform_3(%arg0: i32) -> (i32, i32) {
    %c0_i32 = arith.constant 0 : i32
    %c0_i32_0 = arith.constant 0 : i32
    return %arg0, %c0_i32 : i32, i32
  }
  func.func @transform_4(%arg0: i32) -> (i32, i32) {
    %c0_i32 = arith.constant 0 : i32
    %c0_i32_0 = arith.constant 0 : i32
    return %arg0, %c0_i32 : i32, i32
  }
}

</mosaic_0001>

<llo_original>
// kernel: tpu_custom_call.1
$region0: #{tpu_custom_call.1}
  #allocation0 [shape = 'u32[]', space=smem, size = 0x4, offset = 0x4, fixed_abs, tag = 'smem constant byte address 0x4 - core index']
  #allocation1 [shape = 'u32[144,128]{1,0:T(1,128)}', space=vmem, size = 0x12000, scoped, tag = 'internal scratch']
  %s0 = inlined_call_operand.hbm [shape: f32[16,68], index: 0, kind: input, shape index: {}]
  %s1 = inlined_call_operand.hbm [shape: f32[16,32,32], index: 1, kind: input, shape index: {}]
  %s2 = inlined_call_operand.hbm [shape: f32[16,32,32], index: 2, kind: input, shape index: {}]
  %s3 = inlined_call_operand.hbm [shape: f32[16,32], index: 3, kind: output, shape index: {0}]
  %s4 = inlined_call_operand.hbm [shape: f32[16,32], index: 4, kind: output, shape index: {1}]
  %5 = xla_tuple %s3, %s4
  %s6 = sld [smem:[#allocation0]]
  $region65: #{tpu_custom_call.1} parent=0
    _
  %s8 = ssub.s32 1, %s6
  %s9 = scalar_select 0, %s8, %s6
  $region1: #{tpu_custom_call.1} parent=0
    #allocation2 [shape = 'u8[8192]{0}', space=vmem, size = 0x2000, scoped, tag = 'input window, operand 0']
    #allocation3 [shape = 's32[2]{0}', space=sflag, size = 0x8, scoped, tag = 'scoped memory for tpu_custom_call.1']
    #allocation4 [shape = 's32[2]{0}', space=sflag, size = 0x8, scoped, tag = 'scoped memory for tpu_custom_call.1']
    #allocation5 [shape = 'u8[262144]{0}', space=vmem, size = 0x40000, scoped, tag = 'input window, operand 1']
    #allocation6 [shape = 's32[2]{0}', space=sflag, size = 0x8, scoped, tag = 'scoped memory for tpu_custom_call.1']
    #allocation7 [shape = 'u8[262144]{0}', space=vmem, size = 0x40000, scoped, tag = 'input window, operand 2']
    #allocation8 [shape = 'u8[8192]{0}', space=vmem, size = 0x2000, scoped, tag = 'output window, operand 0']
    #allocation9 [shape = 'u8[8192]{0}', space=vmem, size = 0x2000, scoped, tag = 'output window, operand 1']
    #allocation10 [shape = 's32[2]{0}', space=sflag, size = 0x8, scoped, tag = 'scoped memory for tpu_custom_call.1']
    %10 = vsyncpa [#allocation3], 0
    %s11 = scalar_lea.sflag [#allocation3], 1
    %12 = vsyncpa %s11, 0
    %13 = vsyncpa [#allocation6], 0
    %s14 = scalar_lea.sflag [#allocation6], 1
    %15 = vsyncpa %s14, 0
    %16 = vsyncpa [#allocation4], 0
    %s17 = scalar_lea.sflag [#allocation4], 1
    %18 = vsyncpa %s17, 0
    %19 = vsyncpa [#allocation10], 0
    %s20 = scalar_lea.sflag [#allocation10], 1
    %21 = vsyncpa %s20, 0
    loop: start=0, step=1, limit=4
    $region2: #{tpu_custom_call.1} parent=1 // loop_pre_header
      _
    $region3: #{tpu_custom_call.1} parent=1 // loop_header
      %s23 = sphi 0, %s27
      %p24 = scmp.ge.s32.totalorder %s23, 4
      %s33 = sphi 0, %s35
      %s36 = sphi 0, %s33
      %s37 = sphi 0, %s36
      %s53 = sphi 0, %s37
      %s59 = sphi 0, %s61
      %s62 = sphi 0, %s59
      %s63 = sphi 0, %s62
      %s79 = sphi 0, %s63
      %s85 = sphi 0, %s87
      %s88 = sphi 0, %s85
      %s89 = sphi 0, %s88
      %s105 = sphi 0, %s89
      %s111 = sphi 0, %s113
      %s114 = sphi 0, %s111
      %s115 = sphi 0, %s114
      %s131 = sphi 0, %s115
      %s137 = sphi 0, %s139
      %s140 = sphi 0, %s137
      %s141 = sphi 0, %s140
      %s157 = sphi 0, %s141
    $region4: #{tpu_custom_call.1} parent=1 // loop_header_branch
      %26 = sbr.rel (%p24) target = $region8
    $region5: #{tpu_custom_call.1} parent=1 // loop_body
      %s28 = ssub.s32 %s23, 1
      %s29 = ssub.s32 %s23, 2
      %s30 = sadd.s32 %s23, 1
      %s31 = ssub.s32 %s23, %s30
      %p32 = scmp.eq.s32.totalorder %s31, 0
      %s34 = sadd.s32 %s33, 1
      %s35 = scalar_select %p32, %s33, %s34
      %p38 = pneg %p32
      %p39 = scmp.eq.s32.totalorder %s23, 1
      %p40 = por %p38, %p39
      %p41 = scmp.ne.s32.totalorder %s33, %s36
      %p42 = scmp.eq.s32.totalorder %s23, 0
      %p43 = por %p41, %p42
      %p44 = scmp.ne.s32.totalorder %s33, %s36
      %p45 = scmp.eq.s32.totalorder %s28, 1
      %p46 = por %p44, %p45
      %p47 = scmp.ne.s32.totalorder %s36, %s37
      %p48 = scmp.eq.s32.totalorder %s28, 0
      %p49 = por %p47, %p48
      %p50 = scmp.ne.s32.totalorder %s36, %s37
      %p51 = scmp.eq.s32.totalorder %s29, 1
      %p52 = por %p50, %p51
      %p54 = scmp.ne.s32.totalorder %s37, %s53
      %p55 = scmp.eq.s32.totalorder %s29, 0
      %p56 = por %p54, %p55
      %s57 = ssub.s32 %s23, %s30
      %p58 = scmp.eq.s32.totalorder %s57, 0
      %s60 = sadd.s32 %s59, 1
      %s61 = scalar_select %p58, %s59, %s60
      %p64 = pneg %p58
      %p65 = scmp.eq.s32.totalorder %s23, 1
      %p66 = por %p64, %p65
      %p67 = scmp.ne.s32.totalorder %s59, %s62
      %p68 = scmp.eq.s32.totalorder %s23, 0
      %p69 = por %p67, %p68
      %p70 = scmp.ne.s32.totalorder %s59, %s62
      %p71 = scmp.eq.s32.totalorder %s28, 1
      %p72 = por %p70, %p71
      %p73 = scmp.ne.s32.totalorder %s62, %s63
      %p74 = scmp.eq.s32.totalorder %s28, 0
      %p75 = por %p73, %p74
      %p76 = scmp.ne.s32.totalorder %s62, %s63
      %p77 = scmp.eq.s32.totalorder %s29, 1
      %p78 = por %p76, %p77
      %p80 = scmp.ne.s32.totalorder %s63, %s79
      %p81 = scmp.eq.s32.totalorder %s29, 0
      %p82 = por %p80, %p81
      %s83 = ssub.s32 %s23, %s30
      %p84 = scmp.eq.s32.totalorder %s83, 0
      %s86 = sadd.s32 %s85, 1
      %s87 = scalar_select %p84, %s85, %s86
      %p90 = pneg %p84
      %p91 = scmp.eq.s32.totalorder %s23, 1
      %p92 = por %p90, %p91
      %p93 = scmp.ne.s32.totalorder %s85, %s88
      %p94 = scmp.eq.s32.totalorder %s23, 0
      %p95 = por %p93, %p94
      %p96 = scmp.ne.s32.totalorder %s85, %s88
      %p97 = scmp.eq.s32.totalorder %s28, 1
      %p98 = por %p96, %p97
      %p99 = scmp.ne.s32.totalorder %s88, %s89
      %p100 = scmp.eq.s32.totalorder %s28, 0
      %p101 = por %p99, %p100
      %p102 = scmp.ne.s32.totalorder %s88, %s89
      %p103 = scmp.eq.s32.totalorder %s29, 1
      %p104 = por %p102, %p103
      %p106 = scmp.ne.s32.totalorder %s89, %s105
      %p107 = scmp.eq.s32.totalorder %s29, 0
      %p108 = por %p106, %p107
      %s109 = ssub.s32 %s23, %s30
      %p110 = scmp.eq.s32.totalorder %s109, 0
      %s112 = sadd.s32 %s111, 1
      %s113 = scalar_select %p110, %s111, %s112
      %p116 = pneg %p110
      %p117 = scmp.eq.s32.totalorder %s23, 1
      %p118 = por %p116, %p117
      %p119 = scmp.ne.s32.totalorder %s111, %s114
      %p120 = scmp.eq.s32.totalorder %s23, 0
      %p121 = por %p119, %p120
      %p122 = scmp.ne.s32.totalorder %s111, %s114
      %p123 = scmp.eq.s32.totalorder %s28, 1
      %p124 = por %p122, %p123
      %p125 = scmp.ne.s32.totalorder %s114, %s115
      %p126 = scmp.eq.s32.totalorder %s28, 0
      %p127 = por %p125, %p126
      %p128 = scmp.ne.s32.totalorder %s114, %s115
      %p129 = scmp.eq.s32.totalorder %s29, 1
      %p130 = por %p128, %p129
      %p132 = scmp.ne.s32.totalorder %s115, %s131
      %p133 = scmp.eq.s32.totalorder %s29, 0
      %p134 = por %p132, %p133
      %s135 = ssub.s32 %s23, %s30
      %p136 = scmp.eq.s32.totalorder %s135, 0
      %s138 = sadd.s32 %s137, 1
      %s139 = scalar_select %p136, %s137, %s138
      %p142 = pneg %p136
      %p143 = scmp.eq.s32.totalorder %s23, 1
      %p144 = por %p142, %p143
      %p145 = scmp.ne.s32.totalorder %s137, %s140
      %p146 = scmp.eq.s32.totalorder %s23, 0
      %p147 = por %p145, %p146
      %p148 = scmp.ne.s32.totalorder %s137, %s140
      %p149 = scmp.eq.s32.totalorder %s28, 1
      %p150 = por %p148, %p149
      %p151 = scmp.ne.s32.totalorder %s140, %s141
      %p152 = scmp.eq.s32.totalorder %s28, 0
      %p153 = por %p151, %p152
      %p154 = scmp.ne.s32.totalorder %s140, %s141
      %p155 = scmp.eq.s32.totalorder %s29, 1
      %p156 = por %p154, %p155
      %p158 = scmp.ne.s32.totalorder %s141, %s157
      %p159 = scmp.eq.s32.totalorder %s29, 0
      %p160 = por %p158, %p159
      %p161 = scmp.le.s32.totalorder 1, %s23
      %p162 = scmp.lt.s32.totalorder %s23, 3
      %p163 = pnand %p161, %p162
      %p164 = pneg %p163
      // Predicated region
      $region9: #{tpu_custom_call.1} parent=5 // pred_check
        _
      $region10: #{tpu_custom_call.1} parent=5 // pred_check_branch
        %166 = sbr.rel (%p163) target = $region12
      $region11: #{tpu_custom_call.1} parent=5 // pred_region
        %s167 = ssub.s32 %s23, 1
      $region12: #{tpu_custom_call.1} parent=5 // pred_fallthru
        _
      %p168 = scmp.lt.s32.totalorder %s23, 2
      // Predicated region
      $region13: #{tpu_custom_call.1} parent=5 // pred_check
        %p169 = pneg %p168
      $region14: #{tpu_custom_call.1} parent=5 // pred_check_branch
        %171 = sbr.rel (%p169) target = $region16
      $region15: #{tpu_custom_call.1} parent=5 // pred_region
        // Predicated region
        $region17: #{tpu_custom_call.1} parent=15 // pred_check
          %p172 = pneg %p43
        $region18: #{tpu_custom_call.1} parent=15 // pred_check_branch
          %174 = sbr.rel (%p172) target = $region20
        $region19: #{tpu_custom_call.1} parent=15 // pred_region
          %s175 = sand.u32 %s33, 1
          %s176 = scalar_lea.sflag [#allocation3], %s175
          %s177 = sand.u32 %s33, 1
          %s178 = smul.addr %s177, 8
          %s179 = scalar_lea.vmem [#allocation2], %s178
          %s181 = ssub.s32 128, 128
          %182 = vsyncadd %s176, %s181
          %s183 = smul.addr %s23, 128
          %s184 = scalar_lea.hbm %s0, %s183
          %s186 = sshll.u32 %s179, 4
          %s187 = int_to_ptr.vmem [resolvable:$true] %s186
          %189 = dma.hbm_to_vmem [thread:$0]  %s184, 128, %s187, %s176
        $region20: #{tpu_custom_call.1} parent=15 // pred_fallthru
          _
        // Predicated region
        $region21: #{tpu_custom_call.1} parent=15 // pred_check
          %p190 = pneg %p69
        $region22: #{tpu_custom_call.1} parent=15 // pred_check_branch
          %192 = sbr.rel (%p190) target = $region24
        $region23: #{tpu_custom_call.1} parent=15 // pred_region
          %s193 = sand.u32 %s23, 1
          %s194 = scalar_lea.sflag [#allocation6], %s193
          %s195 = sand.u32 %s59, 1
          %s196 = smul.addr %s195, 256
          %s197 = scalar_lea.vmem [#allocation5], %s196
          %s198 = smul.u32 8, %s23
          %s200 = ssub.s32 4096, 4096
          %201 = vsyncadd %s194, %s200
          %s202 = smul.addr %s198, 4
          %s203 = smul.addr %s202, 128
          %s204 = scalar_lea.hbm %s1, %s203
          %s205 = sshll.u32 %s197, 4
          %s206 = int_to_ptr.vmem [resolvable:$true] %s205
          %211 = dma.hbm_to_vmem [thread:$0]  %s204, 4096, %s206, %s194, 128, 128, 8
        $region24: #{tpu_custom_call.1} parent=15 // pred_fallthru
          _
        // Predicated region
        $region25: #{tpu_custom_call.1} parent=15 // pred_check
          %p212 = pneg %p95
        $region26: #{tpu_custom_call.1} parent=15 // pred_check_branch
          %214 = sbr.rel (%p212) target = $region28
        $region27: #{tpu_custom_call.1} parent=15 // pred_region
          %s215 = sand.u32 %s23, 1
          %s216 = scalar_lea.sflag [#allocation6], %s215
          %s217 = sand.u32 %s85, 1
          %s218 = smul.addr %s217, 256
          %s219 = scalar_lea.vmem [#allocation7], %s218
          %s220 = smul.u32 8, %s23
          %s222 = ssub.s32 4096, 4096
          %223 = vsyncadd %s216, %s222
          %s224 = smul.addr %s220, 4
          %s225 = smul.addr %s224, 128
          %s226 = scalar_lea.hbm %s2, %s225
          %s227 = sshll.u32 %s219, 4
          %s228 = int_to_ptr.vmem [resolvable:$true] %s227
          %233 = dma.hbm_to_vmem [thread:$0]  %s226, 4096, %s228, %s216, 128, 128, 8
        $region28: #{tpu_custom_call.1} parent=15 // pred_fallthru
          _
      $region16: #{tpu_custom_call.1} parent=5 // pred_fallthru
        _
      %p234 = scmp.le.s32.totalorder 1, %s23
      %p235 = scmp.lt.s32.totalorder %s23, 3
      %p236 = pnand %p234, %p235
      %p237 = pneg %p236
      // Predicated region
      $region29: #{tpu_custom_call.1} parent=5 // pred_check
        _
      $region30: #{tpu_custom_call.1} parent=5 // pred_check_branch
        %239 = sbr.rel (%p236) target = $region32
      $region31: #{tpu_custom_call.1} parent=5 // pred_region
        %s240 = ssub.s32 %s23, 1
        %s241 = sand.u32 %s36, 1
        %s242 = scalar_lea.sflag [#allocation3], %s241
        %s243 = sand.u32 %s36, 1
        %s244 = smul.addr %s243, 8
        %s245 = scalar_lea.vmem [#allocation2], %s244
        // Predicated region
        $region33: #{tpu_custom_call.1} parent=31 // pred_check
          %p246 = pneg %p49
        $region34: #{tpu_custom_call.1} parent=31 // pred_check_branch
          %248 = sbr.rel (%p246) target = $region36
        $region35: #{tpu_custom_call.1} parent=31 // pred_region
          %249 = dma.done %s242, 128
        $region36: #{tpu_custom_call.1} parent=31 // pred_fallthru
          _
        %s250 = sand.u32 %s28, 1
        %s251 = scalar_lea.sflag [#allocation6], %s250
        %s252 = sand.u32 %s62, 1
        %s253 = smul.addr %s252, 256
        %s254 = scalar_lea.vmem [#allocation5], %s253
        // Predicated region
        $region37: #{tpu_custom_call.1} parent=31 // pred_check
          %p255 = pneg %p75
        $region38: #{tpu_custom_call.1} parent=31 // pred_check_branch
          %257 = sbr.rel (%p255) target = $region40
        $region39: #{tpu_custom_call.1} parent=31 // pred_region
          %258 = dma.done %s251, 4096
        $region40: #{tpu_custom_call.1} parent=31 // pred_fallthru
          _
        %s259 = sand.u32 %s28, 1
        %s260 = scalar_lea.sflag [#allocation6], %s259
        %s261 = sand.u32 %s88, 1
        %s262 = smul.addr %s261, 256
        %s263 = scalar_lea.vmem [#allocation7], %s262
        // Predicated region
        $region41: #{tpu_custom_call.1} parent=31 // pred_check
          %p264 = pneg %p101
        $region42: #{tpu_custom_call.1} parent=31 // pred_check_branch
          %266 = sbr.rel (%p264) target = $region44
        $region43: #{tpu_custom_call.1} parent=31 // pred_region
          %267 = dma.done %s260, 4096
        $region44: #{tpu_custom_call.1} parent=31 // pred_fallthru
          _
        %s268 = sand.u32 %s36, 1
        %s269 = scalar_lea.sflag [#allocation3], %s268
        %s270 = sand.u32 %s36, 1
        %s271 = smul.addr %s270, 8
        %s272 = scalar_lea.vmem [#allocation2], %s271
        %p273 = pneg %p49
        %p274 = pneg %p46
        %s275 = sand.u32 %s28, 1
        %s276 = scalar_lea.sflag [#allocation6], %s275
        %s277 = sand.u32 %s62, 1
        %s278 = smul.addr %s277, 256
        %s279 = scalar_lea.vmem [#allocation5], %s278
        %p280 = pneg %p75
        %p281 = pneg %p72
        %s282 = sand.u32 %s28, 1
        %s283 = scalar_lea.sflag [#allocation6], %s282
        %s284 = sand.u32 %s88, 1
        %s285 = smul.addr %s284, 256
        %s286 = scalar_lea.vmem [#allocation7], %s285
        %p287 = pneg %p101
        %p288 = pneg %p98
        %p289 = pneg %p127
        %p290 = pneg %p124
        %s291 = sand.u32 %s114, 1
        %s292 = scalar_lea.sflag [#allocation4], %s291
        %s293 = sand.u32 %s114, 1
        %s294 = smul.addr %s293, 8
        %s295 = scalar_lea.vmem [#allocation8], %s294
        %p296 = pneg %p153
        %p297 = pneg %p150
        %s298 = sand.u32 %s140, 1
        %s299 = scalar_lea.sflag [#allocation10], %s298
        %s300 = sand.u32 %s140, 1
        %s301 = smul.addr %s300, 8
        %s302 = scalar_lea.vmem [#allocation9], %s301
        %s303 = smul.u32 8, %s28
        %s304 = smul.u32 8, %s28
        %v305 = vld [vmem:[%s245] sm:$0xff]
        %v306 = vld [vmem:[%s254] sm:$0xff]
        %v307 = vld [vmem:[%s254 + $0x8] sm:$0xff]
        %v308 = vld [vmem:[%s254 + $0x10] sm:$0xff]
        %v309 = vld [vmem:[%s254 + $0x18] sm:$0xff]
        %v310 = vld [vmem:[%s254 + $0x20] sm:$0xff]
        %v311 = vld [vmem:[%s254 + $0x28] sm:$0xff]
        %v312 = vld [vmem:[%s254 + $0x30] sm:$0xff]
        %v313 = vld [vmem:[%s254 + $0x38] sm:$0xff]
        %v314 = vld [vmem:[%s254 + $0x40] sm:$0xff]
        %v315 = vld [vmem:[%s254 + $0x48] sm:$0xff]
        %v316 = vld [vmem:[%s254 + $0x50] sm:$0xff]
        %v317 = vld [vmem:[%s254 + $0x58] sm:$0xff]
        %v318 = vld [vmem:[%s254 + $0x60] sm:$0xff]
        %v319 = vld [vmem:[%s254 + $0x68] sm:$0xff]
        %v320 = vld [vmem:[%s254 + $0x70] sm:$0xff]
        %v321 = vld [vmem:[%s254 + $0x78] sm:$0xff]
        %v322 = vld [vmem:[%s254 + $0x80] sm:$0xff]
        %v323 = vld [vmem:[%s254 + $0x88] sm:$0xff]
        %v324 = vld [vmem:[%s254 + $0x90] sm:$0xff]
        %v325 = vld [vmem:[%s254 + $0x98] sm:$0xff]
        %v326 = vld [vmem:[%s254 + $0xa0] sm:$0xff]
        %v327 = vld [vmem:[%s254 + $0xa8] sm:$0xff]
        %v328 = vld [vmem:[%s254 + $0xb0] sm:$0xff]
        %v329 = vld [vmem:[%s254 + $0xb8] sm:$0xff]
        %v330 = vld [vmem:[%s254 + $0xc0] sm:$0xff]
        %v331 = vld [vmem:[%s254 + $0xc8] sm:$0xff]
        %v332 = vld [vmem:[%s254 + $0xd0] sm:$0xff]
        %v333 = vld [vmem:[%s254 + $0xd8] sm:$0xff]
        %v334 = vld [vmem:[%s254 + $0xe0] sm:$0xff]
        %v335 = vld [vmem:[%s254 + $0xe8] sm:$0xff]
        %v336 = vld [vmem:[%s254 + $0xf0] sm:$0xff]
        %v337 = vld [vmem:[%s254 + $0xf8] sm:$0xff]
        %v338 = vld [vmem:[%s263] sm:$0xff]
        %v339 = vld [vmem:[%s263 + $0x8] sm:$0xff]
        %v340 = vld [vmem:[%s263 + $0x10] sm:$0xff]
        %v341 = vld [vmem:[%s263 + $0x18] sm:$0xff]
        %v342 = vld [vmem:[%s263 + $0x20] sm:$0xff]
        %v343 = vld [vmem:[%s263 + $0x28] sm:$0xff]
        %v344 = vld [vmem:[%s263 + $0x30] sm:$0xff]
        %v345 = vld [vmem:[%s263 + $0x38] sm:$0xff]
        %v346 = vld [vmem:[%s263 + $0x40] sm:$0xff]
        %v347 = vld [vmem:[%s263 + $0x48] sm:$0xff]
        %v348 = vld [vmem:[%s263 + $0x50] sm:$0xff]
        %v349 = vld [vmem:[%s263 + $0x58] sm:$0xff]
        %v350 = vld [vmem:[%s263 + $0x60] sm:$0xff]
        %v351 = vld [vmem:[%s263 + $0x68] sm:$0xff]
        %v352 = vld [vmem:[%s263 + $0x70] sm:$0xff]
        %v353 = vld [vmem:[%s263 + $0x78] sm:$0xff]
        %v354 = vld [vmem:[%s263 + $0x80] sm:$0xff]
        %v355 = vld [vmem:[%s263 + $0x88] sm:$0xff]
        %v356 = vld [vmem:[%s263 + $0x90] sm:$0xff]
        %v357 = vld [vmem:[%s263 + $0x98] sm:$0xff]
        %v358 = vld [vmem:[%s263 + $0xa0] sm:$0xff]
        %v359 = vld [vmem:[%s263 + $0xa8] sm:$0xff]
        %v360 = vld [vmem:[%s263 + $0xb0] sm:$0xff]
        %v361 = vld [vmem:[%s263 + $0xb8] sm:$0xff]
        %v362 = vld [vmem:[%s263 + $0xc0] sm:$0xff]
        %v363 = vld [vmem:[%s263 + $0xc8] sm:$0xff]
        %v364 = vld [vmem:[%s263 + $0xd0] sm:$0xff]
        %v365 = vld [vmem:[%s263 + $0xd8] sm:$0xff]
        %v366 = vld [vmem:[%s263 + $0xe0] sm:$0xff]
        %v367 = vld [vmem:[%s263 + $0xe8] sm:$0xff]
        %v368 = vld [vmem:[%s263 + $0xf0] sm:$0xff]
        %v369 = vld [vmem:[%s263 + $0xf8] sm:$0xff]
        %v371 = vcombine.high %v305, %v305
        %v373 = vunpack.c.l.s4 1966171168
        %v374 = vunpack.c.0.s8 %v373
        %v375 = vlaneseq
        %v376 = vshrl.u32 %v375, 7
        %v377 = vsub.s32 %v374, %v376
        %v378 = vrot.slane %v305, %v377
        %v380 = vunpack.c.l.s4 1966171168
        %v381 = vunpack.c.0.s8 %v380
        %v382 = vlaneseq
        %v383 = vshrl.u32 %v382, 7
        %v384 = vsub.s32 %v381, %v383
        %v385 = vrot.slane %v371, %v384
        %v386 = vcombine.high %v378, %v378
        %v387 = vcombine.high %v385, %v385
        %v389 = vunpack.c.l.s4 1966171168
        %v390 = vunpack.c.0.s8 %v389
        %v391 = vlaneseq
        %v392 = vshrl.u32 %v391, 7
        %v393 = vsub.s32 %v390, %v392
        %v394 = vrot.slane %v378, %v393
        %v396 = vunpack.c.l.s4 1966171168
        %v397 = vunpack.c.0.s8 %v396
        %v398 = vlaneseq
        %v399 = vshrl.u32 %v398, 7
        %v400 = vsub.s32 %v397, %v399
        %v401 = vrot.slane %v385, %v400
        %v403 = vunpack.c.l.s4 1966171168
        %v404 = vunpack.c.0.s8 %v403
        %v405 = vlaneseq
        %v406 = vshrl.u32 %v405, 7
        %v407 = vsub.s32 %v404, %v406
        %v408 = vrot.slane %v386, %v407
        %v410 = vunpack.c.l.s4 1966171168
        %v411 = vunpack.c.0.s8 %v410
        %v412 = vlaneseq
        %v413 = vshrl.u32 %v412, 7
        %v414 = vsub.s32 %v411, %v413
        %v415 = vrot.slane %v387, %v414
        %v416 = vcombine.high %v394, %v394
        %v417 = vcombine.high %v401, %v401
        %v418 = vcombine.high %v408, %v408
        %v419 = vcombine.high %v415, %v415
        %v420 = vlaneseq
        %v421 = vshrl.u32 %v420, 7
        %v422 = vsub.s32 0, %v421
        %v423 = vrot.slane %v394, %v422
        %424 = vrot.lane.b32.xlu0 %v423, 96
        %v425 = vpop.permute.xlu0 %424
        %vm426 = vcmask 261120
        %v427 = vsel %vm426, %v425, 0
        %v430 = vsel %vm426, %v306, 0
        %v433 = vsel %vm426, %v307, 0
        %v436 = vsel %vm426, %v308, 0
        %v439 = vsel %vm426, %v309, 0
        %441 = vmatprep.subr.mxu0 0.0
        %442 = vmatpush1.xpose.msra.mxu0 %v430
        %443 = vmatprep.subr.mxu0 0.0
        %444 = vmatpush1.xpose.msra.mxu0 %v433
        %445 = vmatprep.subr.mxu0 0.0
        %446 = vmatpush1.xpose.msra.mxu0 %v436
        %447 = vmatprep.subr.mxu0 0.0
        %448 = vmatpush1.xpose.msra.mxu0 %v439
        %449 = vmatprep.subr.mxu0 0.0
        %450 = vmatpush1.xpose.msra.mxu0 0.0
        %451 = vmatprep.subr.mxu0 0.0
        %452 = vmatpush1.xpose.msra.mxu0 0.0
        %453 = vmatprep.subr.mxu0 0.0
        %454 = vmatpush1.xpose.msra.mxu0 0.0
        %455 = vmatprep.subr.mxu0 0.0
        %456 = vmatpush1.xpose.msra.mxu0 0.0
        %457 = vmatprep.subr.mxu0 0.0
        %458 = vmatpush1.xpose.msra.mxu0 0.0
        %459 = vmatprep.subr.mxu0 0.0
        %460 = vmatpush1.xpose.msra.mxu0 0.0
        %461 = vmatprep.subr.mxu0 0.0
        %462 = vmatpush1.xpose.msra.mxu0 0.0
        %463 = vmatprep.subr.mxu0 0.0
        %464 = vmatpush1.xpose.msra.mxu0 0.0
        %465 = vmatprep.subr.mxu0 0.0
        %466 = vmatpush1.xpose.msra.mxu0 0.0
        %467 = vmatprep.subr.mxu0 0.0
        %468 = vmatpush1.xpose.msra.mxu0 0.0
        %469 = vmatprep.subr.mxu0 0.0
        %470 = vmatpush1.xpose.msra.mxu0 0.0
        %471 = vmatprep.subr.mxu0 0.0
        %472 = vmatpush1.xpose.msra.mxu0 0.0
        %473 = vmatprep.subr.mxu0 0.0
        %474 = vmatpush1.xpose.msra.mxu0 0.0
        %475 = vmatprep.subr.mxu0 0.0
        %476 = vmatpush1.xpose.msra.mxu0 0.0
        %477 = vmatprep.subr.mxu0 0.0
        %478 = vmatpush1.xpose.msra.mxu0 0.0
        %479 = vmatprep.subr.mxu0 0.0
        %480 = vmatpush1.xpose.msra.mxu0 0.0
        %481 = vmatprep.subr.mxu0 0.0
        %482 = vmatpush1.xpose.msra.mxu0 0.0
        %483 = vmatprep.subr.mxu0 0.0
        %484 = vmatpush1.xpose.msra.mxu0 0.0
        %485 = vmatprep.subr.mxu0 0.0
        %486 = vmatpush1.xpose.msra.mxu0 0.0
        %487 = vmatprep.subr.mxu0 0.0
        %488 = vmatpush1.xpose.msra.mxu0 0.0
        %489 = vmatprep.subr.mxu0 0.0
        %490 = vmatpush1.xpose.msra.mxu0 0.0
        %491 = vmatprep.subr.mxu0 0.0
        %492 = vmatpush1.xpose.msra.mxu0 0.0
        %493 = vmatprep.subr.mxu0 0.0
        %494 = vmatpush1.xpose.msra.mxu0 0.0
        %495 = vmatprep.subr.mxu0 0.0
        %496 = vmatpush1.xpose.msra.mxu0 0.0
        %497 = vmatprep.subr.mxu0 0.0
        %498 = vmatpush1.xpose.msra.mxu0 0.0
        %499 = vmatprep.subr.mxu0 0.0
        %500 = vmatpush1.xpose.msra.mxu0 0.0
        %501 = vmatprep.subr.mxu0 0.0
        %502 = vmatpush1.xpose.msra.mxu0 0.0
        %503 = vmatprep.subr.mxu0 0.0
        %504 = vmatpush1.xpose.msra.mxu0 0.0
        %505 = vmatprep.mubr.f32.mxu0 0.0
        %506 = vmatmul.mubr.f32.gmra.mrb[0].mxu0 %v427
        %v507 = vpop.f32.mrb[0].mxu0
        %v508 = vadd.f32 0.0, %v507
        %v509 = vpop.f32.mrb[0].mxu0
        %510 = vdwg.mxu0
        %v511 = vlaneseq
        %v512 = vshrl.u32 %v511, 7
        %v513 = vsub.s32 0, %v512
        %v514 = vrot.slane %v408, %v513
        %515 = vrot.lane.b32.xlu0 %v514, 96
        %v516 = vpop.permute.xlu0 %515
        %v517 = vsel %vm426, %v516, 0
        %v520 = vsel %vm426, %v310, 0
        %v523 = vsel %vm426, %v311, 0
        %v526 = vsel %vm426, %v312, 0
        %v529 = vsel %vm426, %v313, 0
        %531 = vmatprep.subr.mxu0 0.0
        %532 = vmatpush1.xpose.msra.mxu0 %v520
        %533 = vmatprep.subr.mxu0 0.0
        %534 = vmatpush1.xpose.msra.mxu0 %v523
        %535 = vmatprep.subr.mxu0 0.0
        %536 = vmatpush1.xpose.msra.mxu0 %v526
        %537 = vmatprep.subr.mxu0 0.0
        %538 = vmatpush1.xpose.msra.mxu0 %v529
        %539 = vmatprep.subr.mxu0 0.0
        %540 = vmatpush1.xpose.msra.mxu0 0.0
        %541 = vmatprep.subr.mxu0 0.0
        %542 = vmatpush1.xpose.msra.mxu0 0.0
        %543 = vmatprep.subr.mxu0 0.0
        %544 = vmatpush1.xpose.msra.mxu0 0.0
        %545 = vmatprep.subr.mxu0 0.0
        %546 = vmatpush1.xpose.msra.mxu0 0.0
        %547 = vmatprep.subr.mxu0 0.0
        %548 = vmatpush1.xpose.msra.mxu0 0.0
        %549 = vmatprep.subr.mxu0 0.0
        %550 = vmatpush1.xpose.msra.mxu0 0.0
        %551 = vmatprep.subr.mxu0 0.0
        %552 = vmatpush1.xpose.msra.mxu0 0.0
        %553 = vmatprep.subr.mxu0 0.0
        %554 = vmatpush1.xpose.msra.mxu0 0.0
        %555 = vmatprep.subr.mxu0 0.0
        %556 = vmatpush1.xpose.msra.mxu0 0.0
        %557 = vmatprep.subr.mxu0 0.0
        %558 = vmatpush1.xpose.msra.mxu0 0.0
        %559 = vmatprep.subr.mxu0 0.0
        %560 = vmatpush1.xpose.msra.mxu0 0.0
        %561 = vmatprep.subr.mxu0 0.0
        %562 = vmatpush1.xpose.msra.mxu0 0.0
        %563 = vmatprep.subr.mxu0 0.0
        %564 = vmatpush1.xpose.msra.mxu0 0.0
        %565 = vmatprep.subr.mxu0 0.0
        %566 = vmatpush1.xpose.msra.mxu0 0.0
        %567 = vmatprep.subr.mxu0 0.0
        %568 = vmatpush1.xpose.msra.mxu0 0.0
        %569 = vmatprep.subr.mxu0 0.0
        %570 = vmatpush1.xpose.msra.mxu0 0.0
        %571 = vmatprep.subr.mxu0 0.0
        %572 = vmatpush1.xpose.msra.mxu0 0.0
        %573 = vmatprep.subr.mxu0 0.0
        %574 = vmatpush1.xpose.msra.mxu0 0.0
        %575 = vmatprep.subr.mxu0 0.0
        %576 = vmatpush1.xpose.msra.mxu0 0.0
        %577 = vmatprep.subr.mxu0 0.0
        %578 = vmatpush1.xpose.msra.mxu0 0.0
        %579 = vmatprep.subr.mxu0 0.0
        %580 = vmatpush1.xpose.msra.mxu0 0.0
        %581 = vmatprep.subr.mxu0 0.0
        %582 = vmatpush1.xpose.msra.mxu0 0.0
        %583 = vmatprep.subr.mxu0 0.0
        %584 = vmatpush1.xpose.msra.mxu0 0.0
        %585 = vmatprep.subr.mxu0 0.0
        %586 = vmatpush1.xpose.msra.mxu0 0.0
        %587 = vmatprep.subr.mxu0 0.0
        %588 = vmatpush1.xpose.msra.mxu0 0.0
        %589 = vmatprep.subr.mxu0 0.0
        %590 = vmatpush1.xpose.msra.mxu0 0.0
        %591 = vmatprep.subr.mxu0 0.0
        %592 = vmatpush1.xpose.msra.mxu0 0.0
        %593 = vmatprep.subr.mxu0 0.0
        %594 = vmatpush1.xpose.msra.mxu0 0.0
        %595 = vmatprep.mubr.f32.mxu0 0.0
        %596 = vmatmul.mubr.f32.gmra.mrb[0].mxu0 %v517
        %v597 = vpop.f32.mrb[0].mxu0
        %v598 = vadd.f32 0.0, %v597
        %v599 = vpop.f32.mrb[0].mxu0
        %600 = vdwg.mxu0
        %v601 = vlaneseq
        %v602 = vshrl.u32 %v601, 7
        %v603 = vsub.s32 0, %v602
        %v604 = vrot.slane %v416, %v603
        %605 = vrot.lane.b32.xlu0 %v604, 96
        %v606 = vpop.permute.xlu0 %605
        %v607 = vsel %vm426, %v606, 0
        %v610 = vsel %vm426, %v314, 0
        %v613 = vsel %vm426, %v315, 0
        %v616 = vsel %vm426, %v316, 0
        %v619 = vsel %vm426, %v317, 0
        %621 = vmatprep.subr.mxu0 0.0
        %622 = vmatpush1.xpose.msra.mxu0 %v610
        %623 = vmatprep.subr.mxu0 0.0
        %624 = vmatpush1.xpose.msra.mxu0 %v613
        %625 = vmatprep.subr.mxu0 0.0
        %626 = vmatpush1.xpose.msra.mxu0 %v616
        %627 = vmatprep.subr.mxu0 0.0
        %628 = vmatpush1.xpose.msra.mxu0 %v619
        %629 = vmatprep.subr.mxu0 0.0
        %630 = vmatpush1.xpose.msra.mxu0 0.0
        %631 = vmatprep.subr.mxu0 0.0
        %632 = vmatpush1.xpose.msra.mxu0 0.0
        %633 = vmatprep.subr.mxu0 0.0
        %634 = vmatpush1.xpose.msra.mxu0 0.0
        %635 = vmatprep.subr.mxu0 0.0
        %636 = vmatpush1.xpose.msra.mxu0 0.0
        %637 = vmatprep.subr.mxu0 0.0
        %638 = vmatpush1.xpose.msra.mxu0 0.0
        %639 = vmatprep.subr.mxu0 0.0
        %640 = vmatpush1.xpose.msra.mxu0 0.0
        %641 = vmatprep.subr.mxu0 0.0
        %642 = vmatpush1.xpose.msra.mxu0 0.0
        %643 = vmatprep.subr.mxu0 0.0
        %644 = vmatpush1.xpose.msra.mxu0 0.0
        %645 = vmatprep.subr.mxu0 0.0
        %646 = vmatpush1.xpose.msra.mxu0 0.0
        %647 = vmatprep.subr.mxu0 0.0
        %648 = vmatpush1.xpose.msra.mxu0 0.0
        %649 = vmatprep.subr.mxu0 0.0
        %650 = vmatpush1.xpose.msra.mxu0 0.0
        %651 = vmatprep.subr.mxu0 0.0
        %652 = vmatpush1.xpose.msra.mxu0 0.0
        %653 = vmatprep.subr.mxu0 0.0
        %654 = vmatpush1.xpose.msra.mxu0 0.0
        %655 = vmatprep.subr.mxu0 0.0
        %656 = vmatpush1.xpose.msra.mxu0 0.0
        %657 = vmatprep.subr.mxu0 0.0
        %658 = vmatpush1.xpose.msra.mxu0 0.0
        %659 = vmatprep.subr.mxu0 0.0
        %660 = vmatpush1.xpose.msra.mxu0 0.0
        %661 = vmatprep.subr.mxu0 0.0
        %662 = vmatpush1.xpose.msra.mxu0 0.0
        %663 = vmatprep.subr.mxu0 0.0
        %664 = vmatpush1.xpose.msra.mxu0 0.0
        %665 = vmatprep.subr.mxu0 0.0
        %666 = vmatpush1.xpose.msra.mxu0 0.0
        %667 = vmatprep.subr.mxu0 0.0
        %668 = vmatpush1.xpose.msra.mxu0 0.0
        %669 = vmatprep.subr.mxu0 0.0
        %670 = vmatpush1.xpose.msra.mxu0 0.0
        %671 = vmatprep.subr.mxu0 0.0
        %672 = vmatpush1.xpose.msra.mxu0 0.0
        %673 = vmatprep.subr.mxu0 0.0
        %674 = vmatpush1.xpose.msra.mxu0 0.0
        %675 = vmatprep.subr.mxu0 0.0
        %676 = vmatpush1.xpose.msra.mxu0 0.0
        %677 = vmatprep.subr.mxu0 0.0
        %678 = vmatpush1.xpose.msra.mxu0 0.0
        %679 = vmatprep.subr.mxu0 0.0
        %680 = vmatpush1.xpose.msra.mxu0 0.0
        %681 = vmatprep.subr.mxu0 0.0
        %682 = vmatpush1.xpose.msra.mxu0 0.0
        %683 = vmatprep.subr.mxu0 0.0
        %684 = vmatpush1.xpose.msra.mxu0 0.0
        %685 = vmatprep.mubr.f32.mxu0 0.0
        %686 = vmatmul.mubr.f32.gmra.mrb[0].mxu0 %v607
        %v687 = vpop.f32.mrb[0].mxu0
        %v688 = vadd.f32 0.0, %v687
        %v689 = vpop.f32.mrb[0].mxu0
        %690 = vdwg.mxu0
        %v691 = vlaneseq
        %v692 = vshrl.u32 %v691, 7
        %v693 = vsub.s32 0, %v692
        %v694 = vrot.slane %v418, %v693
        %695 = vrot.lane.b32.xlu0 %v694, 96
        %v696 = vpop.permute.xlu0 %695
        %v697 = vsel %vm426, %v696, 0
        %v700 = vsel %vm426, %v318, 0
        %v703 = vsel %vm426, %v319, 0
        %v706 = vsel %vm426, %v320, 0
        %v709 = vsel %vm426, %v321, 0
        %711 = vmatprep.subr.mxu0 0.0
        %712 = vmatpush1.xpose.msra.mxu0 %v700
        %713 = vmatprep.subr.mxu0 0.0
        %714 = vmatpush1.xpose.msra.mxu0 %v703
        %715 = vmatprep.subr.mxu0 0.0
        %716 = vmatpush1.xpose.msra.mxu0 %v706
        %717 = vmatprep.subr.mxu0 0.0
        %718 = vmatpush1.xpose.msra.mxu0 %v709
        %719 = vmatprep.subr.mxu0 0.0
        %720 = vmatpush1.xpose.msra.mxu0 0.0
        %721 = vmatprep.subr.mxu0 0.0
        %722 = vmatpush1.xpose.msra.mxu0 0.0
        %723 = vmatprep.subr.mxu0 0.0
        %724 = vmatpush1.xpose.msra.mxu0 0.0
        %725 = vmatprep.subr.mxu0 0.0
        %726 = vmatpush1.xpose.msra.mxu0 0.0
        %727 = vmatprep.subr.mxu0 0.0
        %728 = vmatpush1.xpose.msra.mxu0 0.0
        %729 = vmatprep.subr.mxu0 0.0
        %730 = vmatpush1.xpose.msra.mxu0 0.0
        %731 = vmatprep.subr.mxu0 0.0
        %732 = vmatpush1.xpose.msra.mxu0 0.0
        %733 = vmatprep.subr.mxu0 0.0
        %734 = vmatpush1.xpose.msra.mxu0 0.0
        %735 = vmatprep.subr.mxu0 0.0
        %736 = vmatpush1.xpose.msra.mxu0 0.0
        %737 = vmatprep.subr.mxu0 0.0
        %738 = vmatpush1.xpose.msra.mxu0 0.0
        %739 = vmatprep.subr.mxu0 0.0
        %740 = vmatpush1.xpose.msra.mxu0 0.0
        %741 = vmatprep.subr.mxu0 0.0
        %742 = vmatpush1.xpose.msra.mxu0 0.0
        %743 = vmatprep.subr.mxu0 0.0
        %744 = vmatpush1.xpose.msra.mxu0 0.0
        %745 = vmatprep.subr.mxu0 0.0
        %746 = vmatpush1.xpose.msra.mxu0 0.0
        %747 = vmatprep.subr.mxu0 0.0
        %748 = vmatpush1.xpose.msra.mxu0 0.0
        %749 = vmatprep.subr.mxu0 0.0
        %750 = vmatpush1.xpose.msra.mxu0 0.0
        %751 = vmatprep.subr.mxu0 0.0
        %752 = vmatpush1.xpose.msra.mxu0 0.0
        %753 = vmatprep.subr.mxu0 0.0
        %754 = vmatpush1.xpose.msra.mxu0 0.0
        %755 = vmatprep.subr.mxu0 0.0
        %756 = vmatpush1.xpose.msra.mxu0 0.0
        %757 = vmatprep.subr.mxu0 0.0
        %758 = vmatpush1.xpose.msra.mxu0 0.0
        %759 = vmatprep.subr.mxu0 0.0
        %760 = vmatpush1.xpose.msra.mxu0 0.0
        %761 = vmatprep.subr.mxu0 0.0
        %762 = vmatpush1.xpose.msra.mxu0 0.0
        %763 = vmatprep.subr.mxu0 0.0
        %764 = vmatpush1.xpose.msra.mxu0 0.0
        %765 = vmatprep.subr.mxu0 0.0
        %766 = vmatpush1.xpose.msra.mxu0 0.0
        %767 = vmatprep.subr.mxu0 0.0
        %768 = vmatpush1.xpose.msra.mxu0 0.0
        %769 = vmatprep.subr.mxu0 0.0
        %770 = vmatpush1.xpose.msra.mxu0 0.0
        %771 = vmatprep.subr.mxu0 0.0
        %772 = vmatpush1.xpose.msra.mxu0 0.0
        %773 = vmatprep.subr.mxu0 0.0
        %774 = vmatpush1.xpose.msra.mxu0 0.0
        %775 = vmatprep.mubr.f32.mxu0 0.0
        %776 = vmatmul.mubr.f32.gmra.mrb[0].mxu0 %v697
        %v777 = vpop.f32.mrb[0].mxu0
        %v778 = vadd.f32 0.0, %v777
        %v779 = vpop.f32.mrb[0].mxu0
        %780 = vdwg.mxu0
        %v781 = vlaneseq
        %v782 = vshrl.u32 %v781, 7
        %v783 = vsub.s32 0, %v782
        %v784 = vrot.slane %v401, %v783
        %785 = vrot.lane.b32.xlu0 %v784, 96
        %v786 = vpop.permute.xlu0 %785
        %v787 = vsel %vm426, %v786, 0
        %v790 = vsel %vm426, %v322, 0
        %v793 = vsel %vm426, %v323, 0
        %v796 = vsel %vm426, %v324, 0
        %v799 = vsel %vm426, %v325, 0
        %801 = vmatprep.subr.mxu0 0.0
        %802 = vmatpush1.xpose.msra.mxu0 %v790
        %803 = vmatprep.subr.mxu0 0.0
        %804 = vmatpush1.xpose.msra.mxu0 %v793
        %805 = vmatprep.subr.mxu0 0.0
        %806 = vmatpush1.xpose.msra.mxu0 %v796
        %807 = vmatprep.subr.mxu0 0.0
        %808 = vmatpush1.xpose.msra.mxu0 %v799
        %809 = vmatprep.subr.mxu0 0.0
        %810 = vmatpush1.xpose.msra.mxu0 0.0
        %811 = vmatprep.subr.mxu0 0.0
        %812 = vmatpush1.xpose.msra.mxu0 0.0
        %813 = vmatprep.subr.mxu0 0.0
        %814 = vmatpush1.xpose.msra.mxu0 0.0
        %815 = vmatprep.subr.mxu0 0.0
        %816 = vmatpush1.xpose.msra.mxu0 0.0
        %817 = vmatprep.subr.mxu0 0.0
        %818 = vmatpush1.xpose.msra.mxu0 0.0
        %819 = vmatprep.subr.mxu0 0.0
        %820 = vmatpush1.xpose.msra.mxu0 0.0
        %821 = vmatprep.subr.mxu0 0.0
        %822 = vmatpush1.xpose.msra.mxu0 0.0
        %823 = vmatprep.subr.mxu0 0.0
        %824 = vmatpush1.xpose.msra.mxu0 0.0
        %825 = vmatprep.subr.mxu0 0.0
        %826 = vmatpush1.xpose.msra.mxu0 0.0
        %827 = vmatprep.subr.mxu0 0.0
        %828 = vmatpush1.xpose.msra.mxu0 0.0
        %829 = vmatprep.subr.mxu0 0.0
        %830 = vmatpush1.xpose.msra.mxu0 0.0
        %831 = vmatprep.subr.mxu0 0.0
        %832 = vmatpush1.xpose.msra.mxu0 0.0
        %833 = vmatprep.subr.mxu0 0.0
        %834 = vmatpush1.xpose.msra.mxu0 0.0
        %835 = vmatprep.subr.mxu0 0.0
        %836 = vmatpush1.xpose.msra.mxu0 0.0
        %837 = vmatprep.subr.mxu0 0.0
        %838 = vmatpush1.xpose.msra.mxu0 0.0
        %839 = vmatprep.subr.mxu0 0.0
        %840 = vmatpush1.xpose.msra.mxu0 0.0
        %841 = vmatprep.subr.mxu0 0.0
        %842 = vmatpush1.xpose.msra.mxu0 0.0
        %843 = vmatprep.subr.mxu0 0.0
        %844 = vmatpush1.xpose.msra.mxu0 0.0
        %845 = vmatprep.subr.mxu0 0.0
        %846 = vmatpush1.xpose.msra.mxu0 0.0
        %847 = vmatprep.subr.mxu0 0.0
        %848 = vmatpush1.xpose.msra.mxu0 0.0
        %849 = vmatprep.subr.mxu0 0.0
        %850 = vmatpush1.xpose.msra.mxu0 0.0
        %851 = vmatprep.subr.mxu0 0.0
        %852 = vmatpush1.xpose.msra.mxu0 0.0
        %853 = vmatprep.subr.mxu0 0.0
        %854 = vmatpush1.xpose.msra.mxu0 0.0
        %855 = vmatprep.subr.mxu0 0.0
        %856 = vmatpush1.xpose.msra.mxu0 0.0
        %857 = vmatprep.subr.mxu0 0.0
        %858 = vmatpush1.xpose.msra.mxu0 0.0
        %859 = vmatprep.subr.mxu0 0.0
        %860 = vmatpush1.xpose.msra.mxu0 0.0
        %861 = vmatprep.subr.mxu0 0.0
        %862 = vmatpush1.xpose.msra.mxu0 0.0
        %863 = vmatprep.subr.mxu0 0.0
        %864 = vmatpush1.xpose.msra.mxu0 0.0
        %865 = vmatprep.mubr.f32.mxu0 0.0
        %866 = vmatmul.mubr.f32.gmra.mrb[0].mxu0 %v787
        %v867 = vpop.f32.mrb[0].mxu0
        %v868 = vadd.f32 0.0, %v867
        %v869 = vpop.f32.mrb[0].mxu0
        %870 = vdwg.mxu0
        %v871 = vlaneseq
        %v872 = vshrl.u32 %v871, 7
        %v873 = vsub.s32 0, %v872
        %v874 = vrot.slane %v415, %v873
        %875 = vrot.lane.b32.xlu0 %v874, 96
        %v876 = vpop.permute.xlu0 %875
        %v877 = vsel %vm426, %v876, 0
        %v880 = vsel %vm426, %v326, 0
        %v883 = vsel %vm426, %v327, 0
        %v886 = vsel %vm426, %v328, 0
        %v889 = vsel %vm426, %v329, 0
        %891 = vmatprep.subr.mxu0 0.0
        %892 = vmatpush1.xpose.msra.mxu0 %v880
        %893 = vmatprep.subr.mxu0 0.0
        %894 = vmatpush1.xpose.msra.mxu0 %v883
        %895 = vmatprep.subr.mxu0 0.0
        %896 = vmatpush1.xpose.msra.mxu0 %v886
        %897 = vmatprep.subr.mxu0 0.0
        %898 = vmatpush1.xpose.msra.mxu0 %v889
        %899 = vmatprep.subr.mxu0 0.0
        %900 = vmatpush1.xpose.msra.mxu0 0.0
        %901 = vmatprep.subr.mxu0 0.0
        %902 = vmatpush1.xpose.msra.mxu0 0.0
        %903 = vmatprep.subr.mxu0 0.0
        %904 = vmatpush1.xpose.msra.mxu0 0.0
        %905 = vmatprep.subr.mxu0 0.0
        %906 = vmatpush1.xpose.msra.mxu0 0.0
        %907 = vmatprep.subr.mxu0 0.0
        %908 = vmatpush1.xpose.msra.mxu0 0.0
        %909 = vmatprep.subr.mxu0 0.0
        %910 = vmatpush1.xpose.msra.mxu0 0.0
        %911 = vmatprep.subr.mxu0 0.0
        %912 = vmatpush1.xpose.msra.mxu0 0.0
        %913 = vmatprep.subr.mxu0 0.0
        %914 = vmatpush1.xpose.msra.mxu0 0.0
        %915 = vmatprep.subr.mxu0 0.0
        %916 = vmatpush1.xpose.msra.mxu0 0.0
        %917 = vmatprep.subr.mxu0 0.0
        %918 = vmatpush1.xpose.msra.mxu0 0.0
        %919 = vmatprep.subr.mxu0 0.0
        %920 = vmatpush1.xpose.msra.mxu0 0.0
        %921 = vmatprep.subr.mxu0 0.0
        %922 = vmatpush1.xpose.msra.mxu0 0.0
        %923 = vmatprep.subr.mxu0 0.0
        %924 = vmatpush1.xpose.msra.mxu0 0.0
        %925 = vmatprep.subr.mxu0 0.0
        %926 = vmatpush1.xpose.msra.mxu0 0.0
        %927 = vmatprep.subr.mxu0 0.0
        %928 = vmatpush1.xpose.msra.mxu0 0.0
        %929 = vmatprep.subr.mxu0 0.0
        %930 = vmatpush1.xpose.msra.mxu0 0.0
        %931 = vmatprep.subr.mxu0 0.0
        %932 = vmatpush1.xpose.msra.mxu0 0.0
        %933 = vmatprep.subr.mxu0 0.0
        %934 = vmatpush1.xpose.msra.mxu0 0.0
        %935 = vmatprep.subr.mxu0 0.0
        %936 = vmatpush1.xpose.msra.mxu0 0.0
        %937 = vmatprep.subr.mxu0 0.0
        %938 = vmatpush1.xpose.msra.mxu0 0.0
        %939 = vmatprep.subr.mxu0 0.0
        %940 = vmatpush1.xpose.msra.mxu0 0.0
        %941 = vmatprep.subr.mxu0 0.0
        %942 = vmatpush1.xpose.msra.mxu0 0.0
        %943 = vmatprep.subr.mxu0 0.0
        %944 = vmatpush1.xpose.msra.mxu0 0.0
        %945 = vmatprep.subr.mxu0 0.0
        %946 = vmatpush1.xpose.msra.mxu0 0.0
        %947 = vmatprep.subr.mxu0 0.0
        %948 = vmatpush1.xpose.msra.mxu0 0.0
        %949 = vmatprep.subr.mxu0 0.0
        %950 = vmatpush1.xpose.msra.mxu0 0.0
        %951 = vmatprep.subr.mxu0 0.0
        %952 = vmatpush1.xpose.msra.mxu0 0.0
        %953 = vmatprep.subr.mxu0 0.0
        %954 = vmatpush1.xpose.msra.mxu0 0.0
        %955 = vmatprep.mubr.f32.mxu0 0.0
        %956 = vmatmul.mubr.f32.gmra.mrb[0].mxu0 %v877
        %v957 = vpop.f32.mrb[0].mxu0
        %v958 = vadd.f32 0.0, %v957
        %v959 = vpop.f32.mrb[0].mxu0
        %960 = vdwg.mxu0
        %v961 = vlaneseq
        %v962 = vshrl.u32 %v961, 7
        %v963 = vsub.s32 0, %v962
        %v964 = vrot.slane %v417, %v963
        %965 = vrot.lane.b32.xlu0 %v964, 96
        %v966 = vpop.permute.xlu0 %965
        %v967 = vsel %vm426, %v966, 0
        %v970 = vsel %vm426, %v330, 0
        %v973 = vsel %vm426, %v331, 0
        %v976 = vsel %vm426, %v332, 0
        %v979 = vsel %vm426, %v333, 0
        %981 = vmatprep.subr.mxu0 0.0
        %982 = vmatpush1.xpose.msra.mxu0 %v970
        %983 = vmatprep.subr.mxu0 0.0
        %984 = vmatpush1.xpose.msra.mxu0 %v973
        %985 = vmatprep.subr.mxu0 0.0
        %986 = vmatpush1.xpose.msra.mxu0 %v976
        %987 = vmatprep.subr.mxu0 0.0
        %988 = vmatpush1.xpose.msra.mxu0 %v979
        %989 = vmatprep.subr.mxu0 0.0
        %990 = vmatpush1.xpose.msra.mxu0 0.0
        %991 = vmatprep.subr.mxu0 0.0
        %992 = vmatpush1.xpose.msra.mxu0 0.0
        %993 = vmatprep.subr.mxu0 0.0
        %994 = vmatpush1.xpose.msra.mxu0 0.0
        %995 = vmatprep.subr.mxu0 0.0
        %996 = vmatpush1.xpose.msra.mxu0 0.0
        %997 = vmatprep.subr.mxu0 0.0
        %998 = vmatpush1.xpose.msra.mxu0 0.0
        %999 = vmatprep.subr.mxu0 0.0
        %1000 = vmatpush1.xpose.msra.mxu0 0.0
        %1001 = vmatprep.subr.mxu0 0.0
        %1002 = vmatpush1.xpose.msra.mxu0 0.0
        %1003 = vmatprep.subr.mxu0 0.0
        %1004 = vmatpush1.xpose.msra.mxu0 0.0
        %1005 = vmatprep.subr.mxu0 0.0
        %1006 = vmatpush1.xpose.msra.mxu0 0.0
        %1007 = vmatprep.subr.mxu0 0.0
        %1008 = vmatpush1.xpose.msra.mxu0 0.0
        %1009 = vmatprep.subr.mxu0 0.0
        %1010 = vmatpush1.xpose.msra.mxu0 0.0
        %1011 = vmatprep.subr.mxu0 0.0
        %1012 = vmatpush1.xpose.msra.mxu0 0.0
        %1013 = vmatprep.subr.mxu0 0.0
        %1014 = vmatpush1.xpose.msra.mxu0 0.0
        %1015 = vmatprep.subr.mxu0 0.0
        %1016 = vmatpush1.xpose.msra.mxu0 0.0
        %1017 = vmatprep.subr.mxu0 0.0
        %1018 = vmatpush1.xpose.msra.mxu0 0.0
        %1019 = vmatprep.subr.mxu0 0.0
        %1020 = vmatpush1.xpose.msra.mxu0 0.0
        %1021 = vmatprep.subr.mxu0 0.0
        %1022 = vmatpush1.xpose.msra.mxu0 0.0
        %1023 = vmatprep.subr.mxu0 0.0
        %1024 = vmatpush1.xpose.msra.mxu0 0.0
        %1025 = vmatprep.subr.mxu0 0.0
        %1026 = vmatpush1.xpose.msra.mxu0 0.0
        %1027 = vmatprep.subr.mxu0 0.0
        %1028 = vmatpush1.xpose.msra.mxu0 0.0
        %1029 = vmatprep.subr.mxu0 0.0
        %1030 = vmatpush1.xpose.msra.mxu0 0.0
        %1031 = vmatprep.subr.mxu0 0.0
        %1032 = vmatpush1.xpose.msra.mxu0 0.0
        %1033 = vmatprep.subr.mxu0 0.0
        %1034 = vmatpush1.xpose.msra.mxu0 0.0
        %1035 = vmatprep.subr.mxu0 0.0
        %1036 = vmatpush1.xpose.msra.mxu0 0.0
        %1037 = vmatprep.subr.mxu0 0.0
        %1038 = vmatpush1.xpose.msra.mxu0 0.0
        %1039 = vmatprep.subr.mxu0 0.0
        %1040 = vmatpush1.xpose.msra.mxu0 0.0
        %1041 = vmatprep.subr.mxu0 0.0
        %1042 = vmatpush1.xpose.msra.mxu0 0.0
        %1043 = vmatprep.subr.mxu0 0.0
        %1044 = vmatpush1.xpose.msra.mxu0 0.0
        %1045 = vmatprep.mubr.f32.mxu0 0.0
        %1046 = vmatmul.mubr.f32.gmra.mrb[0].mxu0 %v967
        %v1047 = vpop.f32.mrb[0].mxu0
        %v1048 = vadd.f32 0.0, %v1047
        %v1049 = vpop.f32.mrb[0].mxu0
        %1050 = vdwg.mxu0
        %v1051 = vlaneseq
        %v1052 = vshrl.u32 %v1051, 7
        %v1053 = vsub.s32 0, %v1052
        %v1054 = vrot.slane %v419, %v1053
        %1055 = vrot.lane.b32.xlu0 %v1054, 96
        %v1056 = vpop.permute.xlu0 %1055
        %v1057 = vsel %vm426, %v1056, 0
        %v1060 = vsel %vm426, %v334, 0
        %v1063 = vsel %vm426, %v335, 0
        %v1066 = vsel %vm426, %v336, 0
        %v1069 = vsel %vm426, %v337, 0
        %1071 = vmatprep.subr.mxu0 0.0
        %1072 = vmatpush1.xpose.msra.mxu0 %v1060
        %1073 = vmatprep.subr.mxu0 0.0
        %1074 = vmatpush1.xpose.msra.mxu0 %v1063
        %1075 = vmatprep.subr.mxu0 0.0
        %1076 = vmatpush1.xpose.msra.mxu0 %v1066
        %1077 = vmatprep.subr.mxu0 0.0
        %1078 = vmatpush1.xpose.msra.mxu0 %v1069
        %1079 = vmatprep.subr.mxu0 0.0
        %1080 = vmatpush1.xpose.msra.mxu0 0.0
        %1081 = vmatprep.subr.mxu0 0.0
        %1082 = vmatpush1.xpose.msra.mxu0 0.0
        %1083 = vmatprep.subr.mxu0 0.0
        %1084 = vmatpush1.xpose.msra.mxu0 0.0
        %1085 = vmatprep.subr.mxu0 0.0
        %1086 = vmatpush1.xpose.msra.mxu0 0.0
        %1087 = vmatprep.subr.mxu0 0.0
        %1088 = vmatpush1.xpose.msra.mxu0 0.0
        %1089 = vmatprep.subr.mxu0 0.0
        %1090 = vmatpush1.xpose.msra.mxu0 0.0
        %1091 = vmatprep.subr.mxu0 0.0
        %1092 = vmatpush1.xpose.msra.mxu0 0.0
        %1093 = vmatprep.subr.mxu0 0.0
        %1094 = vmatpush1.xpose.msra.mxu0 0.0
        %1095 = vmatprep.subr.mxu0 0.0
        %1096 = vmatpush1.xpose.msra.mxu0 0.0
        %1097 = vmatprep.subr.mxu0 0.0
        %1098 = vmatpush1.xpose.msra.mxu0 0.0
        %1099 = vmatprep.subr.mxu0 0.0
        %1100 = vmatpush1.xpose.msra.mxu0 0.0
        %1101 = vmatprep.subr.mxu0 0.0
        %1102 = vmatpush1.xpose.msra.mxu0 0.0
        %1103 = vmatprep.subr.mxu0 0.0
        %1104 = vmatpush1.xpose.msra.mxu0 0.0
        %1105 = vmatprep.subr.mxu0 0.0
        %1106 = vmatpush1.xpose.msra.mxu0 0.0
        %1107 = vmatprep.subr.mxu0 0.0
        %1108 = vmatpush1.xpose.msra.mxu0 0.0
        %1109 = vmatprep.subr.mxu0 0.0
        %1110 = vmatpush1.xpose.msra.mxu0 0.0
        %1111 = vmatprep.subr.mxu0 0.0
        %1112 = vmatpush1.xpose.msra.mxu0 0.0
        %1113 = vmatprep.subr.mxu0 0.0
        %1114 = vmatpush1.xpose.msra.mxu0 0.0
        %1115 = vmatprep.subr.mxu0 0.0
        %1116 = vmatpush1.xpose.msra.mxu0 0.0
        %1117 = vmatprep.subr.mxu0 0.0
        %1118 = vmatpush1.xpose.msra.mxu0 0.0
        %1119 = vmatprep.subr.mxu0 0.0
        %1120 = vmatpush1.xpose.msra.mxu0 0.0
        %1121 = vmatprep.subr.mxu0 0.0
        %1122 = vmatpush1.xpose.msra.mxu0 0.0
        %1123 = vmatprep.subr.mxu0 0.0
        %1124 = vmatpush1.xpose.msra.mxu0 0.0
        %1125 = vmatprep.subr.mxu0 0.0
        %1126 = vmatpush1.xpose.msra.mxu0 0.0
        %1127 = vmatprep.subr.mxu0 0.0
        %1128 = vmatpush1.xpose.msra.mxu0 0.0
        %1129 = vmatprep.subr.mxu0 0.0
        %1130 = vmatpush1.xpose.msra.mxu0 0.0
        %1131 = vmatprep.subr.mxu0 0.0
        %1132 = vmatpush1.xpose.msra.mxu0 0.0
        %1133 = vmatprep.subr.mxu0 0.0
        %1134 = vmatpush1.xpose.msra.mxu0 0.0
        %1135 = vmatprep.mubr.f32.mxu0 0.0
        %1136 = vmatmul.mubr.f32.gmra.mrb[0].mxu0 %v1057
        %v1137 = vpop.f32.mrb[0].mxu0
        %v1138 = vadd.f32 0.0, %v1137
        %v1139 = vpop.f32.mrb[0].mxu0
        %1140 = vdwg.mxu0
        %1141 = vmatprep.subr.mxu0 0.0
        %1142 = vmatpush1.msra.mxu0 %v306
        %1143 = vmatprep.subr.mxu0 0.0
        %1144 = vmatpush1.msra.mxu0 %v307
        %1145 = vmatprep.subr.mxu0 0.0
        %1146 = vmatpush1.msra.mxu0 %v308
        %1147 = vmatprep.subr.mxu0 0.0
        %1148 = vmatpush1.msra.mxu0 %v309
        %1149 = vmatprep.subr.mxu0 0.0
        %1150 = vmatpush1.msra.mxu0 0.0
        %1151 = vmatprep.subr.mxu0 0.0
        %1152 = vmatpush1.msra.mxu0 0.0
        %1153 = vmatprep.subr.mxu0 0.0
        %1154 = vmatpush1.msra.mxu0 0.0
        %1155 = vmatprep.subr.mxu0 0.0
        %1156 = vmatpush1.msra.mxu0 0.0
        %1157 = vmatprep.subr.mxu0 0.0
        %1158 = vmatpush1.msra.mxu0 0.0
        %1159 = vmatprep.subr.mxu0 0.0
        %1160 = vmatpush1.msra.mxu0 0.0
        %1161 = vmatprep.subr.mxu0 0.0
        %1162 = vmatpush1.msra.mxu0 0.0
        %1163 = vmatprep.subr.mxu0 0.0
        %1164 = vmatpush1.msra.mxu0 0.0
        %1165 = vmatprep.subr.mxu0 0.0
        %1166 = vmatpush1.msra.mxu0 0.0
        %1167 = vmatprep.subr.mxu0 0.0
        %1168 = vmatpush1.msra.mxu0 0.0
        %1169 = vmatprep.subr.mxu0 0.0
        %1170 = vmatpush1.msra.mxu0 0.0
        %1171 = vmatprep.subr.mxu0 0.0
        %1172 = vmatpush1.msra.mxu0 0.0
        %1173 = vmatprep.subr.mxu0 0.0
        %1174 = vmatpush1.msra.mxu0 0.0
        %1175 = vmatprep.subr.mxu0 0.0
        %1176 = vmatpush1.msra.mxu0 0.0
        %1177 = vmatprep.subr.mxu0 0.0
        %1178 = vmatpush1.msra.mxu0 0.0
        %1179 = vmatprep.subr.mxu0 0.0
        %1180 = vmatpush1.msra.mxu0 0.0
        %1181 = vmatprep.subr.mxu0 0.0
        %1182 = vmatpush1.msra.mxu0 0.0
        %1183 = vmatprep.subr.mxu0 0.0
        %1184 = vmatpush1.msra.mxu0 0.0
        %1185 = vmatprep.subr.mxu0 0.0
        %1186 = vmatpush1.msra.mxu0 0.0
        %1187 = vmatprep.subr.mxu0 0.0
        %1188 = vmatpush1.msra.mxu0 0.0
        %1189 = vmatprep.subr.mxu0 0.0
        %1190 = vmatpush1.msra.mxu0 0.0
        %1191 = vmatprep.subr.mxu0 0.0
        %1192 = vmatpush1.msra.mxu0 0.0
        %1193 = vmatprep.subr.mxu0 0.0
        %1194 = vmatpush1.msra.mxu0 0.0
        %1195 = vmatprep.subr.mxu0 0.0
        %1196 = vmatpush1.msra.mxu0 0.0
        %1197 = vmatprep.subr.mxu0 0.0
        %1198 = vmatpush1.msra.mxu0 0.0
        %1199 = vmatprep.subr.mxu0 0.0
        %1200 = vmatpush1.msra.mxu0 0.0
        %1201 = vmatprep.subr.mxu0 0.0
        %1202 = vmatpush1.msra.mxu0 0.0
        %1203 = vmatprep.subr.mxu0 0.0
        %1204 = vmatpush1.msra.mxu0 0.0
        %1205 = vmatprep.mubr.f32.mxu0 0.0
        %1206 = vmatmul.mubr.f32.gmra.mrb[0].mxu0 %v427
        %v1207 = vpop.f32.mrb[0].mxu0
        %v1208 = vadd.f32 0.0, %v1207
        %v1209 = vpop.f32.mrb[0].mxu0
        %1210 = vdwg.mxu0
        %1211 = vmatprep.subr.mxu0 0.0
        %1212 = vmatpush1.msra.mxu0 %v310
        %1213 = vmatprep.subr.mxu0 0.0
        %1214 = vmatpush1.msra.mxu0 %v311
        %1215 = vmatprep.subr.mxu0 0.0
        %1216 = vmatpush1.msra.mxu0 %v312
        %1217 = vmatprep.subr.mxu0 0.0
        %1218 = vmatpush1.msra.mxu0 %v313
        %1219 = vmatprep.subr.mxu0 0.0
        %1220 = vmatpush1.msra.mxu0 0.0
        %1221 = vmatprep.subr.mxu0 0.0
        %1222 = vmatpush1.msra.mxu0 0.0
        %1223 = vmatprep.subr.mxu0 0.0
        %1224 = vmatpush1.msra.mxu0 0.0
        %1225 = vmatprep.subr.mxu0 0.0
        %1226 = vmatpush1.msra.mxu0 0.0
        %1227 = vmatprep.subr.mxu0 0.0
        %1228 = vmatpush1.msra.mxu0 0.0
        %1229 = vmatprep.subr.mxu0 0.0
        %1230 = vmatpush1.msra.mxu0 0.0
        %1231 = vmatprep.subr.mxu0 0.0
        %1232 = vmatpush1.msra.mxu0 0.0
        %1233 = vmatprep.subr.mxu0 0.0
        %1234 = vmatpush1.msra.mxu0 0.0
        %1235 = vmatprep.subr.mxu0 0.0
        %1236 = vmatpush1.msra.mxu0 0.0
        %1237 = vmatprep.subr.mxu0 0.0
        %1238 = vmatpush1.msra.mxu0 0.0
        %1239 = vmatprep.subr.mxu0 0.0
        %1240 = vmatpush1.msra.mxu0 0.0
        %1241 = vmatprep.subr.mxu0 0.0
        %1242 = vmatpush1.msra.mxu0 0.0
        %1243 = vmatprep.subr.mxu0 0.0
        %1244 = vmatpush1.msra.mxu0 0.0
        %1245 = vmatprep.subr.mxu0 0.0
        %1246 = vmatpush1.msra.mxu0 0.0
        %1247 = vmatprep.subr.mxu0 0.0
        %1248 = vmatpush1.msra.mxu0 0.0
        %1249 = vmatprep.subr.mxu0 0.0
        %1250 = vmatpush1.msra.mxu0 0.0
        %1251 = vmatprep.subr.mxu0 0.0
        %1252 = vmatpush1.msra.mxu0 0.0
        %1253 = vmatprep.subr.mxu0 0.0
        %1254 = vmatpush1.msra.mxu0 0.0
        %1255 = vmatprep.subr.mxu0 0.0
        %1256 = vmatpush1.msra.mxu0 0.0
        %1257 = vmatprep.subr.mxu0 0.0
        %1258 = vmatpush1.msra.mxu0 0.0
        %1259 = vmatprep.subr.mxu0 0.0
        %1260 = vmatpush1.msra.mxu0 0.0
        %1261 = vmatprep.subr.mxu0 0.0
        %1262 = vmatpush1.msra.mxu0 0.0
        %1263 = vmatprep.subr.mxu0 0.0
        %1264 = vmatpush1.msra.mxu0 0.0
        %1265 = vmatprep.subr.mxu0 0.0
        %1266 = vmatpush1.msra.mxu0 0.0
        %1267 = vmatprep.subr.mxu0 0.0
        %1268 = vmatpush1.msra.mxu0 0.0
        %1269 = vmatprep.subr.mxu0 0.0
        %1270 = vmatpush1.msra.mxu0 0.0
        %1271 = vmatprep.subr.mxu0 0.0
        %1272 = vmatpush1.msra.mxu0 0.0
        %1273 = vmatprep.subr.mxu0 0.0
        %1274 = vmatpush1.msra.mxu0 0.0
        %1275 = vmatprep.mubr.f32.mxu0 0.0
        %1276 = vmatmul.mubr.f32.gmra.mrb[0].mxu0 %v517
        %v1277 = vpop.f32.mrb[0].mxu0
        %v1278 = vadd.f32 0.0, %v1277
        %v1279 = vpop.f32.mrb[0].mxu0
        %1280 = vdwg.mxu0
        %1281 = vmatprep.subr.mxu0 0.0
        %1282 = vmatpush1.msra.mxu0 %v314
        %1283 = vmatprep.subr.mxu0 0.0
        %1284 = vmatpush1.msra.mxu0 %v315
        %1285 = vmatprep.subr.mxu0 0.0
        %1286 = vmatpush1.msra.mxu0 %v316
        %1287 = vmatprep.subr.mxu0 0.0
        %1288 = vmatpush1.msra.mxu0 %v317
        %1289 = vmatprep.subr.mxu0 0.0
        %1290 = vmatpush1.msra.mxu0 0.0
        %1291 = vmatprep.subr.mxu0 0.0
        %1292 = vmatpush1.msra.mxu0 0.0
        %1293 = vmatprep.subr.mxu0 0.0
        %1294 = vmatpush1.msra.mxu0 0.0
        %1295 = vmatprep.subr.mxu0 0.0
        %1296 = vmatpush1.msra.mxu0 0.0
        %1297 = vmatprep.subr.mxu0 0.0
        %1298 = vmatpush1.msra.mxu0 0.0
        %1299 = vmatprep.subr.mxu0 0.0
        %1300 = vmatpush1.msra.mxu0 0.0
        %1301 = vmatprep.subr.mxu0 0.0
        %1302 = vmatpush1.msra.mxu0 0.0
        %1303 = vmatprep.subr.mxu0 0.0
        %1304 = vmatpush1.msra.mxu0 0.0
        %1305 = vmatprep.subr.mxu0 0.0
        %1306 = vmatpush1.msra.mxu0 0.0
        %1307 = vmatprep.subr.mxu0 0.0
        %1308 = vmatpush1.msra.mxu0 0.0
        %1309 = vmatprep.subr.mxu0 0.0
        %1310 = vmatpush1.msra.mxu0 0.0
        %1311 = vmatprep.subr.mxu0 0.0
        %1312 = vmatpush1.msra.mxu0 0.0
        %1313 = vmatprep.subr.mxu0 0.0
        %1314 = vmatpush1.msra.mxu0 0.0
        %1315 = vmatprep.subr.mxu0 0.0
        %1316 = vmatpush1.msra.mxu0 0.0
        %1317 = vmatprep.subr.mxu0 0.0
        %1318 = vmatpush1.msra.mxu0 0.0
        %1319 = vmatprep.subr.mxu0 0.0
        %1320 = vmatpush1.msra.mxu0 0.0
        %1321 = vmatprep.subr.mxu0 0.0
        %1322 = vmatpush1.msra.mxu0 0.0
        %1323 = vmatprep.subr.mxu0 0.0
        %1324 = vmatpush1.msra.mxu0 0.0
        %1325 = vmatprep.subr.mxu0 0.0
        %1326 = vmatpush1.msra.mxu0 0.0
        %1327 = vmatprep.subr.mxu0 0.0
        %1328 = vmatpush1.msra.mxu0 0.0
        %1329 = vmatprep.subr.mxu0 0.0
        %1330 = vmatpush1.msra.mxu0 0.0
        %1331 = vmatprep.subr.mxu0 0.0
        %1332 = vmatpush1.msra.mxu0 0.0
        %1333 = vmatprep.subr.mxu0 0.0
        %1334 = vmatpush1.msra.mxu0 0.0
        %1335 = vmatprep.subr.mxu0 0.0
        %1336 = vmatpush1.msra.mxu0 0.0
        %1337 = vmatprep.subr.mxu0 0.0
        %1338 = vmatpush1.msra.mxu0 0.0
        %1339 = vmatprep.subr.mxu0 0.0
        %1340 = vmatpush1.msra.mxu0 0.0
        %1341 = vmatprep.subr.mxu0 0.0
        %1342 = vmatpush1.msra.mxu0 0.0
        %1343 = vmatprep.subr.mxu0 0.0
        %1344 = vmatpush1.msra.mxu0 0.0
        %1345 = vmatprep.mubr.f32.mxu0 0.0
        %1346 = vmatmul.mubr.f32.gmra.mrb[0].mxu0 %v607
        %v1347 = vpop.f32.mrb[0].mxu0
        %v1348 = vadd.f32 0.0, %v1347
        %v1349 = vpop.f32.mrb[0].mxu0
        %1350 = vdwg.mxu0
        %1351 = vmatprep.subr.mxu0 0.0
        %1352 = vmatpush1.msra.mxu0 %v318
        %1353 = vmatprep.subr.mxu0 0.0
        %1354 = vmatpush1.msra.mxu0 %v319
        %1355 = vmatprep.subr.mxu0 0.0
        %1356 = vmatpush1.msra.mxu0 %v320
        %1357 = vmatprep.subr.mxu0 0.0
        %1358 = vmatpush1.msra.mxu0 %v321
        %1359 = vmatprep.subr.mxu0 0.0
        %1360 = vmatpush1.msra.mxu0 0.0
        %1361 = vmatprep.subr.mxu0 0.0
        %1362 = vmatpush1.msra.mxu0 0.0
        %1363 = vmatprep.subr.mxu0 0.0
        %1364 = vmatpush1.msra.mxu0 0.0
        %1365 = vmatprep.subr.mxu0 0.0
        %1366 = vmatpush1.msra.mxu0 0.0
        %1367 = vmatprep.subr.mxu0 0.0
        %1368 = vmatpush1.msra.mxu0 0.0
        %1369 = vmatprep.subr.mxu0 0.0
        %1370 = vmatpush1.msra.mxu0 0.0
        %1371 = vmatprep.subr.mxu0 0.0
        %1372 = vmatpush1.msra.mxu0 0.0
        %1373 = vmatprep.subr.mxu0 0.0
        %1374 = vmatpush1.msra.mxu0 0.0
        %1375 = vmatprep.subr.mxu0 0.0
        %1376 = vmatpush1.msra.mxu0 0.0
        %1377 = vmatprep.subr.mxu0 0.0
        %1378 = vmatpush1.msra.mxu0 0.0
        %1379 = vmatprep.subr.mxu0 0.0
        %1380 = vmatpush1.msra.mxu0 0.0
        %1381 = vmatprep.subr.mxu0 0.0
        %1382 = vmatpush1.msra.mxu0 0.0
        %1383 = vmatprep.subr.mxu0 0.0
        %1384 = vmatpush1.msra.mxu0 0.0
        %1385 = vmatprep.subr.mxu0 0.0
        %1386 = vmatpush1.msra.mxu0 0.0
        %1387 = vmatprep.subr.mxu0 0.0
        %1388 = vmatpush1.msra.mxu0 0.0
        %1389 = vmatprep.subr.mxu0 0.0
        %1390 = vmatpush1.msra.mxu0 0.0
        %1391 = vmatprep.subr.mxu0 0.0
        %1392 = vmatpush1.msra.mxu0 0.0
        %1393 = vmatprep.subr.mxu0 0.0
        %1394 = vmatpush1.msra.mxu0 0.0
        %1395 = vmatprep.subr.mxu0 0.0
        %1396 = vmatpush1.msra.mxu0 0.0
        %1397 = vmatprep.subr.mxu0 0.0
        %1398 = vmatpush1.msra.mxu0 0.0
        %1399 = vmatprep.subr.mxu0 0.0
        %1400 = vmatpush1.msra.mxu0 0.0
        %1401 = vmatprep.subr.mxu0 0.0
        %1402 = vmatpush1.msra.mxu0 0.0
        %1403 = vmatprep.subr.mxu0 0.0
        %1404 = vmatpush1.msra.mxu0 0.0
        %1405 = vmatprep.subr.mxu0 0.0
        %1406 = vmatpush1.msra.mxu0 0.0
        %1407 = vmatprep.subr.mxu0 0.0
        %1408 = vmatpush1.msra.mxu0 0.0
        %1409 = vmatprep.subr.mxu0 0.0
        %1410 = vmatpush1.msra.mxu0 0.0
        %1411 = vmatprep.subr.mxu0 0.0
        %1412 = vmatpush1.msra.mxu0 0.0
        %1413 = vmatprep.subr.mxu0 0.0
        %1414 = vmatpush1.msra.mxu0 0.0
        %1415 = vmatprep.mubr.f32.mxu0 0.0
        %1416 = vmatmul.mubr.f32.gmra.mrb[0].mxu0 %v697
        %v1417 = vpop.f32.mrb[0].mxu0
        %v1418 = vadd.f32 0.0, %v1417
        %v1419 = vpop.f32.mrb[0].mxu0
        %1420 = vdwg.mxu0
        %1421 = vmatprep.subr.mxu0 0.0
        %1422 = vmatpush1.msra.mxu0 %v322
        %1423 = vmatprep.subr.mxu0 0.0
        %1424 = vmatpush1.msra.mxu0 %v323
        %1425 = vmatprep.subr.mxu0 0.0
        %1426 = vmatpush1.msra.mxu0 %v324
        %1427 = vmatprep.subr.mxu0 0.0
        %1428 = vmatpush1.msra.mxu0 %v325
        %1429 = vmatprep.subr.mxu0 0.0
        %1430 = vmatpush1.msra.mxu0 0.0
        %1431 = vmatprep.subr.mxu0 0.0
        %1432 = vmatpush1.msra.mxu0 0.0
        %1433 = vmatprep.subr.mxu0 0.0
        %1434 = vmatpush1.msra.mxu0 0.0
        %1435 = vmatprep.subr.mxu0 0.0
        %1436 = vmatpush1.msra.mxu0 0.0
        %1437 = vmatprep.subr.mxu0 0.0
        %1438 = vmatpush1.msra.mxu0 0.0
        %1439 = vmatprep.subr.mxu0 0.0
        %1440 = vmatpush1.msra.mxu0 0.0
        %1441 = vmatprep.subr.mxu0 0.0
        %1442 = vmatpush1.msra.mxu0 0.0
        %1443 = vmatprep.subr.mxu0 0.0
        %1444 = vmatpush1.msra.mxu0 0.0
        %1445 = vmatprep.subr.mxu0 0.0
        %1446 = vmatpush1.msra.mxu0 0.0
        %1447 = vmatprep.subr.mxu0 0.0
        %1448 = vmatpush1.msra.mxu0 0.0
        %1449 = vmatprep.subr.mxu0 0.0
        %1450 = vmatpush1.msra.mxu0 0.0
        %1451 = vmatprep.subr.mxu0 0.0
        %1452 = vmatpush1.msra.mxu0 0.0
        %1453 = vmatprep.subr.mxu0 0.0
        %1454 = vmatpush1.msra.mxu0 0.0
        %1455 = vmatprep.subr.mxu0 0.0
        %1456 = vmatpush1.msra.mxu0 0.0
        %1457 = vmatprep.subr.mxu0 0.0
        %1458 = vmatpush1.msra.mxu0 0.0
        %1459 = vmatprep.subr.mxu0 0.0
        %1460 = vmatpush1.msra.mxu0 0.0
        %1461 = vmatprep.subr.mxu0 0.0
        %1462 = vmatpush1.msra.mxu0 0.0
        %1463 = vmatprep.subr.mxu0 0.0
        %1464 = vmatpush1.msra.mxu0 0.0
        %1465 = vmatprep.subr.mxu0 0.0
        %1466 = vmatpush1.msra.mxu0 0.0
        %1467 = vmatprep.subr.mxu0 0.0
        %1468 = vmatpush1.msra.mxu0 0.0
        %1469 = vmatprep.subr.mxu0 0.0
        %1470 = vmatpush1.msra.mxu0 0.0
        %1471 = vmatprep.subr.mxu0 0.0
        %1472 = vmatpush1.msra.mxu0 0.0
        %1473 = vmatprep.subr.mxu0 0.0
        %1474 = vmatpush1.msra.mxu0 0.0
        %1475 = vmatprep.subr.mxu0 0.0
        %1476 = vmatpush1.msra.mxu0 0.0
        %1477 = vmatprep.subr.mxu0 0.0
        %1478 = vmatpush1.msra.mxu0 0.0
        %1479 = vmatprep.subr.mxu0 0.0
        %1480 = vmatpush1.msra.mxu0 0.0
        %1481 = vmatprep.subr.mxu0 0.0
        %1482 = vmatpush1.msra.mxu0 0.0
        %1483 = vmatprep.subr.mxu0 0.0
        %1484 = vmatpush1.msra.mxu0 0.0
        %1485 = vmatprep.mubr.f32.mxu0 0.0
        %1486 = vmatmul.mubr.f32.gmra.mrb[0].mxu0 %v787
        %v1487 = vpop.f32.mrb[0].mxu0
        %v1488 = vadd.f32 0.0, %v1487
        %v1489 = vpop.f32.mrb[0].mxu0
        %1490 = vdwg.mxu0
        %1491 = vmatprep.subr.mxu0 0.0
        %1492 = vmatpush1.msra.mxu0 %v326
        %1493 = vmatprep.subr.mxu0 0.0
        %1494 = vmatpush1.msra.mxu0 %v327
        %1495 = vmatprep.subr.mxu0 0.0
        %1496 = vmatpush1.msra.mxu0 %v328
        %1497 = vmatprep.subr.mxu0 0.0
        %1498 = vmatpush1.msra.mxu0 %v329
        %1499 = vmatprep.subr.mxu0 0.0
        %1500 = vmatpush1.msra.mxu0 0.0
        %1501 = vmatprep.subr.mxu0 0.0
        %1502 = vmatpush1.msra.mxu0 0.0
        %1503 = vmatprep.subr.mxu0 0.0
        %1504 = vmatpush1.msra.mxu0 0.0
        %1505 = vmatprep.subr.mxu0 0.0
        %1506 = vmatpush1.msra.mxu0 0.0
        %1507 = vmatprep.subr.mxu0 0.0
        %1508 = vmatpush1.msra.mxu0 0.0
        %1509 = vmatprep.subr.mxu0 0.0
        %1510 = vmatpush1.msra.mxu0 0.0
        %1511 = vmatprep.subr.mxu0 0.0
        %1512 = vmatpush1.msra.mxu0 0.0
        %1513 = vmatprep.subr.mxu0 0.0
        %1514 = vmatpush1.msra.mxu0 0.0
        %1515 = vmatprep.subr.mxu0 0.0
        %1516 = vmatpush1.msra.mxu0 0.0
        %1517 = vmatprep.subr.mxu0 0.0
        %1518 = vmatpush1.msra.mxu0 0.0
        %1519 = vmatprep.subr.mxu0 0.0
        %1520 = vmatpush1.msra.mxu0 0.0
        %1521 = vmatprep.subr.mxu0 0.0
        %1522 = vmatpush1.msra.mxu0 0.0
        %1523 = vmatprep.subr.mxu0 0.0
        %1524 = vmatpush1.msra.mxu0 0.0
        %1525 = vmatprep.subr.mxu0 0.0
        %1526 = vmatpush1.msra.mxu0 0.0
        %1527 = vmatprep.subr.mxu0 0.0
        %1528 = vmatpush1.msra.mxu0 0.0
        %1529 = vmatprep.subr.mxu0 0.0
        %1530 = vmatpush1.msra.mxu0 0.0
        %1531 = vmatprep.subr.mxu0 0.0
        %1532 = vmatpush1.msra.mxu0 0.0
        %1533 = vmatprep.subr.mxu0 0.0
        %1534 = vmatpush1.msra.mxu0 0.0
        %1535 = vmatprep.subr.mxu0 0.0
        %1536 = vmatpush1.msra.mxu0 0.0
        %1537 = vmatprep.subr.mxu0 0.0
        %1538 = vmatpush1.msra.mxu0 0.0
        %1539 = vmatprep.subr.mxu0 0.0
        %1540 = vmatpush1.msra.mxu0 0.0
        %1541 = vmatprep.subr.mxu0 0.0
        %1542 = vmatpush1.msra.mxu0 0.0
        %1543 = vmatprep.subr.mxu0 0.0
        %1544 = vmatpush1.msra.mxu0 0.0
        %1545 = vmatprep.subr.mxu0 0.0
        %1546 = vmatpush1.msra.mxu0 0.0
        %1547 = vmatprep.subr.mxu0 0.0
        %1548 = vmatpush1.msra.mxu0 0.0
        %1549 = vmatprep.subr.mxu0 0.0
        %1550 = vmatpush1.msra.mxu0 0.0
        %1551 = vmatprep.subr.mxu0 0.0
        %1552 = vmatpush1.msra.mxu0 0.0
        %1553 = vmatprep.subr.mxu0 0.0
        %1554 = vmatpush1.msra.mxu0 0.0
        %1555 = vmatprep.mubr.f32.mxu0 0.0
        %1556 = vmatmul.mubr.f32.gmra.mrb[0].mxu0 %v877
        %v1557 = vpop.f32.mrb[0].mxu0
        %v1558 = vadd.f32 0.0, %v1557
        %v1559 = vpop.f32.mrb[0].mxu0
        %1560 = vdwg.mxu0
        %1561 = vmatprep.subr.mxu0 0.0
        %1562 = vmatpush1.msra.mxu0 %v330
        %1563 = vmatprep.subr.mxu0 0.0
        %1564 = vmatpush1.msra.mxu0 %v331
        %1565 = vmatprep.subr.mxu0 0.0
        %1566 = vmatpush1.msra.mxu0 %v332
        %1567 = vmatprep.subr.mxu0 0.0
        %1568 = vmatpush1.msra.mxu0 %v333
        %1569 = vmatprep.subr.mxu0 0.0
        %1570 = vmatpush1.msra.mxu0 0.0
        %1571 = vmatprep.subr.mxu0 0.0
        %1572 = vmatpush1.msra.mxu0 0.0
        %1573 = vmatprep.subr.mxu0 0.0
        %1574 = vmatpush1.msra.mxu0 0.0
        %1575 = vmatprep.subr.mxu0 0.0
        %1576 = vmatpush1.msra.mxu0 0.0
        %1577 = vmatprep.subr.mxu0 0.0
        %1578 = vmatpush1.msra.mxu0 0.0
        %1579 = vmatprep.subr.mxu0 0.0
        %1580 = vmatpush1.msra.mxu0 0.0
        %1581 = vmatprep.subr.mxu0 0.0
        %1582 = vmatpush1.msra.mxu0 0.0
        %1583 = vmatprep.subr.mxu0 0.0
        %1584 = vmatpush1.msra.mxu0 0.0
        %1585 = vmatprep.subr.mxu0 0.0
        %1586 = vmatpush1.msra.mxu0 0.0
        %1587 = vmatprep.subr.mxu0 0.0
        %1588 = vmatpush1.msra.mxu0 0.0
        %1589 = vmatprep.subr.mxu0 0.0
        %1590 = vmatpush1.msra.mxu0 0.0
        %1591 = vmatprep.subr.mxu0 0.0
        %1592 = vmatpush1.msra.mxu0 0.0
        %1593 = vmatprep.subr.mxu0 0.0
        %1594 = vmatpush1.msra.mxu0 0.0
        %1595 = vmatprep.subr.mxu0 0.0
        %1596 = vmatpush1.msra.mxu0 0.0
        %1597 = vmatprep.subr.mxu0 0.0
        %1598 = vmatpush1.msra.mxu0 0.0
        %1599 = vmatprep.subr.mxu0 0.0
        %1600 = vmatpush1.msra.mxu0 0.0
        %1601 = vmatprep.subr.mxu0 0.0
        %1602 = vmatpush1.msra.mxu0 0.0
        %1603 = vmatprep.subr.mxu0 0.0
        %1604 = vmatpush1.msra.mxu0 0.0
        %1605 = vmatprep.subr.mxu0 0.0
        %1606 = vmatpush1.msra.mxu0 0.0
        %1607 = vmatprep.subr.mxu0 0.0
        %1608 = vmatpush1.msra.mxu0 0.0
        %1609 = vmatprep.subr.mxu0 0.0
        %1610 = vmatpush1.msra.mxu0 0.0
        %1611 = vmatprep.subr.mxu0 0.0
        %1612 = vmatpush1.msra.mxu0 0.0
        %1613 = vmatprep.subr.mxu0 0.0
        %1614 = vmatpush1.msra.mxu0 0.0
        %1615 = vmatprep.subr.mxu0 0.0
        %1616 = vmatpush1.msra.mxu0 0.0
        %1617 = vmatprep.subr.mxu0 0.0
        %1618 = vmatpush1.msra.mxu0 0.0
        %1619 = vmatprep.subr.mxu0 0.0
        %1620 = vmatpush1.msra.mxu0 0.0
        %1621 = vmatprep.subr.mxu0 0.0
        %1622 = vmatpush1.msra.mxu0 0.0
        %1623 = vmatprep.subr.mxu0 0.0
        %1624 = vmatpush1.msra.mxu0 0.0
        %1625 = vmatprep.mubr.f32.mxu0 0.0
        %1626 = vmatmul.mubr.f32.gmra.mrb[0].mxu0 %v967
        %v1627 = vpop.f32.mrb[0].mxu0
        %v1628 = vadd.f32 0.0, %v1627
        %v1629 = vpop.f32.mrb[0].mxu0
        %1630 = vdwg.mxu0
        %1631 = vmatprep.subr.mxu0 0.0
        %1632 = vmatpush1.msra.mxu0 %v334
        %1633 = vmatprep.subr.mxu0 0.0
        %1634 = vmatpush1.msra.mxu0 %v335
        %1635 = vmatprep.subr.mxu0 0.0
        %1636 = vmatpush1.msra.mxu0 %v336
        %1637 = vmatprep.subr.mxu0 0.0
        %1638 = vmatpush1.msra.mxu0 %v337
        %1639 = vmatprep.subr.mxu0 0.0
        %1640 = vmatpush1.msra.mxu0 0.0
        %1641 = vmatprep.subr.mxu0 0.0
        %1642 = vmatpush1.msra.mxu0 0.0
        %1643 = vmatprep.subr.mxu0 0.0
        %1644 = vmatpush1.msra.mxu0 0.0
        %1645 = vmatprep.subr.mxu0 0.0
        %1646 = vmatpush1.msra.mxu0 0.0
        %1647 = vmatprep.subr.mxu0 0.0
        %1648 = vmatpush1.msra.mxu0 0.0
        %1649 = vmatprep.subr.mxu0 0.0
        %1650 = vmatpush1.msra.mxu0 0.0
        %1651 = vmatprep.subr.mxu0 0.0
        %1652 = vmatpush1.msra.mxu0 0.0
        %1653 = vmatprep.subr.mxu0 0.0
        %1654 = vmatpush1.msra.mxu0 0.0
        %1655 = vmatprep.subr.mxu0 0.0
        %1656 = vmatpush1.msra.mxu0 0.0
        %1657 = vmatprep.subr.mxu0 0.0
        %1658 = vmatpush1.msra.mxu0 0.0
        %1659 = vmatprep.subr.mxu0 0.0
        %1660 = vmatpush1.msra.mxu0 0.0
        %1661 = vmatprep.subr.mxu0 0.0
        %1662 = vmatpush1.msra.mxu0 0.0
        %1663 = vmatprep.subr.mxu0 0.0
        %1664 = vmatpush1.msra.mxu0 0.0
        %1665 = vmatprep.subr.mxu0 0.0
        %1666 = vmatpush1.msra.mxu0 0.0
        %1667 = vmatprep.subr.mxu0 0.0
        %1668 = vmatpush1.msra.mxu0 0.0
        %1669 = vmatprep.subr.mxu0 0.0
        %1670 = vmatpush1.msra.mxu0 0.0
        %1671 = vmatprep.subr.mxu0 0.0
        %1672 = vmatpush1.msra.mxu0 0.0
        %1673 = vmatprep.subr.mxu0 0.0
        %1674 = vmatpush1.msra.mxu0 0.0
        %1675 = vmatprep.subr.mxu0 0.0
        %1676 = vmatpush1.msra.mxu0 0.0
        %1677 = vmatprep.subr.mxu0 0.0
        %1678 = vmatpush1.msra.mxu0 0.0
        %1679 = vmatprep.subr.mxu0 0.0
        %1680 = vmatpush1.msra.mxu0 0.0
        %1681 = vmatprep.subr.mxu0 0.0
        %1682 = vmatpush1.msra.mxu0 0.0
        %1683 = vmatprep.subr.mxu0 0.0
        %1684 = vmatpush1.msra.mxu0 0.0
        %1685 = vmatprep.subr.mxu0 0.0
        %1686 = vmatpush1.msra.mxu0 0.0
        %1687 = vmatprep.subr.mxu0 0.0
        %1688 = vmatpush1.msra.mxu0 0.0
        %1689 = vmatprep.subr.mxu0 0.0
        %1690 = vmatpush1.msra.mxu0 0.0
        %1691 = vmatprep.subr.mxu0 0.0
        %1692 = vmatpush1.msra.mxu0 0.0
        %1693 = vmatprep.subr.mxu0 0.0
        %1694 = vmatpush1.msra.mxu0 0.0
        %1695 = vmatprep.mubr.f32.mxu0 0.0
        %1696 = vmatmul.mubr.f32.gmra.mrb[0].mxu0 %v1057
        %v1697 = vpop.f32.mrb[0].mxu0
        %v1698 = vadd.f32 0.0, %v1697
        %v1699 = vpop.f32.mrb[0].mxu0
        %1700 = vdwg.mxu0
        %v1701 = vmul.f32 %v338, %v338
        %v1702 = vmul.f32 %v339, %v339
        %v1703 = vmul.f32 %v340, %v340
        %v1704 = vmul.f32 %v341, %v341
        %v1705 = vmul.f32 %v342, %v342
        %v1706 = vmul.f32 %v343, %v343
        %v1707 = vmul.f32 %v344, %v344
        %v1708 = vmul.f32 %v345, %v345
        %v1709 = vmul.f32 %v346, %v346
        %v1710 = vmul.f32 %v347, %v347
        %v1711 = vmul.f32 %v348, %v348
        %v1712 = vmul.f32 %v349, %v349
        %v1713 = vmul.f32 %v350, %v350
        %v1714 = vmul.f32 %v351, %v351
        %v1715 = vmul.f32 %v352, %v352
        %v1716 = vmul.f32 %v353, %v353
        %v1717 = vmul.f32 %v354, %v354
        %v1718 = vmul.f32 %v355, %v355
        %v1719 = vmul.f32 %v356, %v356
        %v1720 = vmul.f32 %v357, %v357
        %v1721 = vmul.f32 %v358, %v358
        %v1722 = vmul.f32 %v359, %v359
        %v1723 = vmul.f32 %v360, %v360
        %v1724 = vmul.f32 %v361, %v361
        %v1725 = vmul.f32 %v362, %v362
        %v1726 = vmul.f32 %v363, %v363
        %v1727 = vmul.f32 %v364, %v364
        %v1728 = vmul.f32 %v365, %v365
        %v1729 = vmul.f32 %v366, %v366
        %v1730 = vmul.f32 %v367, %v367
        %v1731 = vmul.f32 %v368, %v368
        %v1732 = vmul.f32 %v369, %v369
        %v1733 = vsel %vm426, %v1701, 0.0
        %1734 = vadd.xlane.f32.xlu0 %v1733
        %v1735 = vpop.xlane.xlu0 %1734
        %v1736 = vsel %vm426, %v1702, 0.0
        %1737 = vadd.xlane.f32.xlu0 %v1736
        %v1738 = vpop.xlane.xlu0 %1737
        %v1739 = vsel %vm426, %v1703, 0.0
        %1740 = vadd.xlane.f32.xlu0 %v1739
        %v1741 = vpop.xlane.xlu0 %1740
        %v1742 = vsel %vm426, %v1704, 0.0
        %1743 = vadd.xlane.f32.xlu0 %v1742
        %v1744 = vpop.xlane.xlu0 %1743
        %v1745 = vsel %vm426, %v1705, 0.0
        %1746 = vadd.xlane.f32.xlu0 %v1745
        %v1747 = vpop.xlane.xlu0 %1746
        %v1748 = vsel %vm426, %v1706, 0.0
        %1749 = vadd.xlane.f32.xlu0 %v1748
        %v1750 = vpop.xlane.xlu0 %1749
        %v1751 = vsel %vm426, %v1707, 0.0
        %1752 = vadd.xlane.f32.xlu0 %v1751
        %v1753 = vpop.xlane.xlu0 %1752
        %v1754 = vsel %vm426, %v1708, 0.0
        %1755 = vadd.xlane.f32.xlu0 %v1754
        %v1756 = vpop.xlane.xlu0 %1755
        %v1757 = vsel %vm426, %v1709, 0.0
        %1758 = vadd.xlane.f32.xlu0 %v1757
        %v1759 = vpop.xlane.xlu0 %1758
        %v1760 = vsel %vm426, %v1710, 0.0
        %1761 = vadd.xlane.f32.xlu0 %v1760
        %v1762 = vpop.xlane.xlu0 %1761
        %v1763 = vsel %vm426, %v1711, 0.0
        %1764 = vadd.xlane.f32.xlu0 %v1763
        %v1765 = vpop.xlane.xlu0 %1764
        %v1766 = vsel %vm426, %v1712, 0.0
        %1767 = vadd.xlane.f32.xlu0 %v1766
        %v1768 = vpop.xlane.xlu0 %1767
        %v1769 = vsel %vm426, %v1713, 0.0
        %1770 = vadd.xlane.f32.xlu0 %v1769
        %v1771 = vpop.xlane.xlu0 %1770
        %v1772 = vsel %vm426, %v1714, 0.0
        %1773 = vadd.xlane.f32.xlu0 %v1772
        %v1774 = vpop.xlane.xlu0 %1773
        %v1775 = vsel %vm426, %v1715, 0.0
        %1776 = vadd.xlane.f32.xlu0 %v1775
        %v1777 = vpop.xlane.xlu0 %1776
        %v1778 = vsel %vm426, %v1716, 0.0
        %1779 = vadd.xlane.f32.xlu0 %v1778
        %v1780 = vpop.xlane.xlu0 %1779
        %v1781 = vsel %vm426, %v1717, 0.0
        %1782 = vadd.xlane.f32.xlu0 %v1781
        %v1783 = vpop.xlane.xlu0 %1782
        %v1784 = vsel %vm426, %v1718, 0.0
        %1785 = vadd.xlane.f32.xlu0 %v1784
        %v1786 = vpop.xlane.xlu0 %1785
        %v1787 = vsel %vm426, %v1719, 0.0
        %1788 = vadd.xlane.f32.xlu0 %v1787
        %v1789 = vpop.xlane.xlu0 %1788
        %v1790 = vsel %vm426, %v1720, 0.0
        %1791 = vadd.xlane.f32.xlu0 %v1790
        %v1792 = vpop.xlane.xlu0 %1791
        %v1793 = vsel %vm426, %v1721, 0.0
        %1794 = vadd.xlane.f32.xlu0 %v1793
        %v1795 = vpop.xlane.xlu0 %1794
        %v1796 = vsel %vm426, %v1722, 0.0
        %1797 = vadd.xlane.f32.xlu0 %v1796
        %v1798 = vpop.xlane.xlu0 %1797
        %v1799 = vsel %vm426, %v1723, 0.0
        %1800 = vadd.xlane.f32.xlu0 %v1799
        %v1801 = vpop.xlane.xlu0 %1800
        %v1802 = vsel %vm426, %v1724, 0.0
        %1803 = vadd.xlane.f32.xlu0 %v1802
        %v1804 = vpop.xlane.xlu0 %1803
        %v1805 = vsel %vm426, %v1725, 0.0
        %1806 = vadd.xlane.f32.xlu0 %v1805
        %v1807 = vpop.xlane.xlu0 %1806
        %v1808 = vsel %vm426, %v1726, 0.0
        %1809 = vadd.xlane.f32.xlu0 %v1808
        %v1810 = vpop.xlane.xlu0 %1809
        %v1811 = vsel %vm426, %v1727, 0.0
        %1812 = vadd.xlane.f32.xlu0 %v1811
        %v1813 = vpop.xlane.xlu0 %1812
        %v1814 = vsel %vm426, %v1728, 0.0
        %1815 = vadd.xlane.f32.xlu0 %v1814
        %v1816 = vpop.xlane.xlu0 %1815
        %v1817 = vsel %vm426, %v1729, 0.0
        %1818 = vadd.xlane.f32.xlu0 %v1817
        %v1819 = vpop.xlane.xlu0 %1818
        %v1820 = vsel %vm426, %v1730, 0.0
        %1821 = vadd.xlane.f32.xlu0 %v1820
        %v1822 = vpop.xlane.xlu0 %1821
        %v1823 = vsel %vm426, %v1731, 0.0
        %1824 = vadd.xlane.f32.xlu0 %v1823
        %v1825 = vpop.xlane.xlu0 %1824
        %v1826 = vsel %vm426, %v1732, 0.0
        %1827 = vadd.xlane.f32.xlu0 %v1826
        %v1828 = vpop.xlane.xlu0 %1827
        %v1829 = vadd.f32 %v1735, 1e-16
        %v1830 = vadd.f32 %v1738, 1e-16
        %v1831 = vadd.f32 %v1741, 1e-16
        %v1832 = vadd.f32 %v1744, 1e-16
        %v1833 = vadd.f32 %v1747, 1e-16
        %v1834 = vadd.f32 %v1750, 1e-16
        %v1835 = vadd.f32 %v1753, 1e-16
        %v1836 = vadd.f32 %v1756, 1e-16
        %v1837 = vadd.f32 %v1759, 1e-16
        %v1838 = vadd.f32 %v1762, 1e-16
        %v1839 = vadd.f32 %v1765, 1e-16
        %v1840 = vadd.f32 %v1768, 1e-16
        %v1841 = vadd.f32 %v1771, 1e-16
        %v1842 = vadd.f32 %v1774, 1e-16
        %v1843 = vadd.f32 %v1777, 1e-16
        %v1844 = vadd.f32 %v1780, 1e-16
        %v1845 = vadd.f32 %v1783, 1e-16
        %v1846 = vadd.f32 %v1786, 1e-16
        %v1847 = vadd.f32 %v1789, 1e-16
        %v1848 = vadd.f32 %v1792, 1e-16
        %v1849 = vadd.f32 %v1795, 1e-16
        %v1850 = vadd.f32 %v1798, 1e-16
        %v1851 = vadd.f32 %v1801, 1e-16
        %v1852 = vadd.f32 %v1804, 1e-16
        %v1853 = vadd.f32 %v1807, 1e-16
        %v1854 = vadd.f32 %v1810, 1e-16
        %v1855 = vadd.f32 %v1813, 1e-16
        %v1856 = vadd.f32 %v1816, 1e-16
        %v1857 = vadd.f32 %v1819, 1e-16
        %v1858 = vadd.f32 %v1822, 1e-16
        %v1859 = vadd.f32 %v1825, 1e-16
        %v1860 = vadd.f32 %v1828, 1e-16
        %v1861 = vrsqrt.pop %v1829
        %v1862 = vrsqrt.pop %v1830
        %v1863 = vrsqrt.pop %v1831
        %v1864 = vrsqrt.pop %v1832
        %v1865 = vrsqrt.pop %v1833
        %v1866 = vrsqrt.pop %v1834
        %v1867 = vrsqrt.pop %v1835
        %v1868 = vrsqrt.pop %v1836
        %v1869 = vrsqrt.pop %v1837
        %v1870 = vrsqrt.pop %v1838
        %v1871 = vrsqrt.pop %v1839
        %v1872 = vrsqrt.pop %v1840
        %v1873 = vrsqrt.pop %v1841
        %v1874 = vrsqrt.pop %v1842
        %v1875 = vrsqrt.pop %v1843
        %v1876 = vrsqrt.pop %v1844
        %v1877 = vrsqrt.pop %v1845
        %v1878 = vrsqrt.pop %v1846
        %v1879 = vrsqrt.pop %v1847
        %v1880 = vrsqrt.pop %v1848
        %v1881 = vrsqrt.pop %v1849
        %v1882 = vrsqrt.pop %v1850
        %v1883 = vrsqrt.pop %v1851
        %v1884 = vrsqrt.pop %v1852
        %v1885 = vrsqrt.pop %v1853
        %v1886 = vrsqrt.pop %v1854
        %v1887 = vrsqrt.pop %v1855
        %v1888 = vrsqrt.pop %v1856
        %v1889 = vrsqrt.pop %v1857
        %v1890 = vrsqrt.pop %v1858
        %v1891 = vrsqrt.pop %v1859
        %v1892 = vrsqrt.pop %v1860
        %v1893 = vmul.f32 %v305, %v305
        %v1894 = vsel %vm426, %v1893, 0.0
        %1895 = vadd.xlane.f32.xlu0 %v1894
        %v1896 = vpop.xlane.xlu0 %1895
        %v1897 = vadd.f32 %v1896, 1e-16
        %v1898 = vrsqrt.pop %v1897
        %v1899 = vsel %vm426, %v394, 0
        %v1902 = vsel %vm426, %v338, 0
        %v1905 = vsel %vm426, %v339, 0
        %v1908 = vsel %vm426, %v340, 0
        %v1911 = vsel %vm426, %v341, 0
        %1913 = vmatprep.subr.mxu0 0.0
        %1914 = vmatpush1.xpose.msra.mxu0 %v1902
        %1915 = vmatprep.subr.mxu0 0.0
        %1916 = vmatpush1.xpose.msra.mxu0 %v1905
        %1917 = vmatprep.subr.mxu0 0.0
        %1918 = vmatpush1.xpose.msra.mxu0 %v1908
        %1919 = vmatprep.subr.mxu0 0.0
        %1920 = vmatpush1.xpose.msra.mxu0 %v1911
        %1921 = vmatprep.subr.mxu0 0.0
        %1922 = vmatpush1.xpose.msra.mxu0 0.0
        %1923 = vmatprep.subr.mxu0 0.0
        %1924 = vmatpush1.xpose.msra.mxu0 0.0
        %1925 = vmatprep.subr.mxu0 0.0
        %1926 = vmatpush1.xpose.msra.mxu0 0.0
        %1927 = vmatprep.subr.mxu0 0.0
        %1928 = vmatpush1.xpose.msra.mxu0 0.0
        %1929 = vmatprep.subr.mxu0 0.0
        %1930 = vmatpush1.xpose.msra.mxu0 0.0
        %1931 = vmatprep.subr.mxu0 0.0
        %1932 = vmatpush1.xpose.msra.mxu0 0.0
        %1933 = vmatprep.subr.mxu0 0.0
        %1934 = vmatpush1.xpose.msra.mxu0 0.0
        %1935 = vmatprep.subr.mxu0 0.0
        %1936 = vmatpush1.xpose.msra.mxu0 0.0
        %1937 = vmatprep.subr.mxu0 0.0
        %1938 = vmatpush1.xpose.msra.mxu0 0.0
        %1939 = vmatprep.subr.mxu0 0.0
        %1940 = vmatpush1.xpose.msra.mxu0 0.0
        %1941 = vmatprep.subr.mxu0 0.0
        %1942 = vmatpush1.xpose.msra.mxu0 0.0
        %1943 = vmatprep.subr.mxu0 0.0
        %1944 = vmatpush1.xpose.msra.mxu0 0.0
        %1945 = vmatprep.subr.mxu0 0.0
        %1946 = vmatpush1.xpose.msra.mxu0 0.0
        %1947 = vmatprep.subr.mxu0 0.0
        %1948 = vmatpush1.xpose.msra.mxu0 0.0
        %1949 = vmatprep.subr.mxu0 0.0
        %1950 = vmatpush1.xpose.msra.mxu0 0.0
        %1951 = vmatprep.subr.mxu0 0.0
        %1952 = vmatpush1.xpose.msra.mxu0 0.0
        %1953 = vmatprep.subr.mxu0 0.0
        %1954 = vmatpush1.xpose.msra.mxu0 0.0
        %1955 = vmatprep.subr.mxu0 0.0
        %1956 = vmatpush1.xpose.msra.mxu0 0.0
        %1957 = vmatprep.subr.mxu0 0.0
        %1958 = vmatpush1.xpose.msra.mxu0 0.0
        %1959 = vmatprep.subr.mxu0 0.0
        %1960 = vmatpush1.xpose.msra.mxu0 0.0
        %1961 = vmatprep.subr.mxu0 0.0
        %1962 = vmatpush1.xpose.msra.mxu0 0.0
        %1963 = vmatprep.subr.mxu0 0.0
        %1964 = vmatpush1.xpose.msra.mxu0 0.0
        %1965 = vmatprep.subr.mxu0 0.0
        %1966 = vmatpush1.xpose.msra.mxu0 0.0
        %1967 = vmatprep.subr.mxu0 0.0
        %1968 = vmatpush1.xpose.msra.mxu0 0.0
        %1969 = vmatprep.subr.mxu0 0.0
        %1970 = vmatpush1.xpose.msra.mxu0 0.0
        %1971 = vmatprep.subr.mxu0 0.0
        %1972 = vmatpush1.xpose.msra.mxu0 0.0
        %1973 = vmatprep.subr.mxu0 0.0
        %1974 = vmatpush1.xpose.msra.mxu0 0.0
        %1975 = vmatprep.subr.mxu0 0.0
        %1976 = vmatpush1.xpose.msra.mxu0 0.0
        %1977 = vmatprep.mubr.f32.mxu0 0.0
        %1978 = vmatmul.mubr.f32.gmra.mrb[0].mxu0 %v1899
        %v1979 = vpop.f32.mrb[0].mxu0
        %v1980 = vadd.f32 0.0, %v1979
        %v1981 = vpop.f32.mrb[0].mxu0
        %1982 = vdwg.mxu0
        %v1983 = vsel %vm426, %v408, 0
        %v1986 = vsel %vm426, %v342, 0
        %v1989 = vsel %vm426, %v343, 0
        %v1992 = vsel %vm426, %v344, 0
        %v1995 = vsel %vm426, %v345, 0
        %1997 = vmatprep.subr.mxu0 0.0
        %1998 = vmatpush1.xpose.msra.mxu0 %v1986
        %1999 = vmatprep.subr.mxu0 0.0
        %2000 = vmatpush1.xpose.msra.mxu0 %v1989
        %2001 = vmatprep.subr.mxu0 0.0
        %2002 = vmatpush1.xpose.msra.mxu0 %v1992
        %2003 = vmatprep.subr.mxu0 0.0
        %2004 = vmatpush1.xpose.msra.mxu0 %v1995
        %2005 = vmatprep.subr.mxu0 0.0
        %2006 = vmatpush1.xpose.msra.mxu0 0.0
        %2007 = vmatprep.subr.mxu0 0.0
        %2008 = vmatpush1.xpose.msra.mxu0 0.0
        %2009 = vmatprep.subr.mxu0 0.0
        %2010 = vmatpush1.xpose.msra.mxu0 0.0
        %2011 = vmatprep.subr.mxu0 0.0
        %2012 = vmatpush1.xpose.msra.mxu0 0.0
        %2013 = vmatprep.subr.mxu0 0.0
        %2014 = vmatpush1.xpose.msra.mxu0 0.0
        %2015 = vmatprep.subr.mxu0 0.0
        %2016 = vmatpush1.xpose.msra.mxu0 0.0
        %2017 = vmatprep.subr.mxu0 0.0
        %2018 = vmatpush1.xpose.msra.mxu0 0.0
        %2019 = vmatprep.subr.mxu0 0.0
        %2020 = vmatpush1.xpose.msra.mxu0 0.0
        %2021 = vmatprep.subr.mxu0 0.0
        %2022 = vmatpush1.xpose.msra.mxu0 0.0
        %2023 = vmatprep.subr.mxu0 0.0
        %2024 = vmatpush1.xpose.msra.mxu0 0.0
        %2025 = vmatprep.subr.mxu0 0.0
        %2026 = vmatpush1.xpose.msra.mxu0 0.0
        %2027 = vmatprep.subr.mxu0 0.0
        %2028 = vmatpush1.xpose.msra.mxu0 0.0
        %2029 = vmatprep.subr.mxu0 0.0
        %2030 = vmatpush1.xpose.msra.mxu0 0.0
        %2031 = vmatprep.subr.mxu0 0.0
        %2032 = vmatpush1.xpose.msra.mxu0 0.0
        %2033 = vmatprep.subr.mxu0 0.0
        %2034 = vmatpush1.xpose.msra.mxu0 0.0
        %2035 = vmatprep.subr.mxu0 0.0
        %2036 = vmatpush1.xpose.msra.mxu0 0.0
        %2037 = vmatprep.subr.mxu0 0.0
        %2038 = vmatpush1.xpose.msra.mxu0 0.0
        %2039 = vmatprep.subr.mxu0 0.0
        %2040 = vmatpush1.xpose.msra.mxu0 0.0
        %2041 = vmatprep.subr.mxu0 0.0
        %2042 = vmatpush1.xpose.msra.mxu0 0.0
        %2043 = vmatprep.subr.mxu0 0.0
        %2044 = vmatpush1.xpose.msra.mxu0 0.0
        %2045 = vmatprep.subr.mxu0 0.0
        %2046 = vmatpush1.xpose.msra.mxu0 0.0
        %2047 = vmatprep.subr.mxu0 0.0
        %2048 = vmatpush1.xpose.msra.mxu0 0.0
        %2049 = vmatprep.subr.mxu0 0.0
        %2050 = vmatpush1.xpose.msra.mxu0 0.0
        %2051 = vmatprep.subr.mxu0 0.0
        %2052 = vmatpush1.xpose.msra.mxu0 0.0
        %2053 = vmatprep.subr.mxu0 0.0
        %2054 = vmatpush1.xpose.msra.mxu0 0.0
        %2055 = vmatprep.subr.mxu0 0.0
        %2056 = vmatpush1.xpose.msra.mxu0 0.0
        %2057 = vmatprep.subr.mxu0 0.0
        %2058 = vmatpush1.xpose.msra.mxu0 0.0
        %2059 = vmatprep.subr.mxu0 0.0
        %2060 = vmatpush1.xpose.msra.mxu0 0.0
        %2061 = vmatprep.mubr.f32.mxu0 0.0
        %2062 = vmatmul.mubr.f32.gmra.mrb[0].mxu0 %v1983
        %v2063 = vpop.f32.mrb[0].mxu0
        %v2064 = vadd.f32 0.0, %v2063
        %v2065 = vpop.f32.mrb[0].mxu0
        %2066 = vdwg.mxu0
        %v2067 = vsel %vm426, %v416, 0
        %v2070 = vsel %vm426, %v346, 0
        %v2073 = vsel %vm426, %v347, 0
        %v2076 = vsel %vm426, %v348, 0
        %v2079 = vsel %vm426, %v349, 0
        %2081 = vmatprep.subr.mxu0 0.0
        %2082 = vmatpush1.xpose.msra.mxu0 %v2070
        %2083 = vmatprep.subr.mxu0 0.0
        %2084 = vmatpush1.xpose.msra.mxu0 %v2073
        %2085 = vmatprep.subr.mxu0 0.0
        %2086 = vmatpush1.xpose.msra.mxu0 %v2076
        %2087 = vmatprep.subr.mxu0 0.0
        %2088 = vmatpush1.xpose.msra.mxu0 %v2079
        %2089 = vmatprep.subr.mxu0 0.0
        %2090 = vmatpush1.xpose.msra.mxu0 0.0
        %2091 = vmatprep.subr.mxu0 0.0
        %2092 = vmatpush1.xpose.msra.mxu0 0.0
        %2093 = vmatprep.subr.mxu0 0.0
        %2094 = vmatpush1.xpose.msra.mxu0 0.0
        %2095 = vmatprep.subr.mxu0 0.0
        %2096 = vmatpush1.xpose.msra.mxu0 0.0
        %2097 = vmatprep.subr.mxu0 0.0
        %2098 = vmatpush1.xpose.msra.mxu0 0.0
        %2099 = vmatprep.subr.mxu0 0.0
        %2100 = vmatpush1.xpose.msra.mxu0 0.0
        %2101 = vmatprep.subr.mxu0 0.0
        %2102 = vmatpush1.xpose.msra.mxu0 0.0
        %2103 = vmatprep.subr.mxu0 0.0
        %2104 = vmatpush1.xpose.msra.mxu0 0.0
        %2105 = vmatprep.subr.mxu0 0.0
        %2106 = vmatpush1.xpose.msra.mxu0 0.0
        %2107 = vmatprep.subr.mxu0 0.0
        %2108 = vmatpush1.xpose.msra.mxu0 0.0
        %2109 = vmatprep.subr.mxu0 0.0
        %2110 = vmatpush1.xpose.msra.mxu0 0.0
        %2111 = vmatprep.subr.mxu0 0.0
        %2112 = vmatpush1.xpose.msra.mxu0 0.0
        %2113 = vmatprep.subr.mxu0 0.0
        %2114 = vmatpush1.xpose.msra.mxu0 0.0
        %2115 = vmatprep.subr.mxu0 0.0
        %2116 = vmatpush1.xpose.msra.mxu0 0.0
        %2117 = vmatprep.subr.mxu0 0.0
        %2118 = vmatpush1.xpose.msra.mxu0 0.0
        %2119 = vmatprep.subr.mxu0 0.0
        %2120 = vmatpush1.xpose.msra.mxu0 0.0
        %2121 = vmatprep.subr.mxu0 0.0
        %2122 = vmatpush1.xpose.msra.mxu0 0.0
        %2123 = vmatprep.subr.mxu0 0.0
        %2124 = vmatpush1.xpose.msra.mxu0 0.0
        %2125 = vmatprep.subr.mxu0 0.0
        %2126 = vmatpush1.xpose.msra.mxu0 0.0
        %2127 = vmatprep.subr.mxu0 0.0
        %2128 = vmatpush1.xpose.msra.mxu0 0.0
        %2129 = vmatprep.subr.mxu0 0.0
        %2130 = vmatpush1.xpose.msra.mxu0 0.0
        %2131 = vmatprep.subr.mxu0 0.0
        %2132 = vmatpush1.xpose.msra.mxu0 0.0
        %2133 = vmatprep.subr.mxu0 0.0
        %2134 = vmatpush1.xpose.msra.mxu0 0.0
        %2135 = vmatprep.subr.mxu0 0.0
        %2136 = vmatpush1.xpose.msra.mxu0 0.0
        %2137 = vmatprep.subr.mxu0 0.0
        %2138 = vmatpush1.xpose.msra.mxu0 0.0
        %2139 = vmatprep.subr.mxu0 0.0
        %2140 = vmatpush1.xpose.msra.mxu0 0.0
        %2141 = vmatprep.subr.mxu0 0.0
        %2142 = vmatpush1.xpose.msra.mxu0 0.0
        %2143 = vmatprep.subr.mxu0 0.0
        %2144 = vmatpush1.xpose.msra.mxu0 0.0
        %2145 = vmatprep.mubr.f32.mxu0 0.0
        %2146 = vmatmul.mubr.f32.gmra.mrb[0].mxu0 %v2067
        %v2147 = vpop.f32.mrb[0].mxu0
        %v2148 = vadd.f32 0.0, %v2147
        %v2149 = vpop.f32.mrb[0].mxu0
        %2150 = vdwg.mxu0
        %v2151 = vsel %vm426, %v418, 0
        %v2154 = vsel %vm426, %v350, 0
        %v2157 = vsel %vm426, %v351, 0
        %v2160 = vsel %vm426, %v352, 0
        %v2163 = vsel %vm426, %v353, 0
        %2165 = vmatprep.subr.mxu0 0.0
        %2166 = vmatpush1.xpose.msra.mxu0 %v2154
        %2167 = vmatprep.subr.mxu0 0.0
        %2168 = vmatpush1.xpose.msra.mxu0 %v2157
        %2169 = vmatprep.subr.mxu0 0.0
        %2170 = vmatpush1.xpose.msra.mxu0 %v2160
        %2171 = vmatprep.subr.mxu0 0.0
        %2172 = vmatpush1.xpose.msra.mxu0 %v2163
        %2173 = vmatprep.subr.mxu0 0.0
        %2174 = vmatpush1.xpose.msra.mxu0 0.0
        %2175 = vmatprep.subr.mxu0 0.0
        %2176 = vmatpush1.xpose.msra.mxu0 0.0
        %2177 = vmatprep.subr.mxu0 0.0
        %2178 = vmatpush1.xpose.msra.mxu0 0.0
        %2179 = vmatprep.subr.mxu0 0.0
        %2180 = vmatpush1.xpose.msra.mxu0 0.0
        %2181 = vmatprep.subr.mxu0 0.0
        %2182 = vmatpush1.xpose.msra.mxu0 0.0
        %2183 = vmatprep.subr.mxu0 0.0
        %2184 = vmatpush1.xpose.msra.mxu0 0.0
        %2185 = vmatprep.subr.mxu0 0.0
        %2186 = vmatpush1.xpose.msra.mxu0 0.0
        %2187 = vmatprep.subr.mxu0 0.0
        %2188 = vmatpush1.xpose.msra.mxu0 0.0
        %2189 = vmatprep.subr.mxu0 0.0
        %2190 = vmatpush1.xpose.msra.mxu0 0.0
        %2191 = vmatprep.subr.mxu0 0.0
        %2192 = vmatpush1.xpose.msra.mxu0 0.0
        %2193 = vmatprep.subr.mxu0 0.0
        %2194 = vmatpush1.xpose.msra.mxu0 0.0
        %2195 = vmatprep.subr.mxu0 0.0
        %2196 = vmatpush1.xpose.msra.mxu0 0.0
        %2197 = vmatprep.subr.mxu0 0.0
        %2198 = vmatpush1.xpose.msra.mxu0 0.0
        %2199 = vmatprep.subr.mxu0 0.0
        %2200 = vmatpush1.xpose.msra.mxu0 0.0
        %2201 = vmatprep.subr.mxu0 0.0
        %2202 = vmatpush1.xpose.msra.mxu0 0.0
        %2203 = vmatprep.subr.mxu0 0.0
        %2204 = vmatpush1.xpose.msra.mxu0 0.0
        %2205 = vmatprep.subr.mxu0 0.0
        %2206 = vmatpush1.xpose.msra.mxu0 0.0
        %2207 = vmatprep.subr.mxu0 0.0
        %2208 = vmatpush1.xpose.msra.mxu0 0.0
        %2209 = vmatprep.subr.mxu0 0.0
        %2210 = vmatpush1.xpose.msra.mxu0 0.0
        %2211 = vmatprep.subr.mxu0 0.0
        %2212 = vmatpush1.xpose.msra.mxu0 0.0
        %2213 = vmatprep.subr.mxu0 0.0
        %2214 = vmatpush1.xpose.msra.mxu0 0.0
        %2215 = vmatprep.subr.mxu0 0.0
        %2216 = vmatpush1.xpose.msra.mxu0 0.0
        %2217 = vmatprep.subr.mxu0 0.0
        %2218 = vmatpush1.xpose.msra.mxu0 0.0
        %2219 = vmatprep.subr.mxu0 0.0
        %2220 = vmatpush1.xpose.msra.mxu0 0.0
        %2221 = vmatprep.subr.mxu0 0.0
        %2222 = vmatpush1.xpose.msra.mxu0 0.0
        %2223 = vmatprep.subr.mxu0 0.0
        %2224 = vmatpush1.xpose.msra.mxu0 0.0
        %2225 = vmatprep.subr.mxu0 0.0
        %2226 = vmatpush1.xpose.msra.mxu0 0.0
        %2227 = vmatprep.subr.mxu0 0.0
        %2228 = vmatpush1.xpose.msra.mxu0 0.0
        %2229 = vmatprep.mubr.f32.mxu0 0.0
        %2230 = vmatmul.mubr.f32.gmra.mrb[0].mxu0 %v2151
        %v2231 = vpop.f32.mrb[0].mxu0
        %v2232 = vadd.f32 0.0, %v2231
        %v2233 = vpop.f32.mrb[0].mxu0
        %2234 = vdwg.mxu0
        %v2235 = vsel %vm426, %v401, 0
        %v2238 = vsel %vm426, %v354, 0
        %v2241 = vsel %vm426, %v355, 0
        %v2244 = vsel %vm426, %v356, 0
        %v2247 = vsel %vm426, %v357, 0
        %2249 = vmatprep.subr.mxu0 0.0
        %2250 = vmatpush1.xpose.msra.mxu0 %v2238
        %2251 = vmatprep.subr.mxu0 0.0
        %2252 = vmatpush1.xpose.msra.mxu0 %v2241
        %2253 = vmatprep.subr.mxu0 0.0
        %2254 = vmatpush1.xpose.msra.mxu0 %v2244
        %2255 = vmatprep.subr.mxu0 0.0
        %2256 = vmatpush1.xpose.msra.mxu0 %v2247
        %2257 = vmatprep.subr.mxu0 0.0
        %2258 = vmatpush1.xpose.msra.mxu0 0.0
        %2259 = vmatprep.subr.mxu0 0.0
        %2260 = vmatpush1.xpose.msra.mxu0 0.0
        %2261 = vmatprep.subr.mxu0 0.0
        %2262 = vmatpush1.xpose.msra.mxu0 0.0
        %2263 = vmatprep.subr.mxu0 0.0
        %2264 = vmatpush1.xpose.msra.mxu0 0.0
        %2265 = vmatprep.subr.mxu0 0.0
        %2266 = vmatpush1.xpose.msra.mxu0 0.0
        %2267 = vmatprep.subr.mxu0 0.0
        %2268 = vmatpush1.xpose.msra.mxu0 0.0
        %2269 = vmatprep.subr.mxu0 0.0
        %2270 = vmatpush1.xpose.msra.mxu0 0.0
        %2271 = vmatprep.subr.mxu0 0.0
        %2272 = vmatpush1.xpose.msra.mxu0 0.0
        %2273 = vmatprep.subr.mxu0 0.0
        %2274 = vmatpush1.xpose.msra.mxu0 0.0
        %2275 = vmatprep.subr.mxu0 0.0
        %2276 = vmatpush1.xpose.msra.mxu0 0.0
        %2277 = vmatprep.subr.mxu0 0.0
        %2278 = vmatpush1.xpose.msra.mxu0 0.0
        %2279 = vmatprep.subr.mxu0 0.0
        %2280 = vmatpush1.xpose.msra.mxu0 0.0
        %2281 = vmatprep.subr.mxu0 0.0
        %2282 = vmatpush1.xpose.msra.mxu0 0.0
        %2283 = vmatprep.subr.mxu0 0.0
        %2284 = vmatpush1.xpose.msra.mxu0 0.0
        %2285 = vmatprep.subr.mxu0 0.0
        %2286 = vmatpush1.xpose.msra.mxu0 0.0
        %2287 = vmatprep.subr.mxu0 0.0
        %2288 = vmatpush1.xpose.msra.mxu0 0.0
        %2289 = vmatprep.subr.mxu0 0.0
        %2290 = vmatpush1.xpose.msra.mxu0 0.0
        %2291 = vmatprep.subr.mxu0 0.0
        %2292 = vmatpush1.xpose.msra.mxu0 0.0
        %2293 = vmatprep.subr.mxu0 0.0
        %2294 = vmatpush1.xpose.msra.mxu0 0.0
        %2295 = vmatprep.subr.mxu0 0.0
        %2296 = vmatpush1.xpose.msra.mxu0 0.0
        %2297 = vmatprep.subr.mxu0 0.0
        %2298 = vmatpush1.xpose.msra.mxu0 0.0
        %2299 = vmatprep.subr.mxu0 0.0
        %2300 = vmatpush1.xpose.msra.mxu0 0.0
        %2301 = vmatprep.subr.mxu0 0.0
        %2302 = vmatpush1.xpose.msra.mxu0 0.0
        %2303 = vmatprep.subr.mxu0 0.0
        %2304 = vmatpush1.xpose.msra.mxu0 0.0
        %2305 = vmatprep.subr.mxu0 0.0
        %2306 = vmatpush1.xpose.msra.mxu0 0.0
        %2307 = vmatprep.subr.mxu0 0.0
        %2308 = vmatpush1.xpose.msra.mxu0 0.0
        %2309 = vmatprep.subr.mxu0 0.0
        %2310 = vmatpush1.xpose.msra.mxu0 0.0
        %2311 = vmatprep.subr.mxu0 0.0
        %2312 = vmatpush1.xpose.msra.mxu0 0.0
        %2313 = vmatprep.mubr.f32.mxu0 0.0
        %2314 = vmatmul.mubr.f32.gmra.mrb[0].mxu0 %v2235
        %v2315 = vpop.f32.mrb[0].mxu0
        %v2316 = vadd.f32 0.0, %v2315
        %v2317 = vpop.f32.mrb[0].mxu0
        %2318 = vdwg.mxu0
        %v2319 = vsel %vm426, %v415, 0
        %v2322 = vsel %vm426, %v358, 0
        %v2325 = vsel %vm426, %v359, 0
        %v2328 = vsel %vm426, %v360, 0
        %v2331 = vsel %vm426, %v361, 0
        %2333 = vmatprep.subr.mxu0 0.0
        %2334 = vmatpush1.xpose.msra.mxu0 %v2322
        %2335 = vmatprep.subr.mxu0 0.0
        %2336 = vmatpush1.xpose.msra.mxu0 %v2325
        %2337 = vmatprep.subr.mxu0 0.0
        %2338 = vmatpush1.xpose.msra.mxu0 %v2328
        %2339 = vmatprep.subr.mxu0 0.0
        %2340 = vmatpush1.xpose.msra.mxu0 %v2331
        %2341 = vmatprep.subr.mxu0 0.0
        %2342 = vmatpush1.xpose.msra.mxu0 0.0
        %2343 = vmatprep.subr.mxu0 0.0
        %2344 = vmatpush1.xpose.msra.mxu0 0.0
        %2345 = vmatprep.subr.mxu0 0.0
        %2346 = vmatpush1.xpose.msra.mxu0 0.0
        %2347 = vmatprep.subr.mxu0 0.0
        %2348 = vmatpush1.xpose.msra.mxu0 0.0
        %2349 = vmatprep.subr.mxu0 0.0
        %2350 = vmatpush1.xpose.msra.mxu0 0.0
        %2351 = vmatprep.subr.mxu0 0.0
        %2352 = vmatpush1.xpose.msra.mxu0 0.0
        %2353 = vmatprep.subr.mxu0 0.0
        %2354 = vmatpush1.xpose.msra.mxu0 0.0
        %2355 = vmatprep.subr.mxu0 0.0
        %2356 = vmatpush1.xpose.msra.mxu0 0.0
        %2357 = vmatprep.subr.mxu0 0.0
        %2358 = vmatpush1.xpose.msra.mxu0 0.0
        %2359 = vmatprep.subr.mxu0 0.0
        %2360 = vmatpush1.xpose.msra.mxu0 0.0
        %2361 = vmatprep.subr.mxu0 0.0
        %2362 = vmatpush1.xpose.msra.mxu0 0.0
        %2363 = vmatprep.subr.mxu0 0.0
        %2364 = vmatpush1.xpose.msra.mxu0 0.0
        %2365 = vmatprep.subr.mxu0 0.0
        %2366 = vmatpush1.xpose.msra.mxu0 0.0
        %2367 = vmatprep.subr.mxu0 0.0
        %2368 = vmatpush1.xpose.msra.mxu0 0.0
        %2369 = vmatprep.subr.mxu0 0.0
        %2370 = vmatpush1.xpose.msra.mxu0 0.0
        %2371 = vmatprep.subr.mxu0 0.0
        %2372 = vmatpush1.xpose.msra.mxu0 0.0
        %2373 = vmatprep.subr.mxu0 0.0
        %2374 = vmatpush1.xpose.msra.mxu0 0.0
        %2375 = vmatprep.subr.mxu0 0.0
        %2376 = vmatpush1.xpose.msra.mxu0 0.0
        %2377 = vmatprep.subr.mxu0 0.0
        %2378 = vmatpush1.xpose.msra.mxu0 0.0
        %2379 = vmatprep.subr.mxu0 0.0
        %2380 = vmatpush1.xpose.msra.mxu0 0.0
        %2381 = vmatprep.subr.mxu0 0.0
        %2382 = vmatpush1.xpose.msra.mxu0 0.0
        %2383 = vmatprep.subr.mxu0 0.0
        %2384 = vmatpush1.xpose.msra.mxu0 0.0
        %2385 = vmatprep.subr.mxu0 0.0
        %2386 = vmatpush1.xpose.msra.mxu0 0.0
        %2387 = vmatprep.subr.mxu0 0.0
        %2388 = vmatpush1.xpose.msra.mxu0 0.0
        %2389 = vmatprep.subr.mxu0 0.0
        %2390 = vmatpush1.xpose.msra.mxu0 0.0
        %2391 = vmatprep.subr.mxu0 0.0
        %2392 = vmatpush1.xpose.msra.mxu0 0.0
        %2393 = vmatprep.subr.mxu0 0.0
        %2394 = vmatpush1.xpose.msra.mxu0 0.0
        %2395 = vmatprep.subr.mxu0 0.0
        %2396 = vmatpush1.xpose.msra.mxu0 0.0
        %2397 = vmatprep.mubr.f32.mxu0 0.0
        %2398 = vmatmul.mubr.f32.gmra.mrb[0].mxu0 %v2319
        %v2399 = vpop.f32.mrb[0].mxu0
        %v2400 = vadd.f32 0.0, %v2399
        %v2401 = vpop.f32.mrb[0].mxu0
        %2402 = vdwg.mxu0
        %v2403 = vsel %vm426, %v417, 0
        %v2406 = vsel %vm426, %v362, 0
        %v2409 = vsel %vm426, %v363, 0
        %v2412 = vsel %vm426, %v364, 0
        %v2415 = vsel %vm426, %v365, 0
        %2417 = vmatprep.subr.mxu0 0.0
        %2418 = vmatpush1.xpose.msra.mxu0 %v2406
        %2419 = vmatprep.subr.mxu0 0.0
        %2420 = vmatpush1.xpose.msra.mxu0 %v2409
        %2421 = vmatprep.subr.mxu0 0.0
        %2422 = vmatpush1.xpose.msra.mxu0 %v2412
        %2423 = vmatprep.subr.mxu0 0.0
        %2424 = vmatpush1.xpose.msra.mxu0 %v2415
        %2425 = vmatprep.subr.mxu0 0.0
        %2426 = vmatpush1.xpose.msra.mxu0 0.0
        %2427 = vmatprep.subr.mxu0 0.0
        %2428 = vmatpush1.xpose.msra.mxu0 0.0
        %2429 = vmatprep.subr.mxu0 0.0
        %2430 = vmatpush1.xpose.msra.mxu0 0.0
        %2431 = vmatprep.subr.mxu0 0.0
        %2432 = vmatpush1.xpose.msra.mxu0 0.0
        %2433 = vmatprep.subr.mxu0 0.0
        %2434 = vmatpush1.xpose.msra.mxu0 0.0
        %2435 = vmatprep.subr.mxu0 0.0
        %2436 = vmatpush1.xpose.msra.mxu0 0.0
        %2437 = vmatprep.subr.mxu0 0.0
        %2438 = vmatpush1.xpose.msra.mxu0 0.0
        %2439 = vmatprep.subr.mxu0 0.0
        %2440 = vmatpush1.xpose.msra.mxu0 0.0
        %2441 = vmatprep.subr.mxu0 0.0
        %2442 = vmatpush1.xpose.msra.mxu0 0.0
        %2443 = vmatprep.subr.mxu0 0.0
        %2444 = vmatpush1.xpose.msra.mxu0 0.0
        %2445 = vmatprep.subr.mxu0 0.0
        %2446 = vmatpush1.xpose.msra.mxu0 0.0
        %2447 = vmatprep.subr.mxu0 0.0
        %2448 = vmatpush1.xpose.msra.mxu0 0.0
        %2449 = vmatprep.subr.mxu0 0.0
        %2450 = vmatpush1.xpose.msra.mxu0 0.0
        %2451 = vmatprep.subr.mxu0 0.0
        %2452 = vmatpush1.xpose.msra.mxu0 0.0
        %2453 = vmatprep.subr.mxu0 0.0
        %2454 = vmatpush1.xpose.msra.mxu0 0.0
        %2455 = vmatprep.subr.mxu0 0.0
        %2456 = vmatpush1.xpose.msra.mxu0 0.0
        %2457 = vmatprep.subr.mxu0 0.0
        %2458 = vmatpush1.xpose.msra.mxu0 0.0
        %2459 = vmatprep.subr.mxu0 0.0
        %2460 = vmatpush1.xpose.msra.mxu0 0.0
        %2461 = vmatprep.subr.mxu0 0.0
        %2462 = vmatpush1.xpose.msra.mxu0 0.0
        %2463 = vmatprep.subr.mxu0 0.0
        %2464 = vmatpush1.xpose.msra.mxu0 0.0
        %2465 = vmatprep.subr.mxu0 0.0
        %2466 = vmatpush1.xpose.msra.mxu0 0.0
        %2467 = vmatprep.subr.mxu0 0.0
        %2468 = vmatpush1.xpose.msra.mxu0 0.0
        %2469 = vmatprep.subr.mxu0 0.0
        %2470 = vmatpush1.xpose.msra.mxu0 0.0
        %2471 = vmatprep.subr.mxu0 0.0
        %2472 = vmatpush1.xpose.msra.mxu0 0.0
        %2473 = vmatprep.subr.mxu0 0.0
        %2474 = vmatpush1.xpose.msra.mxu0 0.0
        %2475 = vmatprep.subr.mxu0 0.0
        %2476 = vmatpush1.xpose.msra.mxu0 0.0
        %2477 = vmatprep.subr.mxu0 0.0
        %2478 = vmatpush1.xpose.msra.mxu0 0.0
        %2479 = vmatprep.subr.mxu0 0.0
        %2480 = vmatpush1.xpose.msra.mxu0 0.0
        %2481 = vmatprep.mubr.f32.mxu0 0.0
        %2482 = vmatmul.mubr.f32.gmra.mrb[0].mxu0 %v2403
        %v2483 = vpop.f32.mrb[0].mxu0
        %v2484 = vadd.f32 0.0, %v2483
        %v2485 = vpop.f32.mrb[0].mxu0
        %2486 = vdwg.mxu0
        %v2487 = vsel %vm426, %v419, 0
        %v2490 = vsel %vm426, %v366, 0
        %v2493 = vsel %vm426, %v367, 0
        %v2496 = vsel %vm426, %v368, 0
        %v2499 = vsel %vm426, %v369, 0
        %2501 = vmatprep.subr.mxu0 0.0
        %2502 = vmatpush1.xpose.msra.mxu0 %v2490
        %2503 = vmatprep.subr.mxu0 0.0
        %2504 = vmatpush1.xpose.msra.mxu0 %v2493
        %2505 = vmatprep.subr.mxu0 0.0
        %2506 = vmatpush1.xpose.msra.mxu0 %v2496
        %2507 = vmatprep.subr.mxu0 0.0
        %2508 = vmatpush1.xpose.msra.mxu0 %v2499
        %2509 = vmatprep.subr.mxu0 0.0
        %2510 = vmatpush1.xpose.msra.mxu0 0.0
        %2511 = vmatprep.subr.mxu0 0.0
        %2512 = vmatpush1.xpose.msra.mxu0 0.0
        %2513 = vmatprep.subr.mxu0 0.0
        %2514 = vmatpush1.xpose.msra.mxu0 0.0
        %2515 = vmatprep.subr.mxu0 0.0
        %2516 = vmatpush1.xpose.msra.mxu0 0.0
        %2517 = vmatprep.subr.mxu0 0.0
        %2518 = vmatpush1.xpose.msra.mxu0 0.0
        %2519 = vmatprep.subr.mxu0 0.0
        %2520 = vmatpush1.xpose.msra.mxu0 0.0
        %2521 = vmatprep.subr.mxu0 0.0
        %2522 = vmatpush1.xpose.msra.mxu0 0.0
        %2523 = vmatprep.subr.mxu0 0.0
        %2524 = vmatpush1.xpose.msra.mxu0 0.0
        %2525 = vmatprep.subr.mxu0 0.0
        %2526 = vmatpush1.xpose.msra.mxu0 0.0
        %2527 = vmatprep.subr.mxu0 0.0
        %2528 = vmatpush1.xpose.msra.mxu0 0.0
        %2529 = vmatprep.subr.mxu0 0.0
        %2530 = vmatpush1.xpose.msra.mxu0 0.0
        %2531 = vmatprep.subr.mxu0 0.0
        %2532 = vmatpush1.xpose.msra.mxu0 0.0
        %2533 = vmatprep.subr.mxu0 0.0
        %2534 = vmatpush1.xpose.msra.mxu0 0.0
        %2535 = vmatprep.subr.mxu0 0.0
        %2536 = vmatpush1.xpose.msra.mxu0 0.0
        %2537 = vmatprep.subr.mxu0 0.0
        %2538 = vmatpush1.xpose.msra.mxu0 0.0
        %2539 = vmatprep.subr.mxu0 0.0
        %2540 = vmatpush1.xpose.msra.mxu0 0.0
        %2541 = vmatprep.subr.mxu0 0.0
        %2542 = vmatpush1.xpose.msra.mxu0 0.0
        %2543 = vmatprep.subr.mxu0 0.0
        %2544 = vmatpush1.xpose.msra.mxu0 0.0
        %2545 = vmatprep.subr.mxu0 0.0
        %2546 = vmatpush1.xpose.msra.mxu0 0.0
        %2547 = vmatprep.subr.mxu0 0.0
        %2548 = vmatpush1.xpose.msra.mxu0 0.0
        %2549 = vmatprep.subr.mxu0 0.0
        %2550 = vmatpush1.xpose.msra.mxu0 0.0
        %2551 = vmatprep.subr.mxu0 0.0
        %2552 = vmatpush1.xpose.msra.mxu0 0.0
        %2553 = vmatprep.subr.mxu0 0.0
        %2554 = vmatpush1.xpose.msra.mxu0 0.0
        %2555 = vmatprep.subr.mxu0 0.0
        %2556 = vmatpush1.xpose.msra.mxu0 0.0
        %2557 = vmatprep.subr.mxu0 0.0
        %2558 = vmatpush1.xpose.msra.mxu0 0.0
        %2559 = vmatprep.subr.mxu0 0.0
        %2560 = vmatpush1.xpose.msra.mxu0 0.0
        %2561 = vmatprep.subr.mxu0 0.0
        %2562 = vmatpush1.xpose.msra.mxu0 0.0
        %2563 = vmatprep.subr.mxu0 0.0
        %2564 = vmatpush1.xpose.msra.mxu0 0.0
        %2565 = vmatprep.mubr.f32.mxu0 0.0
        %2566 = vmatmul.mubr.f32.gmra.mrb[0].mxu0 %v2487
        %v2567 = vpop.f32.mrb[0].mxu0
        %v2568 = vadd.f32 0.0, %v2567
        %v2569 = vpop.f32.mrb[0].mxu0
        %2570 = vdwg.mxu0
        %2571 = vset.pattern.permute.xlu0 64
        %2572 = vperm.xlu0 %2571, %v305
        %v2573 = vpop.permute.xlu0 %2572
        %v2583 = vrot.slane %v2064, 7
        %vm2584 = vcmask 1041409
        %v2585 = vsel %vm2584, %v2583, %v1980
        %v2586 = vrot.slane %v2148, 6
        %vm2587 = vcmask 1042434
        %v2588 = vsel %vm2587, %v2586, %v2585
        %v2589 = vrot.slane %v2232, 5
        %vm2590 = vcmask 1043459
        %v2591 = vsel %vm2590, %v2589, %v2588
        %v2592 = vrot.slane %v2316, 4
        %vm2593 = vcmask 1044484
        %v2594 = vsel %vm2593, %v2592, %v2591
        %v2595 = vrot.slane %v2400, 3
        %vm2596 = vcmask 1045509
        %v2597 = vsel %vm2596, %v2595, %v2594
        %v2598 = vrot.slane %v2484, 2
        %vm2599 = vcmask 1046534
        %v2600 = vsel %vm2599, %v2598, %v2597
        %v2601 = vrot.slane %v2568, 1
        %vm2602 = vcmask 1047559
        %v2603 = vsel %vm2602, %v2601, %v2600
        %v2605 = vmul.f32 %v2573, %v2603
        %v2638 = vlaneseq
        %v2639 = vand.u32 %v2638, 127
        %v2640 = vlaneseq
        %v2641 = vshrl.u32 %v2640, 7
        %v2642 = vsub.s32 %v2639, %v2641
        %v2643 = vrot.slane %v1861, %v2642
        %v2644 = vadd.s32 %v2639, 4294967288
        %v2645 = vlaneseq
        %v2646 = vshrl.u32 %v2645, 7
        %v2647 = vsub.s32 %v2644, %v2646
        %v2648 = vrot.slane %v1862, %v2647
        %vm2649 = vcmask 130112
        %v2650 = vsel %vm2649, %v2648, %v2643
        %v2651 = vadd.s32 %v2639, 4294967280
        %v2652 = vlaneseq
        %v2653 = vshrl.u32 %v2652, 7
        %v2654 = vsub.s32 %v2651, %v2653
        %v2655 = vrot.slane %v1863, %v2654
        %vm2656 = vcmask 195712
        %v2657 = vsel %vm2656, %v2655, %v2650
        %v2658 = vadd.s32 %v2639, 4294967272
        %v2659 = vlaneseq
        %v2660 = vshrl.u32 %v2659, 7
        %v2661 = vsub.s32 %v2658, %v2660
        %v2662 = vrot.slane %v1864, %v2661
        %vm2663 = vcmask 261312
        %v2664 = vsel %vm2663, %v2662, %v2657
        %v2665 = vlaneseq
        %v2666 = vshrl.u32 %v2665, 7
        %v2667 = vsub.s32 %v2639, %v2666
        %v2668 = vrot.slane %v1865, %v2667
        %v2669 = vlaneseq
        %v2670 = vshrl.u32 %v2669, 7
        %v2671 = vsub.s32 %v2644, %v2670
        %v2672 = vrot.slane %v1866, %v2671
        %v2673 = vsel %vm2649, %v2672, %v2668
        %v2674 = vlaneseq
        %v2675 = vshrl.u32 %v2674, 7
        %v2676 = vsub.s32 %v2651, %v2675
        %v2677 = vrot.slane %v1867, %v2676
        %v2678 = vsel %vm2656, %v2677, %v2673
        %v2679 = vlaneseq
        %v2680 = vshrl.u32 %v2679, 7
        %v2681 = vsub.s32 %v2658, %v2680
        %v2682 = vrot.slane %v1868, %v2681
        %v2683 = vsel %vm2663, %v2682, %v2678
        %v2684 = vlaneseq
        %v2685 = vshrl.u32 %v2684, 7
        %v2686 = vsub.s32 %v2639, %v2685
        %v2687 = vrot.slane %v1869, %v2686
        %v2688 = vlaneseq
        %v2689 = vshrl.u32 %v2688, 7
        %v2690 = vsub.s32 %v2644, %v2689
        %v2691 = vrot.slane %v1870, %v2690
        %v2692 = vsel %vm2649, %v2691, %v2687
        %v2693 = vlaneseq
        %v2694 = vshrl.u32 %v2693, 7
        %v2695 = vsub.s32 %v2651, %v2694
        %v2696 = vrot.slane %v1871, %v2695
        %v2697 = vsel %vm2656, %v2696, %v2692
        %v2698 = vlaneseq
        %v2699 = vshrl.u32 %v2698, 7
        %v2700 = vsub.s32 %v2658, %v2699
        %v2701 = vrot.slane %v1872, %v2700
        %v2702 = vsel %vm2663, %v2701, %v2697
        %v2703 = vlaneseq
        %v2704 = vshrl.u32 %v2703, 7
        %v2705 = vsub.s32 %v2639, %v2704
        %v2706 = vrot.slane %v1873, %v2705
        %v2707 = vlaneseq
        %v2708 = vshrl.u32 %v2707, 7
        %v2709 = vsub.s32 %v2644, %v2708
        %v2710 = vrot.slane %v1874, %v2709
        %v2711 = vsel %vm2649, %v2710, %v2706
        %v2712 = vlaneseq
        %v2713 = vshrl.u32 %v2712, 7
        %v2714 = vsub.s32 %v2651, %v2713
        %v2715 = vrot.slane %v1875, %v2714
        %v2716 = vsel %vm2656, %v2715, %v2711
        %v2717 = vlaneseq
        %v2718 = vshrl.u32 %v2717, 7
        %v2719 = vsub.s32 %v2658, %v2718
        %v2720 = vrot.slane %v1876, %v2719
        %v2721 = vsel %vm2663, %v2720, %v2716
        %v2722 = vlaneseq
        %v2723 = vshrl.u32 %v2722, 7
        %v2724 = vsub.s32 %v2639, %v2723
        %v2725 = vrot.slane %v1877, %v2724
        %v2726 = vlaneseq
        %v2727 = vshrl.u32 %v2726, 7
        %v2728 = vsub.s32 %v2644, %v2727
        %v2729 = vrot.slane %v1878, %v2728
        %v2730 = vsel %vm2649, %v2729, %v2725
        %v2731 = vlaneseq
        %v2732 = vshrl.u32 %v2731, 7
        %v2733 = vsub.s32 %v2651, %v2732
        %v2734 = vrot.slane %v1879, %v2733
        %v2735 = vsel %vm2656, %v2734, %v2730
        %v2736 = vlaneseq
        %v2737 = vshrl.u32 %v2736, 7
        %v2738 = vsub.s32 %v2658, %v2737
        %v2739 = vrot.slane %v1880, %v2738
        %v2740 = vsel %vm2663, %v2739, %v2735
        %v2741 = vlaneseq
        %v2742 = vshrl.u32 %v2741, 7
        %v2743 = vsub.s32 %v2639, %v2742
        %v2744 = vrot.slane %v1881, %v2743
        %v2745 = vlaneseq
        %v2746 = vshrl.u32 %v2745, 7
        %v2747 = vsub.s32 %v2644, %v2746
        %v2748 = vrot.slane %v1882, %v2747
        %v2749 = vsel %vm2649, %v2748, %v2744
        %v2750 = vlaneseq
        %v2751 = vshrl.u32 %v2750, 7
        %v2752 = vsub.s32 %v2651, %v2751
        %v2753 = vrot.slane %v1883, %v2752
        %v2754 = vsel %vm2656, %v2753, %v2749
        %v2755 = vlaneseq
        %v2756 = vshrl.u32 %v2755, 7
        %v2757 = vsub.s32 %v2658, %v2756
        %v2758 = vrot.slane %v1884, %v2757
        %v2759 = vsel %vm2663, %v2758, %v2754
        %v2760 = vlaneseq
        %v2761 = vshrl.u32 %v2760, 7
        %v2762 = vsub.s32 %v2639, %v2761
        %v2763 = vrot.slane %v1885, %v2762
        %v2764 = vlaneseq
        %v2765 = vshrl.u32 %v2764, 7
        %v2766 = vsub.s32 %v2644, %v2765
        %v2767 = vrot.slane %v1886, %v2766
        %v2768 = vsel %vm2649, %v2767, %v2763
        %v2769 = vlaneseq
        %v2770 = vshrl.u32 %v2769, 7
        %v2771 = vsub.s32 %v2651, %v2770
        %v2772 = vrot.slane %v1887, %v2771
        %v2773 = vsel %vm2656, %v2772, %v2768
        %v2774 = vlaneseq
        %v2775 = vshrl.u32 %v2774, 7
        %v2776 = vsub.s32 %v2658, %v2775
        %v2777 = vrot.slane %v1888, %v2776
        %v2778 = vsel %vm2663, %v2777, %v2773
        %v2779 = vlaneseq
        %v2780 = vshrl.u32 %v2779, 7
        %v2781 = vsub.s32 %v2639, %v2780
        %v2782 = vrot.slane %v1889, %v2781
        %v2783 = vlaneseq
        %v2784 = vshrl.u32 %v2783, 7
        %v2785 = vsub.s32 %v2644, %v2784
        %v2786 = vrot.slane %v1890, %v2785
        %v2787 = vsel %vm2649, %v2786, %v2782
        %v2788 = vlaneseq
        %v2789 = vshrl.u32 %v2788, 7
        %v2790 = vsub.s32 %v2651, %v2789
        %v2791 = vrot.slane %v1891, %v2790
        %v2792 = vsel %vm2656, %v2791, %v2787
        %v2793 = vlaneseq
        %v2794 = vshrl.u32 %v2793, 7
        %v2795 = vsub.s32 %v2658, %v2794
        %v2796 = vrot.slane %v1892, %v2795
        %v2797 = vsel %vm2663, %v2796, %v2792
        %v2798 = vsel %vm2584, %v2683, %v2664
        %v2799 = vsel %vm2587, %v2702, %v2798
        %v2800 = vsel %vm2590, %v2721, %v2799
        %v2801 = vsel %vm2593, %v2740, %v2800
        %v2802 = vsel %vm2596, %v2759, %v2801
        %v2803 = vsel %vm2599, %v2778, %v2802
        %v2804 = vsel %vm2602, %v2797, %v2803
        %v2806 = vmul.f32 %v2605, %v2804
        %v2807 = vmul.f32 %v2806, %v1898
        %v2808 = vsel %vm426, %v2807, -inf
        %2809 = vmax.xlane.f32.xlu0 %v2808
        %v2810 = vpop.xlane.xlu0 %2809
        %v2811 = vsub.f32 %v2807, %v2810
        %v2812 = vmul.f32 %v2811, 1.442695
        %v2813 = vpow.pop %v2812
        %v2814 = vsel %vm426, %v2813, 0.0
        %2815 = vadd.xlane.f32.xlu0 %v2814
        %v2816 = vpop.xlane.xlu0 %2815
        %v2817 = vrcp.pop %v2816
        %v2818 = vmul.f32 %v2813, %v2817
        %2819 = vset.pattern.permute.xlu0 65
        %2820 = vperm.xlu0 %2819, %v305
        %v2821 = vpop.permute.xlu0 %2820
        %v2831 = vrot.slane %v1278, 7
        %v2832 = vsel %vm2584, %v2831, %v1208
        %v2833 = vrot.slane %v1348, 6
        %v2834 = vsel %vm2587, %v2833, %v2832
        %v2835 = vrot.slane %v1418, 5
        %v2836 = vsel %vm2590, %v2835, %v2834
        %v2837 = vrot.slane %v1488, 4
        %v2838 = vsel %vm2593, %v2837, %v2836
        %v2839 = vrot.slane %v1558, 3
        %v2840 = vsel %vm2596, %v2839, %v2838
        %v2841 = vrot.slane %v1628, 2
        %v2842 = vsel %vm2599, %v2841, %v2840
        %v2843 = vrot.slane %v1698, 1
        %v2844 = vsel %vm2602, %v2843, %v2842
        %v2846 = vmul.f32 %v2821, %v2844
        %2847 = vset.pattern.permute.xlu0 66
        %2848 = vperm.xlu0 %2847, %v305
        %v2849 = vpop.permute.xlu0 %2848
        %v2851 = vmul.f32 %v2849, %v2818
        %v2852 = vadd.f32 %v2846, %v2851
        %2853 = vset.pattern.permute.xlu0 67
        %2854 = vperm.xlu0 %2853, %v305
        %v2855 = vpop.permute.xlu0 %2854
        %v2865 = vrot.slane %v598, 7
        %v2866 = vsel %vm2584, %v2865, %v508
        %v2867 = vrot.slane %v688, 6
        %v2868 = vsel %vm2587, %v2867, %v2866
        %v2869 = vrot.slane %v778, 5
        %v2870 = vsel %vm2590, %v2869, %v2868
        %v2871 = vrot.slane %v868, 4
        %v2872 = vsel %vm2593, %v2871, %v2870
        %v2873 = vrot.slane %v958, 3
        %v2874 = vsel %vm2596, %v2873, %v2872
        %v2875 = vrot.slane %v1048, 2
        %v2876 = vsel %vm2599, %v2875, %v2874
        %v2877 = vrot.slane %v1138, 1
        %v2878 = vsel %vm2602, %v2877, %v2876
        %v2880 = vmul.f32 %v2855, %v2878
        %v2881 = vadd.f32 %v2852, %v2880
        %v2883 = vcombine.high %v2881, %v2881
        %v2885 = vunpack.c.l.s4 1966171168
        %v2886 = vunpack.c.0.s8 %v2885
        %v2887 = vlaneseq
        %v2888 = vshrl.u32 %v2887, 7
        %v2889 = vsub.s32 %v2886, %v2888
        %v2890 = vrot.slane %v2881, %v2889
        %v2892 = vunpack.c.l.s4 1966171168
        %v2893 = vunpack.c.0.s8 %v2892
        %v2894 = vlaneseq
        %v2895 = vshrl.u32 %v2894, 7
        %v2896 = vsub.s32 %v2893, %v2895
        %v2897 = vrot.slane %v2883, %v2896
        %v2898 = vcombine.high %v2890, %v2890
        %v2899 = vcombine.high %v2897, %v2897
        %v2901 = vunpack.c.l.s4 1966171168
        %v2902 = vunpack.c.0.s8 %v2901
        %v2903 = vlaneseq
        %v2904 = vshrl.u32 %v2903, 7
        %v2905 = vsub.s32 %v2902, %v2904
        %v2906 = vrot.slane %v2890, %v2905
        %v2908 = vunpack.c.l.s4 1966171168
        %v2909 = vunpack.c.0.s8 %v2908
        %v2910 = vlaneseq
        %v2911 = vshrl.u32 %v2910, 7
        %v2912 = vsub.s32 %v2909, %v2911
        %v2913 = vrot.slane %v2897, %v2912
        %v2915 = vunpack.c.l.s4 1966171168
        %v2916 = vunpack.c.0.s8 %v2915
        %v2917 = vlaneseq
        %v2918 = vshrl.u32 %v2917, 7
        %v2919 = vsub.s32 %v2916, %v2918
        %v2920 = vrot.slane %v2898, %v2919
        %v2922 = vunpack.c.l.s4 1966171168
        %v2923 = vunpack.c.0.s8 %v2922
        %v2924 = vlaneseq
        %v2925 = vshrl.u32 %v2924, 7
        %v2926 = vsub.s32 %v2923, %v2925
        %v2927 = vrot.slane %v2899, %v2926
        %v2928 = vcombine.high %v2906, %v2906
        %v2929 = vcombine.high %v2913, %v2913
        %v2930 = vcombine.high %v2920, %v2920
        %v2931 = vcombine.high %v2927, %v2927
        %v2932 = vsel %vm426, %v2906, 0
        %2934 = vmatprep.subr.mxu0 0.0
        %2935 = vmatpush1.msra.mxu0 %v338
        %2936 = vmatprep.subr.mxu0 0.0
        %2937 = vmatpush1.msra.mxu0 %v339
        %2938 = vmatprep.subr.mxu0 0.0
        %2939 = vmatpush1.msra.mxu0 %v340
        %2940 = vmatprep.subr.mxu0 0.0
        %2941 = vmatpush1.msra.mxu0 %v341
        %2942 = vmatprep.subr.mxu0 0.0
        %2943 = vmatpush1.msra.mxu0 0.0
        %2944 = vmatprep.subr.mxu0 0.0
        %2945 = vmatpush1.msra.mxu0 0.0
        %2946 = vmatprep.subr.mxu0 0.0
        %2947 = vmatpush1.msra.mxu0 0.0
        %2948 = vmatprep.subr.mxu0 0.0
        %2949 = vmatpush1.msra.mxu0 0.0
        %2950 = vmatprep.subr.mxu0 0.0
        %2951 = vmatpush1.msra.mxu0 0.0
        %2952 = vmatprep.subr.mxu0 0.0
        %2953 = vmatpush1.msra.mxu0 0.0
        %2954 = vmatprep.subr.mxu0 0.0
        %2955 = vmatpush1.msra.mxu0 0.0
        %2956 = vmatprep.subr.mxu0 0.0
        %2957 = vmatpush1.msra.mxu0 0.0
        %2958 = vmatprep.subr.mxu0 0.0
        %2959 = vmatpush1.msra.mxu0 0.0
        %2960 = vmatprep.subr.mxu0 0.0
        %2961 = vmatpush1.msra.mxu0 0.0
        %2962 = vmatprep.subr.mxu0 0.0
        %2963 = vmatpush1.msra.mxu0 0.0
        %2964 = vmatprep.subr.mxu0 0.0
        %2965 = vmatpush1.msra.mxu0 0.0
        %2966 = vmatprep.subr.mxu0 0.0
        %2967 = vmatpush1.msra.mxu0 0.0
        %2968 = vmatprep.subr.mxu0 0.0
        %2969 = vmatpush1.msra.mxu0 0.0
        %2970 = vmatprep.subr.mxu0 0.0
        %2971 = vmatpush1.msra.mxu0 0.0
        %2972 = vmatprep.subr.mxu0 0.0
        %2973 = vmatpush1.msra.mxu0 0.0
        %2974 = vmatprep.subr.mxu0 0.0
        %2975 = vmatpush1.msra.mxu0 0.0
        %2976 = vmatprep.subr.mxu0 0.0
        %2977 = vmatpush1.msra.mxu0 0.0
        %2978 = vmatprep.subr.mxu0 0.0
        %2979 = vmatpush1.msra.mxu0 0.0
        %2980 = vmatprep.subr.mxu0 0.0
        %2981 = vmatpush1.msra.mxu0 0.0
        %2982 = vmatprep.subr.mxu0 0.0
        %2983 = vmatpush1.msra.mxu0 0.0
        %2984 = vmatprep.subr.mxu0 0.0
        %2985 = vmatpush1.msra.mxu0 0.0
        %2986 = vmatprep.subr.mxu0 0.0
        %2987 = vmatpush1.msra.mxu0 0.0
        %2988 = vmatprep.subr.mxu0 0.0
        %2989 = vmatpush1.msra.mxu0 0.0
        %2990 = vmatprep.subr.mxu0 0.0
        %2991 = vmatpush1.msra.mxu0 0.0
        %2992 = vmatprep.subr.mxu0 0.0
        %2993 = vmatpush1.msra.mxu0 0.0
        %2994 = vmatprep.subr.mxu0 0.0
        %2995 = vmatpush1.msra.mxu0 0.0
        %2996 = vmatprep.subr.mxu0 0.0
        %2997 = vmatpush1.msra.mxu0 0.0
        %2998 = vmatprep.mubr.f32.mxu0 0.0
        %2999 = vmatmul.mubr.f32.gmra.mrb[0].mxu0 %v2932
        %v3000 = vpop.f32.mrb[0].mxu0
        %v3001 = vadd.f32 0.0, %v3000
        %v3002 = vpop.f32.mrb[0].mxu0
        %3003 = vdwg.mxu0
        %v3004 = vsel %vm426, %v2920, 0
        %3006 = vmatprep.subr.mxu0 0.0
        %3007 = vmatpush1.msra.mxu0 %v342
        %3008 = vmatprep.subr.mxu0 0.0
        %3009 = vmatpush1.msra.mxu0 %v343
        %3010 = vmatprep.subr.mxu0 0.0
        %3011 = vmatpush1.msra.mxu0 %v344
        %3012 = vmatprep.subr.mxu0 0.0
        %3013 = vmatpush1.msra.mxu0 %v345
        %3014 = vmatprep.subr.mxu0 0.0
        %3015 = vmatpush1.msra.mxu0 0.0
        %3016 = vmatprep.subr.mxu0 0.0
        %3017 = vmatpush1.msra.mxu0 0.0
        %3018 = vmatprep.subr.mxu0 0.0
        %3019 = vmatpush1.msra.mxu0 0.0
        %3020 = vmatprep.subr.mxu0 0.0
        %3021 = vmatpush1.msra.mxu0 0.0
        %3022 = vmatprep.subr.mxu0 0.0
        %3023 = vmatpush1.msra.mxu0 0.0
        %3024 = vmatprep.subr.mxu0 0.0
        %3025 = vmatpush1.msra.mxu0 0.0
        %3026 = vmatprep.subr.mxu0 0.0
        %3027 = vmatpush1.msra.mxu0 0.0
        %3028 = vmatprep.subr.mxu0 0.0
        %3029 = vmatpush1.msra.mxu0 0.0
        %3030 = vmatprep.subr.mxu0 0.0
        %3031 = vmatpush1.msra.mxu0 0.0
        %3032 = vmatprep.subr.mxu0 0.0
        %3033 = vmatpush1.msra.mxu0 0.0
        %3034 = vmatprep.subr.mxu0 0.0
        %3035 = vmatpush1.msra.mxu0 0.0
        %3036 = vmatprep.subr.mxu0 0.0
        %3037 = vmatpush1.msra.mxu0 0.0
        %3038 = vmatprep.subr.mxu0 0.0
        %3039 = vmatpush1.msra.mxu0 0.0
        %3040 = vmatprep.subr.mxu0 0.0
        %3041 = vmatpush1.msra.mxu0 0.0
        %3042 = vmatprep.subr.mxu0 0.0
        %3043 = vmatpush1.msra.mxu0 0.0
        %3044 = vmatprep.subr.mxu0 0.0
        %3045 = vmatpush1.msra.mxu0 0.0
        %3046 = vmatprep.subr.mxu0 0.0
        %3047 = vmatpush1.msra.mxu0 0.0
        %3048 = vmatprep.subr.mxu0 0.0
        %3049 = vmatpush1.msra.mxu0 0.0
        %3050 = vmatprep.subr.mxu0 0.0
        %3051 = vmatpush1.msra.mxu0 0.0
        %3052 = vmatprep.subr.mxu0 0.0
        %3053 = vmatpush1.msra.mxu0 0.0
        %3054 = vmatprep.subr.mxu0 0.0
        %3055 = vmatpush1.msra.mxu0 0.0
        %3056 = vmatprep.subr.mxu0 0.0
        %3057 = vmatpush1.msra.mxu0 0.0
        %3058 = vmatprep.subr.mxu0 0.0
        %3059 = vmatpush1.msra.mxu0 0.0
        %3060 = vmatprep.subr.mxu0 0.0
        %3061 = vmatpush1.msra.mxu0 0.0
        %3062 = vmatprep.subr.mxu0 0.0
        %3063 = vmatpush1.msra.mxu0 0.0
        %3064 = vmatprep.subr.mxu0 0.0
        %3065 = vmatpush1.msra.mxu0 0.0
        %3066 = vmatprep.subr.mxu0 0.0
        %3067 = vmatpush1.msra.mxu0 0.0
        %3068 = vmatprep.subr.mxu0 0.0
        %3069 = vmatpush1.msra.mxu0 0.0
        %3070 = vmatprep.mubr.f32.mxu0 0.0
        %3071 = vmatmul.mubr.f32.gmra.mrb[0].mxu0 %v3004
        %v3072 = vpop.f32.mrb[0].mxu0
        %v3073 = vadd.f32 0.0, %v3072
        %v3074 = vpop.f32.mrb[0].mxu0
        %3075 = vdwg.mxu0
        %v3076 = vsel %vm426, %v2928, 0
        %3078 = vmatprep.subr.mxu0 0.0
        %3079 = vmatpush1.msra.mxu0 %v346
        %3080 = vmatprep.subr.mxu0 0.0
        %3081 = vmatpush1.msra.mxu0 %v347
        %3082 = vmatprep.subr.mxu0 0.0
        %3083 = vmatpush1.msra.mxu0 %v348
        %3084 = vmatprep.subr.mxu0 0.0
        %3085 = vmatpush1.msra.mxu0 %v349
        %3086 = vmatprep.subr.mxu0 0.0
        %3087 = vmatpush1.msra.mxu0 0.0
        %3088 = vmatprep.subr.mxu0 0.0
        %3089 = vmatpush1.msra.mxu0 0.0
        %3090 = vmatprep.subr.mxu0 0.0
        %3091 = vmatpush1.msra.mxu0 0.0
        %3092 = vmatprep.subr.mxu0 0.0
        %3093 = vmatpush1.msra.mxu0 0.0
        %3094 = vmatprep.subr.mxu0 0.0
        %3095 = vmatpush1.msra.mxu0 0.0
        %3096 = vmatprep.subr.mxu0 0.0
        %3097 = vmatpush1.msra.mxu0 0.0
        %3098 = vmatprep.subr.mxu0 0.0
        %3099 = vmatpush1.msra.mxu0 0.0
        %3100 = vmatprep.subr.mxu0 0.0
        %3101 = vmatpush1.msra.mxu0 0.0
        %3102 = vmatprep.subr.mxu0 0.0
        %3103 = vmatpush1.msra.mxu0 0.0
        %3104 = vmatprep.subr.mxu0 0.0
        %3105 = vmatpush1.msra.mxu0 0.0
        %3106 = vmatprep.subr.mxu0 0.0
        %3107 = vmatpush1.msra.mxu0 0.0
        %3108 = vmatprep.subr.mxu0 0.0
        %3109 = vmatpush1.msra.mxu0 0.0
        %3110 = vmatprep.subr.mxu0 0.0
        %3111 = vmatpush1.msra.mxu0 0.0
        %3112 = vmatprep.subr.mxu0 0.0
        %3113 = vmatpush1.msra.mxu0 0.0
        %3114 = vmatprep.subr.mxu0 0.0
        %3115 = vmatpush1.msra.mxu0 0.0
        %3116 = vmatprep.subr.mxu0 0.0
        %3117 = vmatpush1.msra.mxu0 0.0
        %3118 = vmatprep.subr.mxu0 0.0
        %3119 = vmatpush1.msra.mxu0 0.0
        %3120 = vmatprep.subr.mxu0 0.0
        %3121 = vmatpush1.msra.mxu0 0.0
        %3122 = vmatprep.subr.mxu0 0.0
        %3123 = vmatpush1.msra.mxu0 0.0
        %3124 = vmatprep.subr.mxu0 0.0
        %3125 = vmatpush1.msra.mxu0 0.0
        %3126 = vmatprep.subr.mxu0 0.0
        %3127 = vmatpush1.msra.mxu0 0.0
        %3128 = vmatprep.subr.mxu0 0.0
        %3129 = vmatpush1.msra.mxu0 0.0
        %3130 = vmatprep.subr.mxu0 0.0
        %3131 = vmatpush1.msra.mxu0 0.0
        %3132 = vmatprep.subr.mxu0 0.0
        %3133 = vmatpush1.msra.mxu0 0.0
        %3134 = vmatprep.subr.mxu0 0.0
        %3135 = vmatpush1.msra.mxu0 0.0
        %3136 = vmatprep.subr.mxu0 0.0
        %3137 = vmatpush1.msra.mxu0 0.0
        %3138 = vmatprep.subr.mxu0 0.0
        %3139 = vmatpush1.msra.mxu0 0.0
        %3140 = vmatprep.subr.mxu0 0.0
        %3141 = vmatpush1.msra.mxu0 0.0
        %3142 = vmatprep.mubr.f32.mxu0 0.0
        %3143 = vmatmul.mubr.f32.gmra.mrb[0].mxu0 %v3076
        %v3144 = vpop.f32.mrb[0].mxu0
        %v3145 = vadd.f32 0.0, %v3144
        %v3146 = vpop.f32.mrb[0].mxu0
        %3147 = vdwg.mxu0
        %v3148 = vsel %vm426, %v2930, 0
        %3150 = vmatprep.subr.mxu0 0.0
        %3151 = vmatpush1.msra.mxu0 %v350
        %3152 = vmatprep.subr.mxu0 0.0
        %3153 = vmatpush1.msra.mxu0 %v351
        %3154 = vmatprep.subr.mxu0 0.0
        %3155 = vmatpush1.msra.mxu0 %v352
        %3156 = vmatprep.subr.mxu0 0.0
        %3157 = vmatpush1.msra.mxu0 %v353
        %3158 = vmatprep.subr.mxu0 0.0
        %3159 = vmatpush1.msra.mxu0 0.0
        %3160 = vmatprep.subr.mxu0 0.0
        %3161 = vmatpush1.msra.mxu0 0.0
        %3162 = vmatprep.subr.mxu0 0.0
        %3163 = vmatpush1.msra.mxu0 0.0
        %3164 = vmatprep.subr.mxu0 0.0
        %3165 = vmatpush1.msra.mxu0 0.0
        %3166 = vmatprep.subr.mxu0 0.0
        %3167 = vmatpush1.msra.mxu0 0.0
        %3168 = vmatprep.subr.mxu0 0.0
        %3169 = vmatpush1.msra.mxu0 0.0
        %3170 = vmatprep.subr.mxu0 0.0
        %3171 = vmatpush1.msra.mxu0 0.0
        %3172 = vmatprep.subr.mxu0 0.0
        %3173 = vmatpush1.msra.mxu0 0.0
        %3174 = vmatprep.subr.mxu0 0.0
        %3175 = vmatpush1.msra.mxu0 0.0
        %3176 = vmatprep.subr.mxu0 0.0
        %3177 = vmatpush1.msra.mxu0 0.0
        %3178 = vmatprep.subr.mxu0 0.0
        %3179 = vmatpush1.msra.mxu0 0.0
        %3180 = vmatprep.subr.mxu0 0.0
        %3181 = vmatpush1.msra.mxu0 0.0
        %3182 = vmatprep.subr.mxu0 0.0
        %3183 = vmatpush1.msra.mxu0 0.0
        %3184 = vmatprep.subr.mxu0 0.0
        %3185 = vmatpush1.msra.mxu0 0.0
        %3186 = vmatprep.subr.mxu0 0.0
        %3187 = vmatpush1.msra.mxu0 0.0
        %3188 = vmatprep.subr.mxu0 0.0
        %3189 = vmatpush1.msra.mxu0 0.0
        %3190 = vmatprep.subr.mxu0 0.0
        %3191 = vmatpush1.msra.mxu0 0.0
        %3192 = vmatprep.subr.mxu0 0.0
        %3193 = vmatpush1.msra.mxu0 0.0
        %3194 = vmatprep.subr.mxu0 0.0
        %3195 = vmatpush1.msra.mxu0 0.0
        %3196 = vmatprep.subr.mxu0 0.0
        %3197 = vmatpush1.msra.mxu0 0.0
        %3198 = vmatprep.subr.mxu0 0.0
        %3199 = vmatpush1.msra.mxu0 0.0
        %3200 = vmatprep.subr.mxu0 0.0
        %3201 = vmatpush1.msra.mxu0 0.0
        %3202 = vmatprep.subr.mxu0 0.0
        %3203 = vmatpush1.msra.mxu0 0.0
        %3204 = vmatprep.subr.mxu0 0.0
        %3205 = vmatpush1.msra.mxu0 0.0
        %3206 = vmatprep.subr.mxu0 0.0
        %3207 = vmatpush1.msra.mxu0 0.0
        %3208 = vmatprep.subr.mxu0 0.0
        %3209 = vmatpush1.msra.mxu0 0.0
        %3210 = vmatprep.subr.mxu0 0.0
        %3211 = vmatpush1.msra.mxu0 0.0
        %3212 = vmatprep.subr.mxu0 0.0
        %3213 = vmatpush1.msra.mxu0 0.0
        %3214 = vmatprep.mubr.f32.mxu0 0.0
        %3215 = vmatmul.mubr.f32.gmra.mrb[0].mxu0 %v3148
        %v3216 = vpop.f32.mrb[0].mxu0
        %v3217 = vadd.f32 0.0, %v3216
        %v3218 = vpop.f32.mrb[0].mxu0
        %3219 = vdwg.mxu0
        %v3220 = vsel %vm426, %v2913, 0
        %3222 = vmatprep.subr.mxu0 0.0
        %3223 = vmatpush1.msra.mxu0 %v354
        %3224 = vmatprep.subr.mxu0 0.0
        %3225 = vmatpush1.msra.mxu0 %v355
        %3226 = vmatprep.subr.mxu0 0.0
        %3227 = vmatpush1.msra.mxu0 %v356
        %3228 = vmatprep.subr.mxu0 0.0
        %3229 = vmatpush1.msra.mxu0 %v357
        %3230 = vmatprep.subr.mxu0 0.0
        %3231 = vmatpush1.msra.mxu0 0.0
        %3232 = vmatprep.subr.mxu0 0.0
        %3233 = vmatpush1.msra.mxu0 0.0
        %3234 = vmatprep.subr.mxu0 0.0
        %3235 = vmatpush1.msra.mxu0 0.0
        %3236 = vmatprep.subr.mxu0 0.0
        %3237 = vmatpush1.msra.mxu0 0.0
        %3238 = vmatprep.subr.mxu0 0.0
        %3239 = vmatpush1.msra.mxu0 0.0
        %3240 = vmatprep.subr.mxu0 0.0
        %3241 = vmatpush1.msra.mxu0 0.0
        %3242 = vmatprep.subr.mxu0 0.0
        %3243 = vmatpush1.msra.mxu0 0.0
        %3244 = vmatprep.subr.mxu0 0.0
        %3245 = vmatpush1.msra.mxu0 0.0
        %3246 = vmatprep.subr.mxu0 0.0
        %3247 = vmatpush1.msra.mxu0 0.0
        %3248 = vmatprep.subr.mxu0 0.0
        %3249 = vmatpush1.msra.mxu0 0.0
        %3250 = vmatprep.subr.mxu0 0.0
        %3251 = vmatpush1.msra.mxu0 0.0
        %3252 = vmatprep.subr.mxu0 0.0
        %3253 = vmatpush1.msra.mxu0 0.0
        %3254 = vmatprep.subr.mxu0 0.0
        %3255 = vmatpush1.msra.mxu0 0.0
        %3256 = vmatprep.subr.mxu0 0.0
        %3257 = vmatpush1.msra.mxu0 0.0
        %3258 = vmatprep.subr.mxu0 0.0
        %3259 = vmatpush1.msra.mxu0 0.0
        %3260 = vmatprep.subr.mxu0 0.0
        %3261 = vmatpush1.msra.mxu0 0.0
        %3262 = vmatprep.subr.mxu0 0.0
        %3263 = vmatpush1.msra.mxu0 0.0
        %3264 = vmatprep.subr.mxu0 0.0
        %3265 = vmatpush1.msra.mxu0 0.0
        %3266 = vmatprep.subr.mxu0 0.0
        %3267 = vmatpush1.msra.mxu0 0.0
        %3268 = vmatprep.subr.mxu0 0.0
        %3269 = vmatpush1.msra.mxu0 0.0
        %3270 = vmatprep.subr.mxu0 0.0
        %3271 = vmatpush1.msra.mxu0 0.0
        %3272 = vmatprep.subr.mxu0 0.0
        %3273 = vmatpush1.msra.mxu0 0.0
        %3274 = vmatprep.subr.mxu0 0.0
        %3275 = vmatpush1.msra.mxu0 0.0
        %3276 = vmatprep.subr.mxu0 0.0
        %3277 = vmatpush1.msra.mxu0 0.0
        %3278 = vmatprep.subr.mxu0 0.0
        %3279 = vmatpush1.msra.mxu0 0.0
        %3280 = vmatprep.subr.mxu0 0.0
        %3281 = vmatpush1.msra.mxu0 0.0
        %3282 = vmatprep.subr.mxu0 0.0
        %3283 = vmatpush1.msra.mxu0 0.0
        %3284 = vmatprep.subr.mxu0 0.0
        %3285 = vmatpush1.msra.mxu0 0.0
        %3286 = vmatprep.mubr.f32.mxu0 0.0
        %3287 = vmatmul.mubr.f32.gmra.mrb[0].mxu0 %v3220
        %v3288 = vpop.f32.mrb[0].mxu0
        %v3289 = vadd.f32 0.0, %v3288
        %v3290 = vpop.f32.mrb[0].mxu0
        %3291 = vdwg.mxu0
        %v3292 = vsel %vm426, %v2927, 0
        %3294 = vmatprep.subr.mxu0 0.0
        %3295 = vmatpush1.msra.mxu0 %v358
        %3296 = vmatprep.subr.mxu0 0.0
        %3297 = vmatpush1.msra.mxu0 %v359
        %3298 = vmatprep.subr.mxu0 0.0
        %3299 = vmatpush1.msra.mxu0 %v360
        %3300 = vmatprep.subr.mxu0 0.0
        %3301 = vmatpush1.msra.mxu0 %v361
        %3302 = vmatprep.subr.mxu0 0.0
        %3303 = vmatpush1.msra.mxu0 0.0
        %3304 = vmatprep.subr.mxu0 0.0
        %3305 = vmatpush1.msra.mxu0 0.0
        %3306 = vmatprep.subr.mxu0 0.0
        %3307 = vmatpush1.msra.mxu0 0.0
        %3308 = vmatprep.subr.mxu0 0.0
        %3309 = vmatpush1.msra.mxu0 0.0
        %3310 = vmatprep.subr.mxu0 0.0
        %3311 = vmatpush1.msra.mxu0 0.0
        %3312 = vmatprep.subr.mxu0 0.0
        %3313 = vmatpush1.msra.mxu0 0.0
        %3314 = vmatprep.subr.mxu0 0.0
        %3315 = vmatpush1.msra.mxu0 0.0
        %3316 = vmatprep.subr.mxu0 0.0
        %3317 = vmatpush1.msra.mxu0 0.0
        %3318 = vmatprep.subr.mxu0 0.0
        %3319 = vmatpush1.msra.mxu0 0.0
        %3320 = vmatprep.subr.mxu0 0.0
        %3321 = vmatpush1.msra.mxu0 0.0
        %3322 = vmatprep.subr.mxu0 0.0
        %3323 = vmatpush1.msra.mxu0 0.0
        %3324 = vmatprep.subr.mxu0 0.0
        %3325 = vmatpush1.msra.mxu0 0.0
        %3326 = vmatprep.subr.mxu0 0.0
        %3327 = vmatpush1.msra.mxu0 0.0
        %3328 = vmatprep.subr.mxu0 0.0
        %3329 = vmatpush1.msra.mxu0 0.0
        %3330 = vmatprep.subr.mxu0 0.0
        %3331 = vmatpush1.msra.mxu0 0.0
        %3332 = vmatprep.subr.mxu0 0.0
        %3333 = vmatpush1.msra.mxu0 0.0
        %3334 = vmatprep.subr.mxu0 0.0
        %3335 = vmatpush1.msra.mxu0 0.0
        %3336 = vmatprep.subr.mxu0 0.0
        %3337 = vmatpush1.msra.mxu0 0.0
        %3338 = vmatprep.subr.mxu0 0.0
        %3339 = vmatpush1.msra.mxu0 0.0
        %3340 = vmatprep.subr.mxu0 0.0
        %3341 = vmatpush1.msra.mxu0 0.0
        %3342 = vmatprep.subr.mxu0 0.0
        %3343 = vmatpush1.msra.mxu0 0.0
        %3344 = vmatprep.subr.mxu0 0.0
        %3345 = vmatpush1.msra.mxu0 0.0
        %3346 = vmatprep.subr.mxu0 0.0
        %3347 = vmatpush1.msra.mxu0 0.0
        %3348 = vmatprep.subr.mxu0 0.0
        %3349 = vmatpush1.msra.mxu0 0.0
        %3350 = vmatprep.subr.mxu0 0.0
        %3351 = vmatpush1.msra.mxu0 0.0
        %3352 = vmatprep.subr.mxu0 0.0
        %3353 = vmatpush1.msra.mxu0 0.0
        %3354 = vmatprep.subr.mxu0 0.0
        %3355 = vmatpush1.msra.mxu0 0.0
        %3356 = vmatprep.subr.mxu0 0.0
        %3357 = vmatpush1.msra.mxu0 0.0
        %3358 = vmatprep.mubr.f32.mxu0 0.0
        %3359 = vmatmul.mubr.f32.gmra.mrb[0].mxu0 %v3292
        %v3360 = vpop.f32.mrb[0].mxu0
        %v3361 = vadd.f32 0.0, %v3360
        %v3362 = vpop.f32.mrb[0].mxu0
        %3363 = vdwg.mxu0
        %v3364 = vsel %vm426, %v2929, 0
        %3366 = vmatprep.subr.mxu0 0.0
        %3367 = vmatpush1.msra.mxu0 %v362
        %3368 = vmatprep.subr.mxu0 0.0
        %3369 = vmatpush1.msra.mxu0 %v363
        %3370 = vmatprep.subr.mxu0 0.0
        %3371 = vmatpush1.msra.mxu0 %v364
        %3372 = vmatprep.subr.mxu0 0.0
        %3373 = vmatpush1.msra.mxu0 %v365
        %3374 = vmatprep.subr.mxu0 0.0
        %3375 = vmatpush1.msra.mxu0 0.0
        %3376 = vmatprep.subr.mxu0 0.0
        %3377 = vmatpush1.msra.mxu0 0.0
        %3378 = vmatprep.subr.mxu0 0.0
        %3379 = vmatpush1.msra.mxu0 0.0
        %3380 = vmatprep.subr.mxu0 0.0
        %3381 = vmatpush1.msra.mxu0 0.0
        %3382 = vmatprep.subr.mxu0 0.0
        %3383 = vmatpush1.msra.mxu0 0.0
        %3384 = vmatprep.subr.mxu0 0.0
        %3385 = vmatpush1.msra.mxu0 0.0
        %3386 = vmatprep.subr.mxu0 0.0
        %3387 = vmatpush1.msra.mxu0 0.0
        %3388 = vmatprep.subr.mxu0 0.0
        %3389 = vmatpush1.msra.mxu0 0.0
        %3390 = vmatprep.subr.mxu0 0.0
        %3391 = vmatpush1.msra.mxu0 0.0
        %3392 = vmatprep.subr.mxu0 0.0
        %3393 = vmatpush1.msra.mxu0 0.0
        %3394 = vmatprep.subr.mxu0 0.0
        %3395 = vmatpush1.msra.mxu0 0.0
        %3396 = vmatprep.subr.mxu0 0.0
        %3397 = vmatpush1.msra.mxu0 0.0
        %3398 = vmatprep.subr.mxu0 0.0
        %3399 = vmatpush1.msra.mxu0 0.0
        %3400 = vmatprep.subr.mxu0 0.0
        %3401 = vmatpush1.msra.mxu0 0.0
        %3402 = vmatprep.subr.mxu0 0.0
        %3403 = vmatpush1.msra.mxu0 0.0
        %3404 = vmatprep.subr.mxu0 0.0
        %3405 = vmatpush1.msra.mxu0 0.0
        %3406 = vmatprep.subr.mxu0 0.0
        %3407 = vmatpush1.msra.mxu0 0.0
        %3408 = vmatprep.subr.mxu0 0.0
        %3409 = vmatpush1.msra.mxu0 0.0
        %3410 = vmatprep.subr.mxu0 0.0
        %3411 = vmatpush1.msra.mxu0 0.0
        %3412 = vmatprep.subr.mxu0 0.0
        %3413 = vmatpush1.msra.mxu0 0.0
        %3414 = vmatprep.subr.mxu0 0.0
        %3415 = vmatpush1.msra.mxu0 0.0
        %3416 = vmatprep.subr.mxu0 0.0
        %3417 = vmatpush1.msra.mxu0 0.0
        %3418 = vmatprep.subr.mxu0 0.0
        %3419 = vmatpush1.msra.mxu0 0.0
        %3420 = vmatprep.subr.mxu0 0.0
        %3421 = vmatpush1.msra.mxu0 0.0
        %3422 = vmatprep.subr.mxu0 0.0
        %3423 = vmatpush1.msra.mxu0 0.0
        %3424 = vmatprep.subr.mxu0 0.0
        %3425 = vmatpush1.msra.mxu0 0.0
        %3426 = vmatprep.subr.mxu0 0.0
        %3427 = vmatpush1.msra.mxu0 0.0
        %3428 = vmatprep.subr.mxu0 0.0
        %3429 = vmatpush1.msra.mxu0 0.0
        %3430 = vmatprep.mubr.f32.mxu0 0.0
        %3431 = vmatmul.mubr.f32.gmra.mrb[0].mxu0 %v3364
        %v3432 = vpop.f32.mrb[0].mxu0
        %v3433 = vadd.f32 0.0, %v3432
        %v3434 = vpop.f32.mrb[0].mxu0
        %3435 = vdwg.mxu0
        %v3436 = vsel %vm426, %v2931, 0
        %3438 = vmatprep.subr.mxu0 0.0
        %3439 = vmatpush1.msra.mxu0 %v366
        %3440 = vmatprep.subr.mxu0 0.0
        %3441 = vmatpush1.msra.mxu0 %v367
        %3442 = vmatprep.subr.mxu0 0.0
        %3443 = vmatpush1.msra.mxu0 %v368
        %3444 = vmatprep.subr.mxu0 0.0
        %3445 = vmatpush1.msra.mxu0 %v369
        %3446 = vmatprep.subr.mxu0 0.0
        %3447 = vmatpush1.msra.mxu0 0.0
        %3448 = vmatprep.subr.mxu0 0.0
        %3449 = vmatpush1.msra.mxu0 0.0
        %3450 = vmatprep.subr.mxu0 0.0
        %3451 = vmatpush1.msra.mxu0 0.0
        %3452 = vmatprep.subr.mxu0 0.0
        %3453 = vmatpush1.msra.mxu0 0.0
        %3454 = vmatprep.subr.mxu0 0.0
        %3455 = vmatpush1.msra.mxu0 0.0
        %3456 = vmatprep.subr.mxu0 0.0
        %3457 = vmatpush1.msra.mxu0 0.0
        %3458 = vmatprep.subr.mxu0 0.0
        %3459 = vmatpush1.msra.mxu0 0.0
        %3460 = vmatprep.subr.mxu0 0.0
        %3461 = vmatpush1.msra.mxu0 0.0
        %3462 = vmatprep.subr.mxu0 0.0
        %3463 = vmatpush1.msra.mxu0 0.0
        %3464 = vmatprep.subr.mxu0 0.0
        %3465 = vmatpush1.msra.mxu0 0.0
        %3466 = vmatprep.subr.mxu0 0.0
        %3467 = vmatpush1.msra.mxu0 0.0
        %3468 = vmatprep.subr.mxu0 0.0
        %3469 = vmatpush1.msra.mxu0 0.0
        %3470 = vmatprep.subr.mxu0 0.0
        %3471 = vmatpush1.msra.mxu0 0.0
        %3472 = vmatprep.subr.mxu0 0.0
        %3473 = vmatpush1.msra.mxu0 0.0
        %3474 = vmatprep.subr.mxu0 0.0
        %3475 = vmatpush1.msra.mxu0 0.0
        %3476 = vmatprep.subr.mxu0 0.0
        %3477 = vmatpush1.msra.mxu0 0.0
        %3478 = vmatprep.subr.mxu0 0.0
        %3479 = vmatpush1.msra.mxu0 0.0
        %3480 = vmatprep.subr.mxu0 0.0
        %3481 = vmatpush1.msra.mxu0 0.0
        %3482 = vmatprep.subr.mxu0 0.0
        %3483 = vmatpush1.msra.mxu0 0.0
        %3484 = vmatprep.subr.mxu0 0.0
        %3485 = vmatpush1.msra.mxu0 0.0
        %3486 = vmatprep.subr.mxu0 0.0
        %3487 = vmatpush1.msra.mxu0 0.0
        %3488 = vmatprep.subr.mxu0 0.0
        %3489 = vmatpush1.msra.mxu0 0.0
        %3490 = vmatprep.subr.mxu0 0.0
        %3491 = vmatpush1.msra.mxu0 0.0
        %3492 = vmatprep.subr.mxu0 0.0
        %3493 = vmatpush1.msra.mxu0 0.0
        %3494 = vmatprep.subr.mxu0 0.0
        %3495 = vmatpush1.msra.mxu0 0.0
        %3496 = vmatprep.subr.mxu0 0.0
        %3497 = vmatpush1.msra.mxu0 0.0
        %3498 = vmatprep.subr.mxu0 0.0
        %3499 = vmatpush1.msra.mxu0 0.0
        %3500 = vmatprep.subr.mxu0 0.0
        %3501 = vmatpush1.msra.mxu0 0.0
        %3502 = vmatprep.mubr.f32.mxu0 0.0
        %3503 = vmatmul.mubr.f32.gmra.mrb[0].mxu0 %v3436
        %v3504 = vpop.f32.mrb[0].mxu0
        %v3505 = vadd.f32 0.0, %v3504
        %v3506 = vpop.f32.mrb[0].mxu0
        %3507 = vdwg.mxu0
        %3508 = vst.msk [vmem:[%s295] sm:$0xff] %vm426, %v2881
        %v3517 = vrot.slane %v3073, 7
        %v3518 = vsel %vm2584, %v3517, %v3001
        %v3519 = vrot.slane %v3145, 6
        %v3520 = vsel %vm2587, %v3519, %v3518
        %v3521 = vrot.slane %v3217, 5
        %v3522 = vsel %vm2590, %v3521, %v3520
        %v3523 = vrot.slane %v3289, 4
        %v3524 = vsel %vm2593, %v3523, %v3522
        %v3525 = vrot.slane %v3361, 3
        %v3526 = vsel %vm2596, %v3525, %v3524
        %v3527 = vrot.slane %v3433, 2
        %v3528 = vsel %vm2599, %v3527, %v3526
        %v3529 = vrot.slane %v3505, 1
        %v3530 = vsel %vm2602, %v3529, %v3528
        %3532 = vst.msk [vmem:[%s302] sm:$0xff] %vm426, %v3530
        %s3533 = sand.u32 %s114, 1
        %s3534 = scalar_lea.sflag [#allocation4], %s3533
        %s3535 = sand.u32 %s114, 1
        %s3536 = smul.addr %s3535, 8
        %s3537 = scalar_lea.vmem [#allocation8], %s3536
        %s3538 = sand.u32 %s140, 1
        %s3539 = scalar_lea.sflag [#allocation10], %s3538
        %s3540 = sand.u32 %s140, 1
        %s3541 = smul.addr %s3540, 8
        %s3542 = scalar_lea.vmem [#allocation9], %s3541
        // Predicated region
        $region45: #{tpu_custom_call.1} parent=31 // pred_check
          %p3543 = pneg %p124
        $region46: #{tpu_custom_call.1} parent=31 // pred_check_branch
          %3545 = sbr.rel (%p3543) target = $region48
        $region47: #{tpu_custom_call.1} parent=31 // pred_region
          %s3547 = ssub.s32 128, 128
          %3548 = vsyncadd %s3534, %s3547
          %s3549 = smul.addr %s28, 128
          %s3550 = scalar_lea.hbm %s3, %s3549
          %s3552 = sshll.u32 %s3537, 4
          %s3553 = int_to_ptr.vmem [resolvable:$true] %s3552
          %3555 = dma.vmem_to_hbm [thread:$0]  %s3553, 128, %s3550, %s3534
        $region48: #{tpu_custom_call.1} parent=31 // pred_fallthru
          _
        // Predicated region
        $region49: #{tpu_custom_call.1} parent=31 // pred_check
          %p3556 = pneg %p150
        $region50: #{tpu_custom_call.1} parent=31 // pred_check_branch
          %3558 = sbr.rel (%p3556) target = $region52
        $region51: #{tpu_custom_call.1} parent=31 // pred_region
          %s3560 = ssub.s32 128, 128
          %3561 = vsyncadd %s3539, %s3560
          %s3562 = smul.addr %s28, 128
          %s3563 = scalar_lea.hbm %s4, %s3562
          %s3565 = sshll.u32 %s3542, 4
          %s3566 = int_to_ptr.vmem [resolvable:$true] %s3565
          %3568 = dma.vmem_to_hbm [thread:$0]  %s3566, 128, %s3563, %s3539
        $region52: #{tpu_custom_call.1} parent=31 // pred_fallthru
          _
      $region32: #{tpu_custom_call.1} parent=5 // pred_fallthru
        _
      %p3569 = scmp.le.s32.totalorder 2, %s23
      // Predicated region
      $region53: #{tpu_custom_call.1} parent=5 // pred_check
        %p3570 = pneg %p3569
      $region54: #{tpu_custom_call.1} parent=5 // pred_check_branch
        %3572 = sbr.rel (%p3570) target = $region56
      $region55: #{tpu_custom_call.1} parent=5 // pred_region
        %s3573 = ssub.s32 %s23, 2
        // Predicated region
        $region57: #{tpu_custom_call.1} parent=55 // pred_check
          %p3574 = pneg %p130
        $region58: #{tpu_custom_call.1} parent=55 // pred_check_branch
          %3576 = sbr.rel (%p3574) target = $region60
        $region59: #{tpu_custom_call.1} parent=55 // pred_region
          %s3577 = sand.u32 %s115, 1
          %s3578 = scalar_lea.sflag [#allocation4], %s3577
          %s3579 = sand.u32 %s115, 1
          %s3580 = smul.addr %s3579, 8
          %s3581 = scalar_lea.vmem [#allocation8], %s3580
          %3582 = dma.done %s3578, 128
        $region60: #{tpu_custom_call.1} parent=55 // pred_fallthru
          _
        // Predicated region
        $region61: #{tpu_custom_call.1} parent=55 // pred_check
          %p3583 = pneg %p156
        $region62: #{tpu_custom_call.1} parent=55 // pred_check_branch
          %3585 = sbr.rel (%p3583) target = $region64
        $region63: #{tpu_custom_call.1} parent=55 // pred_region
          %s3586 = sand.u32 %s141, 1
          %s3587 = scalar_lea.sflag [#allocation10], %s3586
          %s3588 = sand.u32 %s141, 1
          %s3589 = smul.addr %s3588, 8
          %s3590 = scalar_lea.vmem [#allocation9], %s3589
          %3591 = dma.done %s3587, 128
        $region64: #{tpu_custom_call.1} parent=55 // pred_fallthru
          _
      $region56: #{tpu_custom_call.1} parent=5 // pred_fallthru
        _
    $region6: #{tpu_custom_call.1} parent=1 // loop_footer
      %s27 = sadd.s32 1, %s23
    $region7: #{tpu_custom_call.1} parent=1 // loop_footer_branch
      %22 = sbr.rel target = $region3
    $region8: #{tpu_custom_call.1} parent=1 // loop_exit
      _
    %3592 = vsyncpa [#allocation3], 1
    %s3593 = scalar_lea.sflag [#allocation3], 1
    %3594 = vsyncpa %s3593, 1
    %3595 = vsyncpa [#allocation6], 1
    %s3596 = scalar_lea.sflag [#allocation6], 1
    %3597 = vsyncpa %s3596, 1
    %3598 = vsyncpa [#allocation4], 1
    %s3599 = scalar_lea.sflag [#allocation4], 1
    %3600 = vsyncpa %s3599, 1
    %3601 = vsyncpa [#allocation10], 1
    %s3602 = scalar_lea.sflag [#allocation10], 1
    %3603 = vsyncpa %s3602, 1

</llo_original>
